<compile_context>
chip_gen: v7x
topology: tpu7x:2x2x1
jax: 0.10.0
libtpu: 0.0.40
codegen_flags: <defaults>
</compile_context>

<pallas_src>
import jax
import jax.numpy as jnp
from jax.experimental import pallas as pl
from jax.experimental.pallas import tpu as pltpu


def _additive_intervention_kernel(conf_ref, fuse_ref, prob_ref,
                                  wq_ref, wk_ref, wt_ref,
                                  expand_ref, segsum_ref, out_ref):
    f32 = jnp.float32
    cdt = conf_ref.dtype                      # compute dtype (f32 or bf16)
    n_groups = expand_ref.shape[0]            # N confounders

    conf = conf_ref[...]                                           # (Bt, N*C)

    # Keys for all N confounders in one M=Bt matmul against the block-diagonal
    # Wk (contraction depth N*C).  The query is computed once and replicated
    # across the N groups with a lane-aligned concat (H is a lane multiple, so
    # this is vreg copies only -- no redundant MXU work, no sublane relayout).
    key = jnp.dot(conf, wk_ref[...], preferred_element_type=f32)   # (Bt, N*H)
    q = jnp.dot(fuse_ref[...], wq_ref[...], preferred_element_type=f32)  # (Bt, H)
    qk = key + jnp.concatenate([q] * n_groups, axis=-1)            # (Bt, N*H)

    # tanh on the EUP; keep the big intermediate in the compute dtype so the
    # logits dot runs native bf16 on the MXU and spill traffic is halved.
    fused = jnp.tanh(qk).astype(cdt)                               # (Bt, N*H)

    # Per-confounder attention logits via the block-column w_t (compute-dtype
    # operands, f32 accumulation).
    # TODO(synk): if a bundle dump shows the MXU slot saturated, replace this
    # padded (K=N*H, 8-lane output) dot with a VPU multiply + per-group lane
    # reduction (review item 4).
    logits = jnp.dot(fused, wt_ref[...], preferred_element_type=f32)   # (Bt, N)

    # Softmax over the confounder axis (lane axis of the (Bt, N) tile).
    m = jnp.max(logits, axis=-1, keepdims=True)
    e = jnp.exp(logits - m)
    denom = jnp.sum(e, axis=-1, keepdims=True)
    attn = e * pl.reciprocal(denom, approx=True)                   # EUP reciprocal
    w = (attn * prob_ref[...]).astype(cdt)                         # fold probabilities

    # Weighted sum of confounders: expand w over the C lanes of each group,
    # multiply, then segment-sum the N groups -> (Bt, C).  The selector
    # matrices are 0/1, hence exact in bf16.
    w_lanes = jnp.dot(w, expand_ref[...], preferred_element_type=f32)  # (Bt, N*C)
    weighted = conf * w_lanes.astype(cdt)                          # (Bt, N*C)
    fin = jnp.dot(weighted, segsum_ref[...], preferred_element_type=f32)
    out_ref[...] = fin.astype(out_ref.dtype)


def additive_intervention_pallas(confounder_set, fuse_rep, probabilities,
                                 wqT, wkT, wt, *, block_b=512,
                                 compute_dtype=None, vmem_limit_bytes=None):
    """confounder_set (B,N,C), fuse_rep (B,F), probabilities (B,N,1).
    Weights pre-transposed: wqT (F,H), wkT (C,H), wt (H,1).  Returns (B,C)."""
    B, N, C = confounder_set.shape
    F = fuse_rep.shape[-1]
    H = wqT.shape[-1]
    out_dtype = confounder_set.dtype
    if compute_dtype is None:
        compute_dtype = confounder_set.dtype

    # ---- wrapper-side operand prep (layout plumbing only, no math change) --
    conf_flat = confounder_set.reshape(B, N * C).astype(compute_dtype)   # free
    fuse = fuse_rep.astype(compute_dtype)
    prob = probabilities.reshape(B, N).astype(jnp.float32)    # drop lane-1 dim

    eye_n = jnp.eye(N, dtype=jnp.float32)
    # Single query weight (no N-fold tiling anymore).
    wq = wqT.astype(compute_dtype)                                        # (F, H)
    # Block-diagonal Wk: one (C,H) block per confounder -> one big matmul.
    wk_big = jnp.kron(eye_n, wkT.astype(jnp.float32)).astype(compute_dtype)   # (N*C, N*H)
    # Block-column w_t: all N logits from one (Bt, N*H) @ (N*H, N) matmul.
    wt_big = jnp.kron(eye_n, wt.astype(jnp.float32)).astype(compute_dtype)    # (N*H, N)
    # Expander / segment-sum selectors (0/1 -> exact in bf16).
    expand = jnp.kron(eye_n, jnp.ones((1, C), jnp.float32)).astype(compute_dtype)  # (N, N*C)
    segsum = jnp.tile(jnp.eye(C, dtype=jnp.float32), (N, 1)).astype(compute_dtype) # (N*C, C)

    # ---- batch tile selection ----------------------------------------------
    # bt < B must be a multiple of 8 (sublane rule); bt == B is always legal.
    # For B >= 16 split into >= 2 tiles so dimension_semantics=("parallel",)
    # can shard the grid across v7x's two TensorCores.
    bt = min(block_b, B)
    if bt >= B:
        bt = B
        if B >= 16:
            bt = min(B, -(-((B + 1) // 2) // 8) * 8)
    elif bt % 8:
        bt = max(8, (bt // 8) * 8)
    nb = pl.cdiv(B, bt)
    # NOTE: when B % bt != 0 the last tile reads past the end of the batch; the
    # garbage only lands in discarded output rows (all ops are row-independent).

    # ---- explicit VMEM budget (scoped limit, capped at v7x's 64 MiB) -------
    cbytes = jnp.dtype(compute_dtype).itemsize
    obytes = jnp.dtype(out_dtype).itemsize
    weight_bytes = (F * H + (N * C) * (N * H) + (N * H) * N
                    + N * (N * C) + (N * C) * C) * cbytes
    act_bytes = bt * ((N * C + F) * cbytes + N * 4 + C * obytes)
    inter_bytes = bt * N * H * (4 + 4 + cbytes)      # key/qk f32 + fused (cdt)
    est = 2 * act_bytes + 2 * weight_bytes + inter_bytes
    if vmem_limit_bytes is None:
        vmem_limit_bytes = int(min(max(2 * est, 32 << 20), 64 << 20))

    operands = (conf_flat, fuse, prob, wq, wk_big, wt_big, expand, segsum)

    def build(single_buffer_weights):
        def wspec(shape):
            # Constant weights (index_map always (0,0)) are never re-fetched;
            # a single buffer halves their VMEM footprint.
            if single_buffer_weights:
                return pl.BlockSpec(shape, lambda b: (0, 0),
                                    pipeline_mode=pl.Buffered(1))
            return pl.BlockSpec(shape, lambda b: (0, 0))

        return pl.pallas_call(
            _additive_intervention_kernel,
            out_shape=jax.ShapeDtypeStruct((B, C), out_dtype),
            grid_spec=pltpu.PrefetchScalarGridSpec(
                num_scalar_prefetch=0,
                grid=(nb,),
                in_specs=[
                    pl.BlockSpec((bt, N * C), lambda b: (b, 0)),   # confounders
                    pl.BlockSpec((bt, F), lambda b: (b, 0)),       # fuse_rep
                    pl.BlockSpec((bt, N), lambda b: (b, 0)),       # probabilities
                    wspec((F, H)),                                 # Wq
                    wspec((N * C, N * H)),                         # Wk block-diag
                    wspec((N * H, N)),                             # w_t block-col
                    wspec((N, N * C)),                             # expander
                    wspec((N * C, C)),                             # segment-sum
                ],
                out_specs=pl.BlockSpec((bt, C), lambda b: (b, 0)),
            ),
            compiler_params=pltpu.CompilerParams(
                dimension_semantics=("parallel",),
                vmem_limit_bytes=vmem_limit_bytes),
        )

    try:
        return build(True)(*operands)
    except Exception:
        # Fallback: if this JAX build rejects pipeline_mode=pl.Buffered(1),
        # use the default double-buffered weight specs (correctness identical).
        return build(False)(*operands)


def _reference(confounder_set, fuse_rep, probabilities, wqT, wkT, wt):
    # Pure-JAX reference mirroring the PyTorch forward.
    query = fuse_rep @ wqT                        # (B, H)
    key = confounder_set @ wkT                    # (B, N, H)
    fused = jnp.tanh(query[:, None, :] + key)     # (B, N, H)
    attention = fused @ wt                        # (B, N, 1)
    attention = jax.nn.softmax(attention, axis=1)
    fin = (attention * confounder_set * probabilities).sum(axis=1)
    return fin


if __name__ == "__main__":
    B, N = 2, 8
    con_size, fuse_size, hidden = 32, 32, 256

    key = jax.random.PRNGKey(0)
    k1, k2, k3, k4, k5, k6 = jax.random.split(key, 6)

    confounder_set = jax.random.normal(k1, (B, N, con_size), jnp.float32)
    fuse_rep = jax.random.normal(k2, (B, fuse_size), jnp.float32)
    probabilities = jax.random.uniform(k3, (B, N, 1), jnp.float32)

    # Deterministic parameter init (nn.Linear default: U(-1/sqrt(fan_in), +)).
    bq = 1.0 / (fuse_size ** 0.5)
    bk = 1.0 / (con_size ** 0.5)
    bw = 1.0 / (hidden ** 0.5)
    wqT = jax.random.uniform(k4, (fuse_size, hidden), jnp.float32, -bq, bq)
    wkT = jax.random.uniform(k5, (con_size, hidden), jnp.float32, -bk, bk)
    wt = jax.random.uniform(k6, (hidden, 1), jnp.float32, -bw, bw)

    ref = _reference(confounder_set, fuse_rep, probabilities, wqT, wkT, wt)

    # f32 path
    out = additive_intervention_pallas(confounder_set, fuse_rep,
                                       probabilities, wqT, wkT, wt)
    out = jax.block_until_ready(out)
    assert out.shape == (B, con_size)
    err32 = float(jnp.max(jnp.abs(out - ref)))
    assert jnp.allclose(out, ref, atol=5e-3, rtol=5e-3), (
        "f32 max abs err %f" % err32)

    # bf16 compute path (recommended on v6e/v7x): f32 accumulation, looser tol.
    out_bf16 = additive_intervention_pallas(
        confounder_set, fuse_rep, probabilities, wqT, wkT, wt,
        compute_dtype=jnp.bfloat16)
    out_bf16 = jax.block_until_ready(out_bf16)
    err16 = float(jnp.max(jnp.abs(out_bf16 - ref)))
    assert jnp.allclose(out_bf16, ref, atol=5e-2, rtol=5e-2), (
        "bf16 max abs err %f" % err16)

    print("KERNEL_OK")
</pallas_src>

<mosaic_0001>
module attributes {stable_mosaic.version = 11 : i64} {
  func.func @_additive_intervention_kernel(%arg0: i32, %arg1: memref<2x256xf32, #tpu.memory_space<vmem>>, %arg2: memref<2x32xf32, #tpu.memory_space<vmem>>, %arg3: memref<2x8xf32, #tpu.memory_space<vmem>>, %arg4: memref<32x256xf32, #tpu.memory_space<vmem>>, %arg5: memref<256x2048xf32, #tpu.memory_space<vmem>>, %arg6: memref<2048x8xf32, #tpu.memory_space<vmem>>, %arg7: memref<8x256xf32, #tpu.memory_space<vmem>>, %arg8: memref<256x32xf32, #tpu.memory_space<vmem>>, %arg9: memref<2x32xf32, #tpu.memory_space<vmem>>) attributes {dimension_semantics = [#tpu.dimension_semantics<parallel>], iteration_bounds = array<i64: 1>, scalar_prefetch = 0 : i64, scratch_operands = 0 : i64, tpu.core_type = #tpu.core_type<tc>, window_params = [{transform_indices = @transform_0, window_bounds = array<i64: 2, 256>}, {transform_indices = @transform_1, window_bounds = array<i64: 2, 32>}, {transform_indices = @transform_2, window_bounds = array<i64: 2, 8>}, {pipeline_mode = #tpu.pipeline_mode<synchronous>, transform_indices = @transform_3, window_bounds = array<i64: 32, 256>}, {pipeline_mode = #tpu.pipeline_mode<synchronous>, transform_indices = @transform_4, window_bounds = array<i64: 256, 2048>}, {pipeline_mode = #tpu.pipeline_mode<synchronous>, transform_indices = @transform_5, window_bounds = array<i64: 2048, 8>}, {pipeline_mode = #tpu.pipeline_mode<synchronous>, transform_indices = @transform_6, window_bounds = array<i64: 8, 256>}, {pipeline_mode = #tpu.pipeline_mode<synchronous>, transform_indices = @transform_7, window_bounds = array<i64: 256, 32>}, {transform_indices = @transform_8, window_bounds = array<i64: 2, 32>}]} {
    %c0 = arith.constant 0 : index
    %c0_0 = arith.constant 0 : index
    %0 = vector.load %arg1[%c0, %c0_0] : memref<2x256xf32, #tpu.memory_space<vmem>>, vector<2x256xf32>
    %c0_1 = arith.constant 0 : index
    %c0_2 = arith.constant 0 : index
    %1 = vector.load %arg5[%c0_1, %c0_2] : memref<256x2048xf32, #tpu.memory_space<vmem>>, vector<256x2048xf32>
    %cst = arith.constant dense<0.000000e+00> : vector<2x2048xf32>
    %2 = tpu.matmul %0, %1, %cst {dimension_numbers = #tpu.dot_dimension_numbers<[1], [0], [0], [1], [0, 0, 1, 1], [], []>} : vector<2x256xf32>, vector<256x2048xf32>, vector<2x2048xf32> -> vector<2x2048xf32>
    %c0_3 = arith.constant 0 : index
    %c0_4 = arith.constant 0 : index
    %3 = vector.load %arg2[%c0_3, %c0_4] : memref<2x32xf32, #tpu.memory_space<vmem>>, vector<2x32xf32>
    %c0_5 = arith.constant 0 : index
    %c0_6 = arith.constant 0 : index
    %4 = vector.load %arg4[%c0_5, %c0_6] : memref<32x256xf32, #tpu.memory_space<vmem>>, vector<32x256xf32>
    %cst_7 = arith.constant dense<0.000000e+00> : vector<2x256xf32>
    %5 = tpu.matmul %3, %4, %cst_7 {dimension_numbers = #tpu.dot_dimension_numbers<[1], [0], [0], [1], [0, 0, 1, 1], [], []>} : vector<2x32xf32>, vector<32x256xf32>, vector<2x256xf32> -> vector<2x256xf32>
    %6 = tpu.concatenate %5, %5, %5, %5, %5, %5, %5, %5 in 1 : vector<2x256xf32>, vector<2x256xf32>, vector<2x256xf32>, vector<2x256xf32>, vector<2x256xf32>, vector<2x256xf32>, vector<2x256xf32>, vector<2x256xf32> -> vector<2x2048xf32>
    %7 = arith.addf %2, %6 : vector<2x2048xf32>
    %8 = math.tanh %7 : vector<2x2048xf32>
    %c0_8 = arith.constant 0 : index
    %c0_9 = arith.constant 0 : index
    %9 = vector.load %arg6[%c0_8, %c0_9] : memref<2048x8xf32, #tpu.memory_space<vmem>>, vector<2048x8xf32>
    %cst_10 = arith.constant dense<0.000000e+00> : vector<2x8xf32>
    %10 = tpu.matmul %8, %9, %cst_10 {dimension_numbers = #tpu.dot_dimension_numbers<[1], [0], [0], [1], [0, 0, 1, 1], [], []>} : vector<2x2048xf32>, vector<2048x8xf32>, vector<2x8xf32> -> vector<2x8xf32>
    %cst_11 = arith.constant dense<0xFF800000> : vector<2xf32>
    %11 = vector.multi_reduction <maximumf>, %10, %cst_11 [1] : vector<2x8xf32> to vector<2xf32>
    %12 = vector.shape_cast %11 : vector<2xf32> to vector<2x1xf32>
    %13 = vector.broadcast %12 : vector<2x1xf32> to vector<2x8xf32>
    %14 = arith.subf %10, %13 : vector<2x8xf32>
    %15 = math.exp %14 : vector<2x8xf32>
    %cst_12 = arith.constant dense<0.000000e+00> : vector<2xf32>
    %16 = vector.multi_reduction <add>, %15, %cst_12 [1] : vector<2x8xf32> to vector<2xf32>
    %17 = vector.shape_cast %16 : vector<2xf32> to vector<2x1xf32>
    %18 = tpu.reciprocal %17 {approx = true} : vector<2x1xf32> -> vector<2x1xf32>
    %19 = vector.broadcast %18 : vector<2x1xf32> to vector<2x8xf32>
    %20 = arith.mulf %15, %19 : vector<2x8xf32>
    %c0_13 = arith.constant 0 : index
    %c0_14 = arith.constant 0 : index
    %21 = vector.load %arg3[%c0_13, %c0_14] : memref<2x8xf32, #tpu.memory_space<vmem>>, vector<2x8xf32>
    %22 = arith.mulf %20, %21 : vector<2x8xf32>
    %c0_15 = arith.constant 0 : index
    %c0_16 = arith.constant 0 : index
    %23 = vector.load %arg7[%c0_15, %c0_16] : memref<8x256xf32, #tpu.memory_space<vmem>>, vector<8x256xf32>
    %cst_17 = arith.constant dense<0.000000e+00> : vector<2x256xf32>
    %24 = tpu.matmul %22, %23, %cst_17 {dimension_numbers = #tpu.dot_dimension_numbers<[1], [0], [0], [1], [0, 0, 1, 1], [], []>} : vector<2x8xf32>, vector<8x256xf32>, vector<2x256xf32> -> vector<2x256xf32>
    %25 = arith.mulf %0, %24 : vector<2x256xf32>
    %c0_18 = arith.constant 0 : index
    %c0_19 = arith.constant 0 : index
    %26 = vector.load %arg8[%c0_18, %c0_19] : memref<256x32xf32, #tpu.memory_space<vmem>>, vector<256x32xf32>
    %cst_20 = arith.constant dense<0.000000e+00> : vector<2x32xf32>
    %27 = tpu.matmul %25, %26, %cst_20 {dimension_numbers = #tpu.dot_dimension_numbers<[1], [0], [0], [1], [0, 0, 1, 1], [], []>} : vector<2x256xf32>, vector<256x32xf32>, vector<2x32xf32> -> vector<2x32xf32>
    %c0_21 = arith.constant 0 : index
    %c0_22 = arith.constant 0 : index
    %28 = vector.load %arg9[%c0_21, %c0_22] : memref<2x32xf32, #tpu.memory_space<vmem>>, vector<2x32xf32>
    tpu.vector_store %arg9[%c0_21, %c0_22], %27 {strides = array<i32>} : memref<2x32xf32, #tpu.memory_space<vmem>>, vector<2x32xf32>,
    return
  }
  func.func @transform_0(%arg0: i32) -> (i32, i32) {
    %c0_i32 = arith.constant 0 : i32
    %c0_i32_0 = arith.constant 0 : i32
    return %arg0, %c0_i32 : i32, i32
  }
  func.func @transform_1(%arg0: i32) -> (i32, i32) {
    %c0_i32 = arith.constant 0 : i32
    %c0_i32_0 = arith.constant 0 : i32
    return %arg0, %c0_i32 : i32, i32
  }
  func.func @transform_2(%arg0: i32) -> (i32, i32) {
    %c0_i32 = arith.constant 0 : i32
    %c0_i32_0 = arith.constant 0 : i32
    return %arg0, %c0_i32 : i32, i32
  }
  func.func @transform_3(%arg0: i32) -> (i32, i32) {
    %c0_i32 = arith.constant 0 : i32
    %c0_i32_0 = arith.constant 0 : i32
    %c0_i32_1 = arith.constant 0 : i32
    return %c0_i32, %c0_i32_0 : i32, i32
  }
  func.func @transform_4(%arg0: i32) -> (i32, i32) {
    %c0_i32 = arith.constant 0 : i32
    %c0_i32_0 = arith.constant 0 : i32
    %c0_i32_1 = arith.constant 0 : i32
    return %c0_i32, %c0_i32_0 : i32, i32
  }
  func.func @transform_5(%arg0: i32) -> (i32, i32) {
    %c0_i32 = arith.constant 0 : i32
    %c0_i32_0 = arith.constant 0 : i32
    %c0_i32_1 = arith.constant 0 : i32
    return %c0_i32, %c0_i32_0 : i32, i32
  }
  func.func @transform_6(%arg0: i32) -> (i32, i32) {
    %c0_i32 = arith.constant 0 : i32
    %c0_i32_0 = arith.constant 0 : i32
    %c0_i32_1 = arith.constant 0 : i32
    return %c0_i32, %c0_i32_0 : i32, i32
  }
  func.func @transform_7(%arg0: i32) -> (i32, i32) {
    %c0_i32 = arith.constant 0 : i32
    %c0_i32_0 = arith.constant 0 : i32
    %c0_i32_1 = arith.constant 0 : i32
    return %c0_i32, %c0_i32_0 : i32, i32
  }
  func.func @transform_8(%arg0: i32) -> (i32, i32) {
    %c0_i32 = arith.constant 0 : i32
    %c0_i32_0 = arith.constant 0 : i32
    return %arg0, %c0_i32 : i32, i32
  }
}

module attributes {stable_mosaic.version = 11 : i64} {
  func.func @_additive_intervention_kernel(%arg0: i32, %arg1: memref<2x256xf32, #tpu.memory_space<vmem>>, %arg2: memref<2x32xf32, #tpu.memory_space<vmem>>, %arg3: memref<2x8xf32, #tpu.memory_space<vmem>>, %arg4: memref<32x256xf32, #tpu.memory_space<vmem>>, %arg5: memref<256x2048xf32, #tpu.memory_space<vmem>>, %arg6: memref<2048x8xf32, #tpu.memory_space<vmem>>, %arg7: memref<8x256xf32, #tpu.memory_space<vmem>>, %arg8: memref<256x32xf32, #tpu.memory_space<vmem>>, %arg9: memref<2x32xf32, #tpu.memory_space<vmem>>) attributes {dimension_semantics = [#tpu.dimension_semantics<parallel>], iteration_bounds = array<i64: 1>, scalar_prefetch = 0 : i64, scratch_operands = 0 : i64, tpu.core_type = #tpu.core_type<tc>, window_params = [{transform_indices = @transform_0, window_bounds = array<i64: 2, 256>}, {transform_indices = @transform_1, window_bounds = array<i64: 2, 32>}, {transform_indices = @transform_2, window_bounds = array<i64: 2, 8>}, {pipeline_mode = #tpu.pipeline_mode<synchronous>, transform_indices = @transform_3, window_bounds = array<i64: 32, 256>}, {pipeline_mode = #tpu.pipeline_mode<synchronous>, transform_indices = @transform_4, window_bounds = array<i64: 256, 2048>}, {pipeline_mode = #tpu.pipeline_mode<synchronous>, transform_indices = @transform_5, window_bounds = array<i64: 2048, 8>}, {pipeline_mode = #tpu.pipeline_mode<synchronous>, transform_indices = @transform_6, window_bounds = array<i64: 8, 256>}, {pipeline_mode = #tpu.pipeline_mode<synchronous>, transform_indices = @transform_7, window_bounds = array<i64: 256, 32>}, {transform_indices = @transform_8, window_bounds = array<i64: 2, 32>}]} {
    %c0 = arith.constant 0 : index
    %c0_0 = arith.constant 0 : index
    %0 = vector.load %arg1[%c0, %c0_0] : memref<2x256xf32, #tpu.memory_space<vmem>>, vector<2x256xf32>
    %c0_1 = arith.constant 0 : index
    %c0_2 = arith.constant 0 : index
    %1 = vector.load %arg5[%c0_1, %c0_2] : memref<256x2048xf32, #tpu.memory_space<vmem>>, vector<256x2048xf32>
    %cst = arith.constant dense<0.000000e+00> : vector<2x2048xf32>
    %2 = tpu.matmul %0, %1, %cst {dimension_numbers = #tpu.dot_dimension_numbers<[1], [0], [0], [1], [0, 0, 1, 1], [], []>} : vector<2x256xf32>, vector<256x2048xf32>, vector<2x2048xf32> -> vector<2x2048xf32>
    %c0_3 = arith.constant 0 : index
    %c0_4 = arith.constant 0 : index
    %3 = vector.load %arg2[%c0_3, %c0_4] : memref<2x32xf32, #tpu.memory_space<vmem>>, vector<2x32xf32>
    %c0_5 = arith.constant 0 : index
    %c0_6 = arith.constant 0 : index
    %4 = vector.load %arg4[%c0_5, %c0_6] : memref<32x256xf32, #tpu.memory_space<vmem>>, vector<32x256xf32>
    %cst_7 = arith.constant dense<0.000000e+00> : vector<2x256xf32>
    %5 = tpu.matmul %3, %4, %cst_7 {dimension_numbers = #tpu.dot_dimension_numbers<[1], [0], [0], [1], [0, 0, 1, 1], [], []>} : vector<2x32xf32>, vector<32x256xf32>, vector<2x256xf32> -> vector<2x256xf32>
    %6 = tpu.concatenate %5, %5, %5, %5, %5, %5, %5, %5 in 1 : vector<2x256xf32>, vector<2x256xf32>, vector<2x256xf32>, vector<2x256xf32>, vector<2x256xf32>, vector<2x256xf32>, vector<2x256xf32>, vector<2x256xf32> -> vector<2x2048xf32>
    %7 = arith.addf %2, %6 : vector<2x2048xf32>
    %8 = math.tanh %7 : vector<2x2048xf32>
    %c0_8 = arith.constant 0 : index
    %c0_9 = arith.constant 0 : index
    %9 = vector.load %arg6[%c0_8, %c0_9] : memref<2048x8xf32, #tpu.memory_space<vmem>>, vector<2048x8xf32>
    %cst_10 = arith.constant dense<0.000000e+00> : vector<2x8xf32>
    %10 = tpu.matmul %8, %9, %cst_10 {dimension_numbers = #tpu.dot_dimension_numbers<[1], [0], [0], [1], [0, 0, 1, 1], [], []>} : vector<2x2048xf32>, vector<2048x8xf32>, vector<2x8xf32> -> vector<2x8xf32>
    %cst_11 = arith.constant dense<0xFF800000> : vector<2xf32>
    %11 = vector.multi_reduction <maximumf>, %10, %cst_11 [1] : vector<2x8xf32> to vector<2xf32>
    %12 = vector.shape_cast %11 : vector<2xf32> to vector<2x1xf32>
    %13 = vector.broadcast %12 : vector<2x1xf32> to vector<2x8xf32>
    %14 = arith.subf %10, %13 : vector<2x8xf32>
    %15 = math.exp %14 : vector<2x8xf32>
    %cst_12 = arith.constant dense<0.000000e+00> : vector<2xf32>
    %16 = vector.multi_reduction <add>, %15, %cst_12 [1] : vector<2x8xf32> to vector<2xf32>
    %17 = vector.shape_cast %16 : vector<2xf32> to vector<2x1xf32>
    %18 = tpu.reciprocal %17 {approx = true} : vector<2x1xf32> -> vector<2x1xf32>
    %19 = vector.broadcast %18 : vector<2x1xf32> to vector<2x8xf32>
    %20 = arith.mulf %15, %19 : vector<2x8xf32>
    %c0_13 = arith.constant 0 : index
    %c0_14 = arith.constant 0 : index
    %21 = vector.load %arg3[%c0_13, %c0_14] : memref<2x8xf32, #tpu.memory_space<vmem>>, vector<2x8xf32>
    %22 = arith.mulf %20, %21 : vector<2x8xf32>
    %c0_15 = arith.constant 0 : index
    %c0_16 = arith.constant 0 : index
    %23 = vector.load %arg7[%c0_15, %c0_16] : memref<8x256xf32, #tpu.memory_space<vmem>>, vector<8x256xf32>
    %cst_17 = arith.constant dense<0.000000e+00> : vector<2x256xf32>
    %24 = tpu.matmul %22, %23, %cst_17 {dimension_numbers = #tpu.dot_dimension_numbers<[1], [0], [0], [1], [0, 0, 1, 1], [], []>} : vector<2x8xf32>, vector<8x256xf32>, vector<2x256xf32> -> vector<2x256xf32>
    %25 = arith.mulf %0, %24 : vector<2x256xf32>
    %c0_18 = arith.constant 0 : index
    %c0_19 = arith.constant 0 : index
    %26 = vector.load %arg8[%c0_18, %c0_19] : memref<256x32xf32, #tpu.memory_space<vmem>>, vector<256x32xf32>
    %cst_20 = arith.constant dense<0.000000e+00> : vector<2x32xf32>
    %27 = tpu.matmul %25, %26, %cst_20 {dimension_numbers = #tpu.dot_dimension_numbers<[1], [0], [0], [1], [0, 0, 1, 1], [], []>} : vector<2x256xf32>, vector<256x32xf32>, vector<2x32xf32> -> vector<2x32xf32>
    %c0_21 = arith.constant 0 : index
    %c0_22 = arith.constant 0 : index
    %28 = vector.load %arg9[%c0_21, %c0_22] : memref<2x32xf32, #tpu.memory_space<vmem>>, vector<2x32xf32>
    tpu.vector_store %arg9[%c0_21, %c0_22], %27 {strides = array<i32>} : memref<2x32xf32, #tpu.memory_space<vmem>>, vector<2x32xf32>,
    return
  }
  func.func @transform_0(%arg0: i32) -> (i32, i32) {
    %c0_i32 = arith.constant 0 : i32
    %c0_i32_0 = arith.constant 0 : i32
    return %arg0, %c0_i32 : i32, i32
  }
  func.func @transform_1(%arg0: i32) -> (i32, i32) {
    %c0_i32 = arith.constant 0 : i32
    %c0_i32_0 = arith.constant 0 : i32
    return %arg0, %c0_i32 : i32, i32
  }
  func.func @transform_2(%arg0: i32) -> (i32, i32) {
    %c0_i32 = arith.constant 0 : i32
    %c0_i32_0 = arith.constant 0 : i32
    return %arg0, %c0_i32 : i32, i32
  }
  func.func @transform_3(%arg0: i32) -> (i32, i32) {
    %c0_i32 = arith.constant 0 : i32
    %c0_i32_0 = arith.constant 0 : i32
    %c0_i32_1 = arith.constant 0 : i32
    return %c0_i32, %c0_i32_0 : i32, i32
  }
  func.func @transform_4(%arg0: i32) -> (i32, i32) {
    %c0_i32 = arith.constant 0 : i32
    %c0_i32_0 = arith.constant 0 : i32
    %c0_i32_1 = arith.constant 0 : i32
    return %c0_i32, %c0_i32_0 : i32, i32
  }
  func.func @transform_5(%arg0: i32) -> (i32, i32) {
    %c0_i32 = arith.constant 0 : i32
    %c0_i32_0 = arith.constant 0 : i32
    %c0_i32_1 = arith.constant 0 : i32
    return %c0_i32, %c0_i32_0 : i32, i32
  }
  func.func @transform_6(%arg0: i32) -> (i32, i32) {
    %c0_i32 = arith.constant 0 : i32
    %c0_i32_0 = arith.constant 0 : i32
    %c0_i32_1 = arith.constant 0 : i32
    return %c0_i32, %c0_i32_0 : i32, i32
  }
  func.func @transform_7(%arg0: i32) -> (i32, i32) {
    %c0_i32 = arith.constant 0 : i32
    %c0_i32_0 = arith.constant 0 : i32
    %c0_i32_1 = arith.constant 0 : i32
    return %c0_i32, %c0_i32_0 : i32, i32
  }
  func.func @transform_8(%arg0: i32) -> (i32, i32) {
    %c0_i32 = arith.constant 0 : i32
    %c0_i32_0 = arith.constant 0 : i32
    return %arg0, %c0_i32 : i32, i32
  }
}

</mosaic_0001>

<llo_original>
// kernel: tpu_custom_call.1
$region0: #{tpu_custom_call.1}
  #allocation0 [shape = 'u32[]', space=smem, size = 0x4, offset = 0x4, fixed_abs, tag = 'smem constant byte address 0x4 - core index']
  #allocation1 [shape = 'u32[144,128]{1,0:T(1,128)}', space=vmem, size = 0x12000, scoped, tag = 'internal scratch']
  %s0 = inlined_call_operand.hbm [shape: f32[2,256], index: 0, kind: input, shape index: {}]
  %s1 = inlined_call_operand.hbm [shape: f32[2,32], index: 1, kind: input, shape index: {}]
  %s2 = inlined_call_operand.hbm [shape: f32[2,8], index: 2, kind: input, shape index: {}]
  %s3 = inlined_call_operand.hbm [shape: f32[32,256], index: 3, kind: input, shape index: {}]
  %s4 = inlined_call_operand.hbm [shape: f32[256,2048], index: 4, kind: input, shape index: {}]
  %s5 = inlined_call_operand.vmem [shape: f32[2048,8], index: 5, kind: input, shape index: {}]
  %s6 = inlined_call_operand.hbm [shape: f32[8,256], index: 6, kind: input, shape index: {}]
  %s7 = inlined_call_operand.vmem [shape: f32[256,32], index: 7, kind: input, shape index: {}]
  %s8 = inlined_call_operand.hbm [shape: f32[2,32], index: 8, kind: output, shape index: {}]
  %s9 = sld [smem:[#allocation0]]
  $region66: #{tpu_custom_call.1} parent=0
    _
  %s11 = ssub.s32 1, %s9
  %s12 = scalar_select 0, %s11, %s9
  $region1: #{tpu_custom_call.1} parent=0
    #allocation2 [shape = 'u8[2048]{0}', space=vmem, size = 0x800, scoped, tag = 'input window, operand 0, single buffered']
    #allocation3 [shape = 's32[1]{0}', space=sflag, size = 0x4, scoped, tag = 'scoped memory for tpu_custom_call.1']
    #allocation4 [shape = 's32[1]{0}', space=sflag, size = 0x4, scoped, tag = 'scoped memory for tpu_custom_call.1']
    #allocation5 [shape = 'u8[1024]{0}', space=vmem, size = 0x400, scoped, tag = 'input window, operand 1, single buffered']
    #allocation6 [shape = 's32[1]{0}', space=sflag, size = 0x4, scoped, tag = 'scoped memory for tpu_custom_call.1']
    #allocation7 [shape = 'u8[1024]{0}', space=vmem, size = 0x400, scoped, tag = 'input window, operand 2, single buffered']
    #allocation8 [shape = 'u8[32768]{0}', space=vmem, size = 0x8000, scoped, tag = 'input window, operand 3, single buffered']
    #allocation9 [shape = 's32[1]{0}', space=sflag, size = 0x4, scoped, tag = 'scoped memory for tpu_custom_call.1']
    #allocation10 [shape = 'u8[2097152]{0}', space=vmem, size = 0x200000, scoped, tag = 'input window, operand 4, single buffered']
    #allocation11 [shape = 'u8[8192]{0}', space=vmem, size = 0x2000, scoped, tag = 'input window, operand 6, single buffered']
    #allocation12 [shape = 's32[1]{0}', space=sflag, size = 0x4, scoped, tag = 'scoped memory for tpu_custom_call.1']
    #allocation13 [shape = 'u8[1024]{0}', space=vmem, size = 0x400, scoped, tag = 'output window, operand 0, single buffered']
    %13 = vsyncpa [#allocation3], 0
    %14 = vsyncpa [#allocation6], 0
    %15 = vsyncpa [#allocation9], 0
    %16 = vsyncpa [#allocation12], 0
    %17 = vsyncpa [#allocation4], 0
    // Predicated region
    $region2: #{tpu_custom_call.1} parent=1 // pred_check
      _
    $region3: #{tpu_custom_call.1} parent=1 // pred_check_branch
      %19 = sbr.rel (0) target = $region5
    $region4: #{tpu_custom_call.1} parent=1 // pred_region
      %s21 = ssub.s32 64, 64
      %22 = vsyncadd [#allocation3], %s21
      %s24 = sshll.u32 [#allocation2], 4
      %s25 = int_to_ptr.vmem [resolvable:$true] %s24
      %27 = dma.hbm_to_vmem [thread:$0]  %s0, 64, %s25, [#allocation3]
    $region5: #{tpu_custom_call.1} parent=1 // pred_fallthru
      _
    // Predicated region
    $region6: #{tpu_custom_call.1} parent=1 // pred_check
      _
    $region7: #{tpu_custom_call.1} parent=1 // pred_check_branch
      %29 = sbr.rel (0) target = $region9
    $region8: #{tpu_custom_call.1} parent=1 // pred_region
      %s31 = ssub.s32 32, 32
      %32 = vsyncadd [#allocation6], %s31
      %s34 = sshll.u32 [#allocation5], 4
      %s35 = int_to_ptr.vmem [resolvable:$true] %s34
      %37 = dma.hbm_to_vmem [thread:$0]  %s1, 32, %s35, [#allocation6]
    $region9: #{tpu_custom_call.1} parent=1 // pred_fallthru
      _
    // Predicated region
    $region10: #{tpu_custom_call.1} parent=1 // pred_check
      _
    $region11: #{tpu_custom_call.1} parent=1 // pred_check_branch
      %39 = sbr.rel (0) target = $region13
    $region12: #{tpu_custom_call.1} parent=1 // pred_region
      %s41 = ssub.s32 32, 32
      %42 = vsyncadd [#allocation6], %s41
      %s44 = sshll.u32 [#allocation7], 4
      %s45 = int_to_ptr.vmem [resolvable:$true] %s44
      %47 = dma.hbm_to_vmem [thread:$0]  %s2, 32, %s45, [#allocation6]
    $region13: #{tpu_custom_call.1} parent=1 // pred_fallthru
      _
    // Predicated region
    $region14: #{tpu_custom_call.1} parent=1 // pred_check
      _
    $region15: #{tpu_custom_call.1} parent=1 // pred_check_branch
      %49 = sbr.rel (0) target = $region17
    $region16: #{tpu_custom_call.1} parent=1 // pred_region
      %s51 = ssub.s32 1024, 1024
      %52 = vsyncadd [#allocation9], %s51
      %s53 = sshll.u32 [#allocation8], 4
      %s54 = int_to_ptr.vmem [resolvable:$true] %s53
      %59 = dma.hbm_to_vmem [thread:$0]  %s3, 1024, %s54, [#allocation9], 256, 256, 16
    $region17: #{tpu_custom_call.1} parent=1 // pred_fallthru
      _
    // Predicated region
    $region18: #{tpu_custom_call.1} parent=1 // pred_check
      _
    $region19: #{tpu_custom_call.1} parent=1 // pred_check_branch
      %61 = sbr.rel (0) target = $region21
    $region20: #{tpu_custom_call.1} parent=1 // pred_region
      %s63 = ssub.s32 65536, 65536
      %64 = vsyncadd [#allocation9], %s63
      %s65 = sshll.u32 [#allocation10], 4
      %s66 = int_to_ptr.vmem [resolvable:$true] %s65
      %71 = dma.hbm_to_vmem [thread:$0]  %s4, 65536, %s66, [#allocation9], 2048, 2048, 128
    $region21: #{tpu_custom_call.1} parent=1 // pred_fallthru
      _
    // Predicated region
    $region22: #{tpu_custom_call.1} parent=1 // pred_check
      _
    $region23: #{tpu_custom_call.1} parent=1 // pred_check_branch
      %73 = sbr.rel (0) target = $region25
    $region24: #{tpu_custom_call.1} parent=1 // pred_region
      _
    $region25: #{tpu_custom_call.1} parent=1 // pred_fallthru
      _
    // Predicated region
    $region26: #{tpu_custom_call.1} parent=1 // pred_check
      _
    $region27: #{tpu_custom_call.1} parent=1 // pred_check_branch
      %75 = sbr.rel (0) target = $region29
    $region28: #{tpu_custom_call.1} parent=1 // pred_region
      %s77 = ssub.s32 256, 256
      %78 = vsyncadd [#allocation12], %s77
      %s80 = sshll.u32 [#allocation11], 4
      %s81 = int_to_ptr.vmem [resolvable:$true] %s80
      %83 = dma.hbm_to_vmem [thread:$0]  %s6, 256, %s81, [#allocation12]
    $region29: #{tpu_custom_call.1} parent=1 // pred_fallthru
      _
    // Predicated region
    $region30: #{tpu_custom_call.1} parent=1 // pred_check
      _
    $region31: #{tpu_custom_call.1} parent=1 // pred_check_branch
      %85 = sbr.rel (0) target = $region33
    $region32: #{tpu_custom_call.1} parent=1 // pred_region
      _
    $region33: #{tpu_custom_call.1} parent=1 // pred_fallthru
      _
    // Predicated region
    $region34: #{tpu_custom_call.1} parent=1 // pred_check
      _
    $region35: #{tpu_custom_call.1} parent=1 // pred_check_branch
      %87 = sbr.rel (0) target = $region37
    $region36: #{tpu_custom_call.1} parent=1 // pred_region
      %88 = dma.done [#allocation3], 64
    $region37: #{tpu_custom_call.1} parent=1 // pred_fallthru
      _
    // Predicated region
    $region38: #{tpu_custom_call.1} parent=1 // pred_check
      _
    $region39: #{tpu_custom_call.1} parent=1 // pred_check_branch
      %90 = sbr.rel (0) target = $region41
    $region40: #{tpu_custom_call.1} parent=1 // pred_region
      %91 = dma.done [#allocation6], 32
    $region41: #{tpu_custom_call.1} parent=1 // pred_fallthru
      _
    // Predicated region
    $region42: #{tpu_custom_call.1} parent=1 // pred_check
      _
    $region43: #{tpu_custom_call.1} parent=1 // pred_check_branch
      %93 = sbr.rel (0) target = $region45
    $region44: #{tpu_custom_call.1} parent=1 // pred_region
      %94 = dma.done [#allocation6], 32
    $region45: #{tpu_custom_call.1} parent=1 // pred_fallthru
      _
    // Predicated region
    $region46: #{tpu_custom_call.1} parent=1 // pred_check
      _
    $region47: #{tpu_custom_call.1} parent=1 // pred_check_branch
      %96 = sbr.rel (0) target = $region49
    $region48: #{tpu_custom_call.1} parent=1 // pred_region
      %97 = dma.done [#allocation9], 1024
    $region49: #{tpu_custom_call.1} parent=1 // pred_fallthru
      _
    // Predicated region
    $region50: #{tpu_custom_call.1} parent=1 // pred_check
      _
    $region51: #{tpu_custom_call.1} parent=1 // pred_check_branch
      %99 = sbr.rel (0) target = $region53
    $region52: #{tpu_custom_call.1} parent=1 // pred_region
      %100 = dma.done [#allocation9], 65536
    $region53: #{tpu_custom_call.1} parent=1 // pred_fallthru
      _
    // Predicated region
    $region54: #{tpu_custom_call.1} parent=1 // pred_check
      _
    $region55: #{tpu_custom_call.1} parent=1 // pred_check_branch
      %102 = sbr.rel (0) target = $region57
    $region56: #{tpu_custom_call.1} parent=1 // pred_region
      %103 = dma.done [#allocation12], 256
    $region57: #{tpu_custom_call.1} parent=1 // pred_fallthru
      _
    %v104 = vld [vmem:[#allocation2] sm:$0xf]
    %v105 = vld [vmem:[#allocation10] sm:$0xff]
    %v106 = vld [vmem:[#allocation10 + $0x8] sm:$0xff]
    %v107 = vld [vmem:[#allocation10 + $0x10] sm:$0xff]
    %v108 = vld [vmem:[#allocation10 + $0x18] sm:$0xff]
    %v109 = vld [vmem:[#allocation10 + $0x20] sm:$0xff]
    %v110 = vld [vmem:[#allocation10 + $0x28] sm:$0xff]
    %v111 = vld [vmem:[#allocation10 + $0x30] sm:$0xff]
    %v112 = vld [vmem:[#allocation10 + $0x38] sm:$0xff]
    %v113 = vld [vmem:[#allocation10 + $0x40] sm:$0xff]
    %v114 = vld [vmem:[#allocation10 + $0x48] sm:$0xff]
    %v115 = vld [vmem:[#allocation10 + $0x50] sm:$0xff]
    %v116 = vld [vmem:[#allocation10 + $0x58] sm:$0xff]
    %v117 = vld [vmem:[#allocation10 + $0x60] sm:$0xff]
    %v118 = vld [vmem:[#allocation10 + $0x68] sm:$0xff]
    %v119 = vld [vmem:[#allocation10 + $0x70] sm:$0xff]
    %v120 = vld [vmem:[#allocation10 + $0x78] sm:$0xff]
    %v121 = vld [vmem:[#allocation10 + $0x80] sm:$0xff]
    %v122 = vld [vmem:[#allocation10 + $0x88] sm:$0xff]
    %v123 = vld [vmem:[#allocation10 + $0x90] sm:$0xff]
    %v124 = vld [vmem:[#allocation10 + $0x98] sm:$0xff]
    %v125 = vld [vmem:[#allocation10 + $0xa0] sm:$0xff]
    %v126 = vld [vmem:[#allocation10 + $0xa8] sm:$0xff]
    %v127 = vld [vmem:[#allocation10 + $0xb0] sm:$0xff]
    %v128 = vld [vmem:[#allocation10 + $0xb8] sm:$0xff]
    %v129 = vld [vmem:[#allocation10 + $0xc0] sm:$0xff]
    %v130 = vld [vmem:[#allocation10 + $0xc8] sm:$0xff]
    %v131 = vld [vmem:[#allocation10 + $0xd0] sm:$0xff]
    %v132 = vld [vmem:[#allocation10 + $0xd8] sm:$0xff]
    %v133 = vld [vmem:[#allocation10 + $0xe0] sm:$0xff]
    %v134 = vld [vmem:[#allocation10 + $0xe8] sm:$0xff]
    %v135 = vld [vmem:[#allocation10 + $0xf0] sm:$0xff]
    %v136 = vld [vmem:[#allocation10 + $0xf8] sm:$0xff]
    %v137 = vld [vmem:[#allocation10 + $0x100] sm:$0xff]
    %v138 = vld [vmem:[#allocation10 + $0x108] sm:$0xff]
    %v139 = vld [vmem:[#allocation10 + $0x110] sm:$0xff]
    %v140 = vld [vmem:[#allocation10 + $0x118] sm:$0xff]
    %v141 = vld [vmem:[#allocation10 + $0x120] sm:$0xff]
    %v142 = vld [vmem:[#allocation10 + $0x128] sm:$0xff]
    %v143 = vld [vmem:[#allocation10 + $0x130] sm:$0xff]
    %v144 = vld [vmem:[#allocation10 + $0x138] sm:$0xff]
    %v145 = vld [vmem:[#allocation10 + $0x140] sm:$0xff]
    %v146 = vld [vmem:[#allocation10 + $0x148] sm:$0xff]
    %v147 = vld [vmem:[#allocation10 + $0x150] sm:$0xff]
    %v148 = vld [vmem:[#allocation10 + $0x158] sm:$0xff]
    %v149 = vld [vmem:[#allocation10 + $0x160] sm:$0xff]
    %v150 = vld [vmem:[#allocation10 + $0x168] sm:$0xff]
    %v151 = vld [vmem:[#allocation10 + $0x170] sm:$0xff]
    %v152 = vld [vmem:[#allocation10 + $0x178] sm:$0xff]
    %v153 = vld [vmem:[#allocation10 + $0x180] sm:$0xff]
    %v154 = vld [vmem:[#allocation10 + $0x188] sm:$0xff]
    %v155 = vld [vmem:[#allocation10 + $0x190] sm:$0xff]
    %v156 = vld [vmem:[#allocation10 + $0x198] sm:$0xff]
    %v157 = vld [vmem:[#allocation10 + $0x1a0] sm:$0xff]
    %v158 = vld [vmem:[#allocation10 + $0x1a8] sm:$0xff]
    %v159 = vld [vmem:[#allocation10 + $0x1b0] sm:$0xff]
    %v160 = vld [vmem:[#allocation10 + $0x1b8] sm:$0xff]
    %v161 = vld [vmem:[#allocation10 + $0x1c0] sm:$0xff]
    %v162 = vld [vmem:[#allocation10 + $0x1c8] sm:$0xff]
    %v163 = vld [vmem:[#allocation10 + $0x1d0] sm:$0xff]
    %v164 = vld [vmem:[#allocation10 + $0x1d8] sm:$0xff]
    %v165 = vld [vmem:[#allocation10 + $0x1e0] sm:$0xff]
    %v166 = vld [vmem:[#allocation10 + $0x1e8] sm:$0xff]
    %v167 = vld [vmem:[#allocation10 + $0x1f0] sm:$0xff]
    %v168 = vld [vmem:[#allocation10 + $0x1f8] sm:$0xff]
    %v169 = vld [vmem:[#allocation10 + $0x200] sm:$0xff]
    %v170 = vld [vmem:[#allocation10 + $0x208] sm:$0xff]
    %v171 = vld [vmem:[#allocation10 + $0x210] sm:$0xff]
    %v172 = vld [vmem:[#allocation10 + $0x218] sm:$0xff]
    %v173 = vld [vmem:[#allocation10 + $0x220] sm:$0xff]
    %v174 = vld [vmem:[#allocation10 + $0x228] sm:$0xff]
    %v175 = vld [vmem:[#allocation10 + $0x230] sm:$0xff]
    %v176 = vld [vmem:[#allocation10 + $0x238] sm:$0xff]
    %v177 = vld [vmem:[#allocation10 + $0x240] sm:$0xff]
    %v178 = vld [vmem:[#allocation10 + $0x248] sm:$0xff]
    %v179 = vld [vmem:[#allocation10 + $0x250] sm:$0xff]
    %v180 = vld [vmem:[#allocation10 + $0x258] sm:$0xff]
    %v181 = vld [vmem:[#allocation10 + $0x260] sm:$0xff]
    %v182 = vld [vmem:[#allocation10 + $0x268] sm:$0xff]
    %v183 = vld [vmem:[#allocation10 + $0x270] sm:$0xff]
    %v184 = vld [vmem:[#allocation10 + $0x278] sm:$0xff]
    %v185 = vld [vmem:[#allocation10 + $0x280] sm:$0xff]
    %v186 = vld [vmem:[#allocation10 + $0x288] sm:$0xff]
    %v187 = vld [vmem:[#allocation10 + $0x290] sm:$0xff]
    %v188 = vld [vmem:[#allocation10 + $0x298] sm:$0xff]
    %v189 = vld [vmem:[#allocation10 + $0x2a0] sm:$0xff]
    %v190 = vld [vmem:[#allocation10 + $0x2a8] sm:$0xff]
    %v191 = vld [vmem:[#allocation10 + $0x2b0] sm:$0xff]
    %v192 = vld [vmem:[#allocation10 + $0x2b8] sm:$0xff]
    %v193 = vld [vmem:[#allocation10 + $0x2c0] sm:$0xff]
    %v194 = vld [vmem:[#allocation10 + $0x2c8] sm:$0xff]
    %v195 = vld [vmem:[#allocation10 + $0x2d0] sm:$0xff]
    %v196 = vld [vmem:[#allocation10 + $0x2d8] sm:$0xff]
    %v197 = vld [vmem:[#allocation10 + $0x2e0] sm:$0xff]
    %v198 = vld [vmem:[#allocation10 + $0x2e8] sm:$0xff]
    %v199 = vld [vmem:[#allocation10 + $0x2f0] sm:$0xff]
    %v200 = vld [vmem:[#allocation10 + $0x2f8] sm:$0xff]
    %v201 = vld [vmem:[#allocation10 + $0x300] sm:$0xff]
    %v202 = vld [vmem:[#allocation10 + $0x308] sm:$0xff]
    %v203 = vld [vmem:[#allocation10 + $0x310] sm:$0xff]
    %v204 = vld [vmem:[#allocation10 + $0x318] sm:$0xff]
    %v205 = vld [vmem:[#allocation10 + $0x320] sm:$0xff]
    %v206 = vld [vmem:[#allocation10 + $0x328] sm:$0xff]
    %v207 = vld [vmem:[#allocation10 + $0x330] sm:$0xff]
    %v208 = vld [vmem:[#allocation10 + $0x338] sm:$0xff]
    %v209 = vld [vmem:[#allocation10 + $0x340] sm:$0xff]
    %v210 = vld [vmem:[#allocation10 + $0x348] sm:$0xff]
    %v211 = vld [vmem:[#allocation10 + $0x350] sm:$0xff]
    %v212 = vld [vmem:[#allocation10 + $0x358] sm:$0xff]
    %v213 = vld [vmem:[#allocation10 + $0x360] sm:$0xff]
    %v214 = vld [vmem:[#allocation10 + $0x368] sm:$0xff]
    %v215 = vld [vmem:[#allocation10 + $0x370] sm:$0xff]
    %v216 = vld [vmem:[#allocation10 + $0x378] sm:$0xff]
    %v217 = vld [vmem:[#allocation10 + $0x380] sm:$0xff]
    %v218 = vld [vmem:[#allocation10 + $0x388] sm:$0xff]
    %v219 = vld [vmem:[#allocation10 + $0x390] sm:$0xff]
    %v220 = vld [vmem:[#allocation10 + $0x398] sm:$0xff]
    %v221 = vld [vmem:[#allocation10 + $0x3a0] sm:$0xff]
    %v222 = vld [vmem:[#allocation10 + $0x3a8] sm:$0xff]
    %v223 = vld [vmem:[#allocation10 + $0x3b0] sm:$0xff]
    %v224 = vld [vmem:[#allocation10 + $0x3b8] sm:$0xff]
    %v225 = vld [vmem:[#allocation10 + $0x3c0] sm:$0xff]
    %v226 = vld [vmem:[#allocation10 + $0x3c8] sm:$0xff]
    %v227 = vld [vmem:[#allocation10 + $0x3d0] sm:$0xff]
    %v228 = vld [vmem:[#allocation10 + $0x3d8] sm:$0xff]
    %v229 = vld [vmem:[#allocation10 + $0x3e0] sm:$0xff]
    %v230 = vld [vmem:[#allocation10 + $0x3e8] sm:$0xff]
    %v231 = vld [vmem:[#allocation10 + $0x3f0] sm:$0xff]
    %v232 = vld [vmem:[#allocation10 + $0x3f8] sm:$0xff]
    %v233 = vld [vmem:[#allocation10 + $0x400] sm:$0xff]
    %v234 = vld [vmem:[#allocation10 + $0x408] sm:$0xff]
    %v235 = vld [vmem:[#allocation10 + $0x410] sm:$0xff]
    %v236 = vld [vmem:[#allocation10 + $0x418] sm:$0xff]
    %v237 = vld [vmem:[#allocation10 + $0x420] sm:$0xff]
    %v238 = vld [vmem:[#allocation10 + $0x428] sm:$0xff]
    %v239 = vld [vmem:[#allocation10 + $0x430] sm:$0xff]
    %v240 = vld [vmem:[#allocation10 + $0x438] sm:$0xff]
    %v241 = vld [vmem:[#allocation10 + $0x440] sm:$0xff]
    %v242 = vld [vmem:[#allocation10 + $0x448] sm:$0xff]
    %v243 = vld [vmem:[#allocation10 + $0x450] sm:$0xff]
    %v244 = vld [vmem:[#allocation10 + $0x458] sm:$0xff]
    %v245 = vld [vmem:[#allocation10 + $0x460] sm:$0xff]
    %v246 = vld [vmem:[#allocation10 + $0x468] sm:$0xff]
    %v247 = vld [vmem:[#allocation10 + $0x470] sm:$0xff]
    %v248 = vld [vmem:[#allocation10 + $0x478] sm:$0xff]
    %v249 = vld [vmem:[#allocation10 + $0x480] sm:$0xff]
    %v250 = vld [vmem:[#allocation10 + $0x488] sm:$0xff]
    %v251 = vld [vmem:[#allocation10 + $0x490] sm:$0xff]
    %v252 = vld [vmem:[#allocation10 + $0x498] sm:$0xff]
    %v253 = vld [vmem:[#allocation10 + $0x4a0] sm:$0xff]
    %v254 = vld [vmem:[#allocation10 + $0x4a8] sm:$0xff]
    %v255 = vld [vmem:[#allocation10 + $0x4b0] sm:$0xff]
    %v256 = vld [vmem:[#allocation10 + $0x4b8] sm:$0xff]
    %v257 = vld [vmem:[#allocation10 + $0x4c0] sm:$0xff]
    %v258 = vld [vmem:[#allocation10 + $0x4c8] sm:$0xff]
    %v259 = vld [vmem:[#allocation10 + $0x4d0] sm:$0xff]
    %v260 = vld [vmem:[#allocation10 + $0x4d8] sm:$0xff]
    %v261 = vld [vmem:[#allocation10 + $0x4e0] sm:$0xff]
    %v262 = vld [vmem:[#allocation10 + $0x4e8] sm:$0xff]
    %v263 = vld [vmem:[#allocation10 + $0x4f0] sm:$0xff]
    %v264 = vld [vmem:[#allocation10 + $0x4f8] sm:$0xff]
    %v265 = vld [vmem:[#allocation10 + $0x500] sm:$0xff]
    %v266 = vld [vmem:[#allocation10 + $0x508] sm:$0xff]
    %v267 = vld [vmem:[#allocation10 + $0x510] sm:$0xff]
    %v268 = vld [vmem:[#allocation10 + $0x518] sm:$0xff]
    %v269 = vld [vmem:[#allocation10 + $0x520] sm:$0xff]
    %v270 = vld [vmem:[#allocation10 + $0x528] sm:$0xff]
    %v271 = vld [vmem:[#allocation10 + $0x530] sm:$0xff]
    %v272 = vld [vmem:[#allocation10 + $0x538] sm:$0xff]
    %v273 = vld [vmem:[#allocation10 + $0x540] sm:$0xff]
    %v274 = vld [vmem:[#allocation10 + $0x548] sm:$0xff]
    %v275 = vld [vmem:[#allocation10 + $0x550] sm:$0xff]
    %v276 = vld [vmem:[#allocation10 + $0x558] sm:$0xff]
    %v277 = vld [vmem:[#allocation10 + $0x560] sm:$0xff]
    %v278 = vld [vmem:[#allocation10 + $0x568] sm:$0xff]
    %v279 = vld [vmem:[#allocation10 + $0x570] sm:$0xff]
    %v280 = vld [vmem:[#allocation10 + $0x578] sm:$0xff]
    %v281 = vld [vmem:[#allocation10 + $0x580] sm:$0xff]
    %v282 = vld [vmem:[#allocation10 + $0x588] sm:$0xff]
    %v283 = vld [vmem:[#allocation10 + $0x590] sm:$0xff]
    %v284 = vld [vmem:[#allocation10 + $0x598] sm:$0xff]
    %v285 = vld [vmem:[#allocation10 + $0x5a0] sm:$0xff]
    %v286 = vld [vmem:[#allocation10 + $0x5a8] sm:$0xff]
    %v287 = vld [vmem:[#allocation10 + $0x5b0] sm:$0xff]
    %v288 = vld [vmem:[#allocation10 + $0x5b8] sm:$0xff]
    %v289 = vld [vmem:[#allocation10 + $0x5c0] sm:$0xff]
    %v290 = vld [vmem:[#allocation10 + $0x5c8] sm:$0xff]
    %v291 = vld [vmem:[#allocation10 + $0x5d0] sm:$0xff]
    %v292 = vld [vmem:[#allocation10 + $0x5d8] sm:$0xff]
    %v293 = vld [vmem:[#allocation10 + $0x5e0] sm:$0xff]
    %v294 = vld [vmem:[#allocation10 + $0x5e8] sm:$0xff]
    %v295 = vld [vmem:[#allocation10 + $0x5f0] sm:$0xff]
    %v296 = vld [vmem:[#allocation10 + $0x5f8] sm:$0xff]
    %v297 = vld [vmem:[#allocation10 + $0x600] sm:$0xff]
    %v298 = vld [vmem:[#allocation10 + $0x608] sm:$0xff]
    %v299 = vld [vmem:[#allocation10 + $0x610] sm:$0xff]
    %v300 = vld [vmem:[#allocation10 + $0x618] sm:$0xff]
    %v301 = vld [vmem:[#allocation10 + $0x620] sm:$0xff]
    %v302 = vld [vmem:[#allocation10 + $0x628] sm:$0xff]
    %v303 = vld [vmem:[#allocation10 + $0x630] sm:$0xff]
    %v304 = vld [vmem:[#allocation10 + $0x638] sm:$0xff]
    %v305 = vld [vmem:[#allocation10 + $0x640] sm:$0xff]
    %v306 = vld [vmem:[#allocation10 + $0x648] sm:$0xff]
    %v307 = vld [vmem:[#allocation10 + $0x650] sm:$0xff]
    %v308 = vld [vmem:[#allocation10 + $0x658] sm:$0xff]
    %v309 = vld [vmem:[#allocation10 + $0x660] sm:$0xff]
    %v310 = vld [vmem:[#allocation10 + $0x668] sm:$0xff]
    %v311 = vld [vmem:[#allocation10 + $0x670] sm:$0xff]
    %v312 = vld [vmem:[#allocation10 + $0x678] sm:$0xff]
    %v313 = vld [vmem:[#allocation10 + $0x680] sm:$0xff]
    %v314 = vld [vmem:[#allocation10 + $0x688] sm:$0xff]
    %v315 = vld [vmem:[#allocation10 + $0x690] sm:$0xff]
    %v316 = vld [vmem:[#allocation10 + $0x698] sm:$0xff]
    %v317 = vld [vmem:[#allocation10 + $0x6a0] sm:$0xff]
    %v318 = vld [vmem:[#allocation10 + $0x6a8] sm:$0xff]
    %v319 = vld [vmem:[#allocation10 + $0x6b0] sm:$0xff]
    %v320 = vld [vmem:[#allocation10 + $0x6b8] sm:$0xff]
    %v321 = vld [vmem:[#allocation10 + $0x6c0] sm:$0xff]
    %v322 = vld [vmem:[#allocation10 + $0x6c8] sm:$0xff]
    %v323 = vld [vmem:[#allocation10 + $0x6d0] sm:$0xff]
    %v324 = vld [vmem:[#allocation10 + $0x6d8] sm:$0xff]
    %v325 = vld [vmem:[#allocation10 + $0x6e0] sm:$0xff]
    %v326 = vld [vmem:[#allocation10 + $0x6e8] sm:$0xff]
    %v327 = vld [vmem:[#allocation10 + $0x6f0] sm:$0xff]
    %v328 = vld [vmem:[#allocation10 + $0x6f8] sm:$0xff]
    %v329 = vld [vmem:[#allocation10 + $0x700] sm:$0xff]
    %v330 = vld [vmem:[#allocation10 + $0x708] sm:$0xff]
    %v331 = vld [vmem:[#allocation10 + $0x710] sm:$0xff]
    %v332 = vld [vmem:[#allocation10 + $0x718] sm:$0xff]
    %v333 = vld [vmem:[#allocation10 + $0x720] sm:$0xff]
    %v334 = vld [vmem:[#allocation10 + $0x728] sm:$0xff]
    %v335 = vld [vmem:[#allocation10 + $0x730] sm:$0xff]
    %v336 = vld [vmem:[#allocation10 + $0x738] sm:$0xff]
    %v337 = vld [vmem:[#allocation10 + $0x740] sm:$0xff]
    %v338 = vld [vmem:[#allocation10 + $0x748] sm:$0xff]
    %v339 = vld [vmem:[#allocation10 + $0x750] sm:$0xff]
    %v340 = vld [vmem:[#allocation10 + $0x758] sm:$0xff]
    %v341 = vld [vmem:[#allocation10 + $0x760] sm:$0xff]
    %v342 = vld [vmem:[#allocation10 + $0x768] sm:$0xff]
    %v343 = vld [vmem:[#allocation10 + $0x770] sm:$0xff]
    %v344 = vld [vmem:[#allocation10 + $0x778] sm:$0xff]
    %v345 = vld [vmem:[#allocation10 + $0x780] sm:$0xff]
    %v346 = vld [vmem:[#allocation10 + $0x788] sm:$0xff]
    %v347 = vld [vmem:[#allocation10 + $0x790] sm:$0xff]
    %v348 = vld [vmem:[#allocation10 + $0x798] sm:$0xff]
    %v349 = vld [vmem:[#allocation10 + $0x7a0] sm:$0xff]
    %v350 = vld [vmem:[#allocation10 + $0x7a8] sm:$0xff]
    %v351 = vld [vmem:[#allocation10 + $0x7b0] sm:$0xff]
    %v352 = vld [vmem:[#allocation10 + $0x7b8] sm:$0xff]
    %v353 = vld [vmem:[#allocation10 + $0x7c0] sm:$0xff]
    %v354 = vld [vmem:[#allocation10 + $0x7c8] sm:$0xff]
    %v355 = vld [vmem:[#allocation10 + $0x7d0] sm:$0xff]
    %v356 = vld [vmem:[#allocation10 + $0x7d8] sm:$0xff]
    %v357 = vld [vmem:[#allocation10 + $0x7e0] sm:$0xff]
    %v358 = vld [vmem:[#allocation10 + $0x7e8] sm:$0xff]
    %v359 = vld [vmem:[#allocation10 + $0x7f0] sm:$0xff]
    %v360 = vld [vmem:[#allocation10 + $0x7f8] sm:$0xff]
    %v361 = vld [vmem:[#allocation10 + $0x800] sm:$0xff]
    %v362 = vld [vmem:[#allocation10 + $0x808] sm:$0xff]
    %v363 = vld [vmem:[#allocation10 + $0x810] sm:$0xff]
    %v364 = vld [vmem:[#allocation10 + $0x818] sm:$0xff]
    %v365 = vld [vmem:[#allocation10 + $0x820] sm:$0xff]
    %v366 = vld [vmem:[#allocation10 + $0x828] sm:$0xff]
    %v367 = vld [vmem:[#allocation10 + $0x830] sm:$0xff]
    %v368 = vld [vmem:[#allocation10 + $0x838] sm:$0xff]
    %v369 = vld [vmem:[#allocation10 + $0x840] sm:$0xff]
    %v370 = vld [vmem:[#allocation10 + $0x848] sm:$0xff]
    %v371 = vld [vmem:[#allocation10 + $0x850] sm:$0xff]
    %v372 = vld [vmem:[#allocation10 + $0x858] sm:$0xff]
    %v373 = vld [vmem:[#allocation10 + $0x860] sm:$0xff]
    %v374 = vld [vmem:[#allocation10 + $0x868] sm:$0xff]
    %v375 = vld [vmem:[#allocation10 + $0x870] sm:$0xff]
    %v376 = vld [vmem:[#allocation10 + $0x878] sm:$0xff]
    %v377 = vld [vmem:[#allocation10 + $0x880] sm:$0xff]
    %v378 = vld [vmem:[#allocation10 + $0x888] sm:$0xff]
    %v379 = vld [vmem:[#allocation10 + $0x890] sm:$0xff]
    %v380 = vld [vmem:[#allocation10 + $0x898] sm:$0xff]
    %v381 = vld [vmem:[#allocation10 + $0x8a0] sm:$0xff]
    %v382 = vld [vmem:[#allocation10 + $0x8a8] sm:$0xff]
    %v383 = vld [vmem:[#allocation10 + $0x8b0] sm:$0xff]
    %v384 = vld [vmem:[#allocation10 + $0x8b8] sm:$0xff]
    %v385 = vld [vmem:[#allocation10 + $0x8c0] sm:$0xff]
    %v386 = vld [vmem:[#allocation10 + $0x8c8] sm:$0xff]
    %v387 = vld [vmem:[#allocation10 + $0x8d0] sm:$0xff]
    %v388 = vld [vmem:[#allocation10 + $0x8d8] sm:$0xff]
    %v389 = vld [vmem:[#allocation10 + $0x8e0] sm:$0xff]
    %v390 = vld [vmem:[#allocation10 + $0x8e8] sm:$0xff]
    %v391 = vld [vmem:[#allocation10 + $0x8f0] sm:$0xff]
    %v392 = vld [vmem:[#allocation10 + $0x8f8] sm:$0xff]
    %v393 = vld [vmem:[#allocation10 + $0x900] sm:$0xff]
    %v394 = vld [vmem:[#allocation10 + $0x908] sm:$0xff]
    %v395 = vld [vmem:[#allocation10 + $0x910] sm:$0xff]
    %v396 = vld [vmem:[#allocation10 + $0x918] sm:$0xff]
    %v397 = vld [vmem:[#allocation10 + $0x920] sm:$0xff]
    %v398 = vld [vmem:[#allocation10 + $0x928] sm:$0xff]
    %v399 = vld [vmem:[#allocation10 + $0x930] sm:$0xff]
    %v400 = vld [vmem:[#allocation10 + $0x938] sm:$0xff]
    %v401 = vld [vmem:[#allocation10 + $0x940] sm:$0xff]
    %v402 = vld [vmem:[#allocation10 + $0x948] sm:$0xff]
    %v403 = vld [vmem:[#allocation10 + $0x950] sm:$0xff]
    %v404 = vld [vmem:[#allocation10 + $0x958] sm:$0xff]
    %v405 = vld [vmem:[#allocation10 + $0x960] sm:$0xff]
    %v406 = vld [vmem:[#allocation10 + $0x968] sm:$0xff]
    %v407 = vld [vmem:[#allocation10 + $0x970] sm:$0xff]
    %v408 = vld [vmem:[#allocation10 + $0x978] sm:$0xff]
    %v409 = vld [vmem:[#allocation10 + $0x980] sm:$0xff]
    %v410 = vld [vmem:[#allocation10 + $0x988] sm:$0xff]
    %v411 = vld [vmem:[#allocation10 + $0x990] sm:$0xff]
    %v412 = vld [vmem:[#allocation10 + $0x998] sm:$0xff]
    %v413 = vld [vmem:[#allocation10 + $0x9a0] sm:$0xff]
    %v414 = vld [vmem:[#allocation10 + $0x9a8] sm:$0xff]
    %v415 = vld [vmem:[#allocation10 + $0x9b0] sm:$0xff]
    %v416 = vld [vmem:[#allocation10 + $0x9b8] sm:$0xff]
    %v417 = vld [vmem:[#allocation10 + $0x9c0] sm:$0xff]
    %v418 = vld [vmem:[#allocation10 + $0x9c8] sm:$0xff]
    %v419 = vld [vmem:[#allocation10 + $0x9d0] sm:$0xff]
    %v420 = vld [vmem:[#allocation10 + $0x9d8] sm:$0xff]
    %v421 = vld [vmem:[#allocation10 + $0x9e0] sm:$0xff]
    %v422 = vld [vmem:[#allocation10 + $0x9e8] sm:$0xff]
    %v423 = vld [vmem:[#allocation10 + $0x9f0] sm:$0xff]
    %v424 = vld [vmem:[#allocation10 + $0x9f8] sm:$0xff]
    %v425 = vld [vmem:[#allocation10 + $0xa00] sm:$0xff]
    %v426 = vld [vmem:[#allocation10 + $0xa08] sm:$0xff]
    %v427 = vld [vmem:[#allocation10 + $0xa10] sm:$0xff]
    %v428 = vld [vmem:[#allocation10 + $0xa18] sm:$0xff]
    %v429 = vld [vmem:[#allocation10 + $0xa20] sm:$0xff]
    %v430 = vld [vmem:[#allocation10 + $0xa28] sm:$0xff]
    %v431 = vld [vmem:[#allocation10 + $0xa30] sm:$0xff]
    %v432 = vld [vmem:[#allocation10 + $0xa38] sm:$0xff]
    %v433 = vld [vmem:[#allocation10 + $0xa40] sm:$0xff]
    %v434 = vld [vmem:[#allocation10 + $0xa48] sm:$0xff]
    %v435 = vld [vmem:[#allocation10 + $0xa50] sm:$0xff]
    %v436 = vld [vmem:[#allocation10 + $0xa58] sm:$0xff]
    %v437 = vld [vmem:[#allocation10 + $0xa60] sm:$0xff]
    %v438 = vld [vmem:[#allocation10 + $0xa68] sm:$0xff]
    %v439 = vld [vmem:[#allocation10 + $0xa70] sm:$0xff]
    %v440 = vld [vmem:[#allocation10 + $0xa78] sm:$0xff]
    %v441 = vld [vmem:[#allocation10 + $0xa80] sm:$0xff]
    %v442 = vld [vmem:[#allocation10 + $0xa88] sm:$0xff]
    %v443 = vld [vmem:[#allocation10 + $0xa90] sm:$0xff]
    %v444 = vld [vmem:[#allocation10 + $0xa98] sm:$0xff]
    %v445 = vld [vmem:[#allocation10 + $0xaa0] sm:$0xff]
    %v446 = vld [vmem:[#allocation10 + $0xaa8] sm:$0xff]
    %v447 = vld [vmem:[#allocation10 + $0xab0] sm:$0xff]
    %v448 = vld [vmem:[#allocation10 + $0xab8] sm:$0xff]
    %v449 = vld [vmem:[#allocation10 + $0xac0] sm:$0xff]
    %v450 = vld [vmem:[#allocation10 + $0xac8] sm:$0xff]
    %v451 = vld [vmem:[#allocation10 + $0xad0] sm:$0xff]
    %v452 = vld [vmem:[#allocation10 + $0xad8] sm:$0xff]
    %v453 = vld [vmem:[#allocation10 + $0xae0] sm:$0xff]
    %v454 = vld [vmem:[#allocation10 + $0xae8] sm:$0xff]
    %v455 = vld [vmem:[#allocation10 + $0xaf0] sm:$0xff]
    %v456 = vld [vmem:[#allocation10 + $0xaf8] sm:$0xff]
    %v457 = vld [vmem:[#allocation10 + $0xb00] sm:$0xff]
    %v458 = vld [vmem:[#allocation10 + $0xb08] sm:$0xff]
    %v459 = vld [vmem:[#allocation10 + $0xb10] sm:$0xff]
    %v460 = vld [vmem:[#allocation10 + $0xb18] sm:$0xff]
    %v461 = vld [vmem:[#allocation10 + $0xb20] sm:$0xff]
    %v462 = vld [vmem:[#allocation10 + $0xb28] sm:$0xff]
    %v463 = vld [vmem:[#allocation10 + $0xb30] sm:$0xff]
    %v464 = vld [vmem:[#allocation10 + $0xb38] sm:$0xff]
    %v465 = vld [vmem:[#allocation10 + $0xb40] sm:$0xff]
    %v466 = vld [vmem:[#allocation10 + $0xb48] sm:$0xff]
    %v467 = vld [vmem:[#allocation10 + $0xb50] sm:$0xff]
    %v468 = vld [vmem:[#allocation10 + $0xb58] sm:$0xff]
    %v469 = vld [vmem:[#allocation10 + $0xb60] sm:$0xff]
    %v470 = vld [vmem:[#allocation10 + $0xb68] sm:$0xff]
    %v471 = vld [vmem:[#allocation10 + $0xb70] sm:$0xff]
    %v472 = vld [vmem:[#allocation10 + $0xb78] sm:$0xff]
    %v473 = vld [vmem:[#allocation10 + $0xb80] sm:$0xff]
    %v474 = vld [vmem:[#allocation10 + $0xb88] sm:$0xff]
    %v475 = vld [vmem:[#allocation10 + $0xb90] sm:$0xff]
    %v476 = vld [vmem:[#allocation10 + $0xb98] sm:$0xff]
    %v477 = vld [vmem:[#allocation10 + $0xba0] sm:$0xff]
    %v478 = vld [vmem:[#allocation10 + $0xba8] sm:$0xff]
    %v479 = vld [vmem:[#allocation10 + $0xbb0] sm:$0xff]
    %v480 = vld [vmem:[#allocation10 + $0xbb8] sm:$0xff]
    %v481 = vld [vmem:[#allocation10 + $0xbc0] sm:$0xff]
    %v482 = vld [vmem:[#allocation10 + $0xbc8] sm:$0xff]
    %v483 = vld [vmem:[#allocation10 + $0xbd0] sm:$0xff]
    %v484 = vld [vmem:[#allocation10 + $0xbd8] sm:$0xff]
    %v485 = vld [vmem:[#allocation10 + $0xbe0] sm:$0xff]
    %v486 = vld [vmem:[#allocation10 + $0xbe8] sm:$0xff]
    %v487 = vld [vmem:[#allocation10 + $0xbf0] sm:$0xff]
    %v488 = vld [vmem:[#allocation10 + $0xbf8] sm:$0xff]
    %v489 = vld [vmem:[#allocation10 + $0xc00] sm:$0xff]
    %v490 = vld [vmem:[#allocation10 + $0xc08] sm:$0xff]
    %v491 = vld [vmem:[#allocation10 + $0xc10] sm:$0xff]
    %v492 = vld [vmem:[#allocation10 + $0xc18] sm:$0xff]
    %v493 = vld [vmem:[#allocation10 + $0xc20] sm:$0xff]
    %v494 = vld [vmem:[#allocation10 + $0xc28] sm:$0xff]
    %v495 = vld [vmem:[#allocation10 + $0xc30] sm:$0xff]
    %v496 = vld [vmem:[#allocation10 + $0xc38] sm:$0xff]
    %v497 = vld [vmem:[#allocation10 + $0xc40] sm:$0xff]
    %v498 = vld [vmem:[#allocation10 + $0xc48] sm:$0xff]
    %v499 = vld [vmem:[#allocation10 + $0xc50] sm:$0xff]
    %v500 = vld [vmem:[#allocation10 + $0xc58] sm:$0xff]
    %v501 = vld [vmem:[#allocation10 + $0xc60] sm:$0xff]
    %v502 = vld [vmem:[#allocation10 + $0xc68] sm:$0xff]
    %v503 = vld [vmem:[#allocation10 + $0xc70] sm:$0xff]
    %v504 = vld [vmem:[#allocation10 + $0xc78] sm:$0xff]
    %v505 = vld [vmem:[#allocation10 + $0xc80] sm:$0xff]
    %v506 = vld [vmem:[#allocation10 + $0xc88] sm:$0xff]
    %v507 = vld [vmem:[#allocation10 + $0xc90] sm:$0xff]
    %v508 = vld [vmem:[#allocation10 + $0xc98] sm:$0xff]
    %v509 = vld [vmem:[#allocation10 + $0xca0] sm:$0xff]
    %v510 = vld [vmem:[#allocation10 + $0xca8] sm:$0xff]
    %v511 = vld [vmem:[#allocation10 + $0xcb0] sm:$0xff]
    %v512 = vld [vmem:[#allocation10 + $0xcb8] sm:$0xff]
    %v513 = vld [vmem:[#allocation10 + $0xcc0] sm:$0xff]
    %v514 = vld [vmem:[#allocation10 + $0xcc8] sm:$0xff]
    %v515 = vld [vmem:[#allocation10 + $0xcd0] sm:$0xff]
    %v516 = vld [vmem:[#allocation10 + $0xcd8] sm:$0xff]
    %v517 = vld [vmem:[#allocation10 + $0xce0] sm:$0xff]
    %v518 = vld [vmem:[#allocation10 + $0xce8] sm:$0xff]
    %v519 = vld [vmem:[#allocation10 + $0xcf0] sm:$0xff]
    %v520 = vld [vmem:[#allocation10 + $0xcf8] sm:$0xff]
    %v521 = vld [vmem:[#allocation10 + $0xd00] sm:$0xff]
    %v522 = vld [vmem:[#allocation10 + $0xd08] sm:$0xff]
    %v523 = vld [vmem:[#allocation10 + $0xd10] sm:$0xff]
    %v524 = vld [vmem:[#allocation10 + $0xd18] sm:$0xff]
    %v525 = vld [vmem:[#allocation10 + $0xd20] sm:$0xff]
    %v526 = vld [vmem:[#allocation10 + $0xd28] sm:$0xff]
    %v527 = vld [vmem:[#allocation10 + $0xd30] sm:$0xff]
    %v528 = vld [vmem:[#allocation10 + $0xd38] sm:$0xff]
    %v529 = vld [vmem:[#allocation10 + $0xd40] sm:$0xff]
    %v530 = vld [vmem:[#allocation10 + $0xd48] sm:$0xff]
    %v531 = vld [vmem:[#allocation10 + $0xd50] sm:$0xff]
    %v532 = vld [vmem:[#allocation10 + $0xd58] sm:$0xff]
    %v533 = vld [vmem:[#allocation10 + $0xd60] sm:$0xff]
    %v534 = vld [vmem:[#allocation10 + $0xd68] sm:$0xff]
    %v535 = vld [vmem:[#allocation10 + $0xd70] sm:$0xff]
    %v536 = vld [vmem:[#allocation10 + $0xd78] sm:$0xff]
    %v537 = vld [vmem:[#allocation10 + $0xd80] sm:$0xff]
    %v538 = vld [vmem:[#allocation10 + $0xd88] sm:$0xff]
    %v539 = vld [vmem:[#allocation10 + $0xd90] sm:$0xff]
    %v540 = vld [vmem:[#allocation10 + $0xd98] sm:$0xff]
    %v541 = vld [vmem:[#allocation10 + $0xda0] sm:$0xff]
    %v542 = vld [vmem:[#allocation10 + $0xda8] sm:$0xff]
    %v543 = vld [vmem:[#allocation10 + $0xdb0] sm:$0xff]
    %v544 = vld [vmem:[#allocation10 + $0xdb8] sm:$0xff]
    %v545 = vld [vmem:[#allocation10 + $0xdc0] sm:$0xff]
    %v546 = vld [vmem:[#allocation10 + $0xdc8] sm:$0xff]
    %v547 = vld [vmem:[#allocation10 + $0xdd0] sm:$0xff]
    %v548 = vld [vmem:[#allocation10 + $0xdd8] sm:$0xff]
    %v549 = vld [vmem:[#allocation10 + $0xde0] sm:$0xff]
    %v550 = vld [vmem:[#allocation10 + $0xde8] sm:$0xff]
    %v551 = vld [vmem:[#allocation10 + $0xdf0] sm:$0xff]
    %v552 = vld [vmem:[#allocation10 + $0xdf8] sm:$0xff]
    %v553 = vld [vmem:[#allocation10 + $0xe00] sm:$0xff]
    %v554 = vld [vmem:[#allocation10 + $0xe08] sm:$0xff]
    %v555 = vld [vmem:[#allocation10 + $0xe10] sm:$0xff]
    %v556 = vld [vmem:[#allocation10 + $0xe18] sm:$0xff]
    %v557 = vld [vmem:[#allocation10 + $0xe20] sm:$0xff]
    %v558 = vld [vmem:[#allocation10 + $0xe28] sm:$0xff]
    %v559 = vld [vmem:[#allocation10 + $0xe30] sm:$0xff]
    %v560 = vld [vmem:[#allocation10 + $0xe38] sm:$0xff]
    %v561 = vld [vmem:[#allocation10 + $0xe40] sm:$0xff]
    %v562 = vld [vmem:[#allocation10 + $0xe48] sm:$0xff]
    %v563 = vld [vmem:[#allocation10 + $0xe50] sm:$0xff]
    %v564 = vld [vmem:[#allocation10 + $0xe58] sm:$0xff]
    %v565 = vld [vmem:[#allocation10 + $0xe60] sm:$0xff]
    %v566 = vld [vmem:[#allocation10 + $0xe68] sm:$0xff]
    %v567 = vld [vmem:[#allocation10 + $0xe70] sm:$0xff]
    %v568 = vld [vmem:[#allocation10 + $0xe78] sm:$0xff]
    %v569 = vld [vmem:[#allocation10 + $0xe80] sm:$0xff]
    %v570 = vld [vmem:[#allocation10 + $0xe88] sm:$0xff]
    %v571 = vld [vmem:[#allocation10 + $0xe90] sm:$0xff]
    %v572 = vld [vmem:[#allocation10 + $0xe98] sm:$0xff]
    %v573 = vld [vmem:[#allocation10 + $0xea0] sm:$0xff]
    %v574 = vld [vmem:[#allocation10 + $0xea8] sm:$0xff]
    %v575 = vld [vmem:[#allocation10 + $0xeb0] sm:$0xff]
    %v576 = vld [vmem:[#allocation10 + $0xeb8] sm:$0xff]
    %v577 = vld [vmem:[#allocation10 + $0xec0] sm:$0xff]
    %v578 = vld [vmem:[#allocation10 + $0xec8] sm:$0xff]
    %v579 = vld [vmem:[#allocation10 + $0xed0] sm:$0xff]
    %v580 = vld [vmem:[#allocation10 + $0xed8] sm:$0xff]
    %v581 = vld [vmem:[#allocation10 + $0xee0] sm:$0xff]
    %v582 = vld [vmem:[#allocation10 + $0xee8] sm:$0xff]
    %v583 = vld [vmem:[#allocation10 + $0xef0] sm:$0xff]
    %v584 = vld [vmem:[#allocation10 + $0xef8] sm:$0xff]
    %v585 = vld [vmem:[#allocation10 + $0xf00] sm:$0xff]
    %v586 = vld [vmem:[#allocation10 + $0xf08] sm:$0xff]
    %v587 = vld [vmem:[#allocation10 + $0xf10] sm:$0xff]
    %v588 = vld [vmem:[#allocation10 + $0xf18] sm:$0xff]
    %v589 = vld [vmem:[#allocation10 + $0xf20] sm:$0xff]
    %v590 = vld [vmem:[#allocation10 + $0xf28] sm:$0xff]
    %v591 = vld [vmem:[#allocation10 + $0xf30] sm:$0xff]
    %v592 = vld [vmem:[#allocation10 + $0xf38] sm:$0xff]
    %v593 = vld [vmem:[#allocation10 + $0xf40] sm:$0xff]
    %v594 = vld [vmem:[#allocation10 + $0xf48] sm:$0xff]
    %v595 = vld [vmem:[#allocation10 + $0xf50] sm:$0xff]
    %v596 = vld [vmem:[#allocation10 + $0xf58] sm:$0xff]
    %v597 = vld [vmem:[#allocation10 + $0xf60] sm:$0xff]
    %v598 = vld [vmem:[#allocation10 + $0xf68] sm:$0xff]
    %v599 = vld [vmem:[#allocation10 + $0xf70] sm:$0xff]
    %v600 = vld [vmem:[#allocation10 + $0xf78] sm:$0xff]
    %v601 = vld [vmem:[#allocation10 + $0xf80] sm:$0xff]
    %v602 = vld [vmem:[#allocation10 + $0xf88] sm:$0xff]
    %v603 = vld [vmem:[#allocation10 + $0xf90] sm:$0xff]
    %v604 = vld [vmem:[#allocation10 + $0xf98] sm:$0xff]
    %v605 = vld [vmem:[#allocation10 + $0xfa0] sm:$0xff]
    %v606 = vld [vmem:[#allocation10 + $0xfa8] sm:$0xff]
    %v607 = vld [vmem:[#allocation10 + $0xfb0] sm:$0xff]
    %v608 = vld [vmem:[#allocation10 + $0xfb8] sm:$0xff]
    %v609 = vld [vmem:[#allocation10 + $0xfc0] sm:$0xff]
    %v610 = vld [vmem:[#allocation10 + $0xfc8] sm:$0xff]
    %v611 = vld [vmem:[#allocation10 + $0xfd0] sm:$0xff]
    %v612 = vld [vmem:[#allocation10 + $0xfd8] sm:$0xff]
    %v613 = vld [vmem:[#allocation10 + $0xfe0] sm:$0xff]
    %v614 = vld [vmem:[#allocation10 + $0xfe8] sm:$0xff]
    %v615 = vld [vmem:[#allocation10 + $0xff0] sm:$0xff]
    %v616 = vld [vmem:[#allocation10 + $0xff8] sm:$0xff]
    %v617 = vld [vmem:[#allocation5] sm:$0x3]
    %v618 = vld [vmem:[#allocation8] sm:$0xff]
    %v619 = vld [vmem:[#allocation8 + $0x8] sm:$0xff]
    %v620 = vld [vmem:[#allocation8 + $0x10] sm:$0xff]
    %v621 = vld [vmem:[#allocation8 + $0x18] sm:$0xff]
    %v622 = vld [vmem:[#allocation8 + $0x20] sm:$0xff]
    %v623 = vld [vmem:[#allocation8 + $0x28] sm:$0xff]
    %v624 = vld [vmem:[#allocation8 + $0x30] sm:$0xff]
    %v625 = vld [vmem:[#allocation8 + $0x38] sm:$0xff]
    %vm626 = vcmask 261120
    %v628 = vsel %vm626, %v617, 0
    %630 = vmatprep.subr.mxu0 %v619
    %631 = vmatpush1.msra.mxu0 %v618
    %632 = vmatprep.subr.mxu0 %v621
    %633 = vmatpush1.msra.mxu0 %v620
    %634 = vmatprep.subr.mxu0 %v623
    %635 = vmatpush1.msra.mxu0 %v622
    %636 = vmatprep.subr.mxu0 %v625
    %637 = vmatpush1.msra.mxu0 %v624
    %638 = vmatprep.subr.mxu0 0.0
    %639 = vmatpush1.msra.mxu0 0.0
    %640 = vmatprep.subr.mxu0 0.0
    %641 = vmatpush1.msra.mxu0 0.0
    %642 = vmatprep.subr.mxu0 0.0
    %643 = vmatpush1.msra.mxu0 0.0
    %644 = vmatprep.subr.mxu0 0.0
    %645 = vmatpush1.msra.mxu0 0.0
    %646 = vmatprep.subr.mxu0 0.0
    %647 = vmatpush1.msra.mxu0 0.0
    %648 = vmatprep.subr.mxu0 0.0
    %649 = vmatpush1.msra.mxu0 0.0
    %650 = vmatprep.subr.mxu0 0.0
    %651 = vmatpush1.msra.mxu0 0.0
    %652 = vmatprep.subr.mxu0 0.0
    %653 = vmatpush1.msra.mxu0 0.0
    %654 = vmatprep.subr.mxu0 0.0
    %655 = vmatpush1.msra.mxu0 0.0
    %656 = vmatprep.subr.mxu0 0.0
    %657 = vmatpush1.msra.mxu0 0.0
    %658 = vmatprep.subr.mxu0 0.0
    %659 = vmatpush1.msra.mxu0 0.0
    %660 = vmatprep.subr.mxu0 0.0
    %661 = vmatpush1.msra.mxu0 0.0
    %662 = vmatprep.subr.mxu0 0.0
    %663 = vmatpush1.msra.mxu0 0.0
    %664 = vmatprep.subr.mxu0 0.0
    %665 = vmatpush1.msra.mxu0 0.0
    %666 = vmatprep.subr.mxu0 0.0
    %667 = vmatpush1.msra.mxu0 0.0
    %668 = vmatprep.subr.mxu0 0.0
    %669 = vmatpush1.msra.mxu0 0.0
    %670 = vmatprep.subr.mxu0 0.0
    %671 = vmatpush1.msra.mxu0 0.0
    %672 = vmatprep.subr.mxu0 0.0
    %673 = vmatpush1.msra.mxu0 0.0
    %674 = vmatprep.subr.mxu0 0.0
    %675 = vmatpush1.msra.mxu0 0.0
    %676 = vmatprep.subr.mxu0 0.0
    %677 = vmatpush1.msra.mxu0 0.0
    %678 = vmatprep.subr.mxu0 0.0
    %679 = vmatpush1.msra.mxu0 0.0
    %680 = vmatprep.subr.mxu0 0.0
    %681 = vmatpush1.msra.mxu0 0.0
    %682 = vmatprep.subr.mxu0 0.0
    %683 = vmatpush1.msra.mxu0 0.0
    %684 = vmatprep.subr.mxu0 0.0
    %685 = vmatpush1.msra.mxu0 0.0
    %686 = vmatprep.subr.mxu0 0.0
    %687 = vmatpush1.msra.mxu0 0.0
    %688 = vmatprep.subr.mxu0 0.0
    %689 = vmatpush1.msra.mxu0 0.0
    %690 = vmatprep.subr.mxu0 0.0
    %691 = vmatpush1.msra.mxu0 0.0
    %692 = vmatprep.subr.mxu0 0.0
    %693 = vmatpush1.msra.mxu0 0.0
    %694 = vmatprep.mubr.f32.mxu0 0.0
    %695 = vmatmul.mubr.f32.gmra.mrb[0].mxu0 %v628
    %v696 = vpop.f32.mrb[0].mxu0
    %v697 = vadd.f32 0.0, %v696
    %v698 = vpop.f32.mrb[0].mxu0
    %v699 = vadd.f32 0.0, %v698
    %700 = vdwg.mxu0
    %v703 = vunpack.c.l.s4 1983009808
    %v704 = vunpack.c.0.s8 %v703
    %v705 = vlaneseq
    %v706 = vshrl.u32 %v705, 7
    %v707 = vsub.s32 %v704, %v706
    %v708 = vrot.slane %v104, %v707
    %v709 = vcombine.high %v708, %v708
    %712 = vmatprep.subr.mxu0 %v106
    %713 = vmatpush1.msra.mxu0 %v105
    %714 = vmatprep.subr.mxu0 %v122
    %715 = vmatpush1.msra.mxu0 %v121
    %716 = vmatprep.subr.mxu0 %v138
    %717 = vmatpush1.msra.mxu0 %v137
    %718 = vmatprep.subr.mxu0 %v154
    %719 = vmatpush1.msra.mxu0 %v153
    %720 = vmatprep.subr.mxu0 %v170
    %721 = vmatpush1.msra.mxu0 %v169
    %722 = vmatprep.subr.mxu0 %v186
    %723 = vmatpush1.msra.mxu0 %v185
    %724 = vmatprep.subr.mxu0 %v202
    %725 = vmatpush1.msra.mxu0 %v201
    %726 = vmatprep.subr.mxu0 %v218
    %727 = vmatpush1.msra.mxu0 %v217
    %728 = vmatprep.subr.mxu0 %v234
    %729 = vmatpush1.msra.mxu0 %v233
    %730 = vmatprep.subr.mxu0 %v250
    %731 = vmatpush1.msra.mxu0 %v249
    %732 = vmatprep.subr.mxu0 %v266
    %733 = vmatpush1.msra.mxu0 %v265
    %734 = vmatprep.subr.mxu0 %v282
    %735 = vmatpush1.msra.mxu0 %v281
    %736 = vmatprep.subr.mxu0 %v298
    %737 = vmatpush1.msra.mxu0 %v297
    %738 = vmatprep.subr.mxu0 %v314
    %739 = vmatpush1.msra.mxu0 %v313
    %740 = vmatprep.subr.mxu0 %v330
    %741 = vmatpush1.msra.mxu0 %v329
    %742 = vmatprep.subr.mxu0 %v346
    %743 = vmatpush1.msra.mxu0 %v345
    %744 = vmatprep.subr.mxu0 %v362
    %745 = vmatpush1.msra.mxu0 %v361
    %746 = vmatprep.subr.mxu0 %v378
    %747 = vmatpush1.msra.mxu0 %v377
    %748 = vmatprep.subr.mxu0 %v394
    %749 = vmatpush1.msra.mxu0 %v393
    %750 = vmatprep.subr.mxu0 %v410
    %751 = vmatpush1.msra.mxu0 %v409
    %752 = vmatprep.subr.mxu0 %v426
    %753 = vmatpush1.msra.mxu0 %v425
    %754 = vmatprep.subr.mxu0 %v442
    %755 = vmatpush1.msra.mxu0 %v441
    %756 = vmatprep.subr.mxu0 %v458
    %757 = vmatpush1.msra.mxu0 %v457
    %758 = vmatprep.subr.mxu0 %v474
    %759 = vmatpush1.msra.mxu0 %v473
    %760 = vmatprep.subr.mxu0 %v490
    %761 = vmatpush1.msra.mxu0 %v489
    %762 = vmatprep.subr.mxu0 %v506
    %763 = vmatpush1.msra.mxu0 %v505
    %764 = vmatprep.subr.mxu0 %v522
    %765 = vmatpush1.msra.mxu0 %v521
    %766 = vmatprep.subr.mxu0 %v538
    %767 = vmatpush1.msra.mxu0 %v537
    %768 = vmatprep.subr.mxu0 %v554
    %769 = vmatpush1.msra.mxu0 %v553
    %770 = vmatprep.subr.mxu0 %v570
    %771 = vmatpush1.msra.mxu0 %v569
    %772 = vmatprep.subr.mxu0 %v586
    %773 = vmatpush1.msra.mxu0 %v585
    %774 = vmatprep.subr.mxu0 %v602
    %775 = vmatpush1.msra.mxu0 %v601
    %776 = vmatprep.mubr.f32.mxu0 %v709
    %777 = vmatmul.mubr.f32.gmra.mrb[0].mxu0 %v708
    %v778 = vpop.f32.mrb[0].mxu0
    %v779 = vadd.f32 %v697, %v778
    %v780 = vpop.f32.mrb[0].mxu0
    %v781 = vadd.f32 %v699, %v780
    %782 = vdwg.mxu0
    %783 = vmatprep.subr.mxu0 %v108
    %784 = vmatpush1.msra.mxu0 %v107
    %785 = vmatprep.subr.mxu0 %v124
    %786 = vmatpush1.msra.mxu0 %v123
    %787 = vmatprep.subr.mxu0 %v140
    %788 = vmatpush1.msra.mxu0 %v139
    %789 = vmatprep.subr.mxu0 %v156
    %790 = vmatpush1.msra.mxu0 %v155
    %791 = vmatprep.subr.mxu0 %v172
    %792 = vmatpush1.msra.mxu0 %v171
    %793 = vmatprep.subr.mxu0 %v188
    %794 = vmatpush1.msra.mxu0 %v187
    %795 = vmatprep.subr.mxu0 %v204
    %796 = vmatpush1.msra.mxu0 %v203
    %797 = vmatprep.subr.mxu0 %v220
    %798 = vmatpush1.msra.mxu0 %v219
    %799 = vmatprep.subr.mxu0 %v236
    %800 = vmatpush1.msra.mxu0 %v235
    %801 = vmatprep.subr.mxu0 %v252
    %802 = vmatpush1.msra.mxu0 %v251
    %803 = vmatprep.subr.mxu0 %v268
    %804 = vmatpush1.msra.mxu0 %v267
    %805 = vmatprep.subr.mxu0 %v284
    %806 = vmatpush1.msra.mxu0 %v283
    %807 = vmatprep.subr.mxu0 %v300
    %808 = vmatpush1.msra.mxu0 %v299
    %809 = vmatprep.subr.mxu0 %v316
    %810 = vmatpush1.msra.mxu0 %v315
    %811 = vmatprep.subr.mxu0 %v332
    %812 = vmatpush1.msra.mxu0 %v331
    %813 = vmatprep.subr.mxu0 %v348
    %814 = vmatpush1.msra.mxu0 %v347
    %815 = vmatprep.subr.mxu0 %v364
    %816 = vmatpush1.msra.mxu0 %v363
    %817 = vmatprep.subr.mxu0 %v380
    %818 = vmatpush1.msra.mxu0 %v379
    %819 = vmatprep.subr.mxu0 %v396
    %820 = vmatpush1.msra.mxu0 %v395
    %821 = vmatprep.subr.mxu0 %v412
    %822 = vmatpush1.msra.mxu0 %v411
    %823 = vmatprep.subr.mxu0 %v428
    %824 = vmatpush1.msra.mxu0 %v427
    %825 = vmatprep.subr.mxu0 %v444
    %826 = vmatpush1.msra.mxu0 %v443
    %827 = vmatprep.subr.mxu0 %v460
    %828 = vmatpush1.msra.mxu0 %v459
    %829 = vmatprep.subr.mxu0 %v476
    %830 = vmatpush1.msra.mxu0 %v475
    %831 = vmatprep.subr.mxu0 %v492
    %832 = vmatpush1.msra.mxu0 %v491
    %833 = vmatprep.subr.mxu0 %v508
    %834 = vmatpush1.msra.mxu0 %v507
    %835 = vmatprep.subr.mxu0 %v524
    %836 = vmatpush1.msra.mxu0 %v523
    %837 = vmatprep.subr.mxu0 %v540
    %838 = vmatpush1.msra.mxu0 %v539
    %839 = vmatprep.subr.mxu0 %v556
    %840 = vmatpush1.msra.mxu0 %v555
    %841 = vmatprep.subr.mxu0 %v572
    %842 = vmatpush1.msra.mxu0 %v571
    %843 = vmatprep.subr.mxu0 %v588
    %844 = vmatpush1.msra.mxu0 %v587
    %845 = vmatprep.subr.mxu0 %v604
    %846 = vmatpush1.msra.mxu0 %v603
    %847 = vmatprep.mubr.f32.mxu0 %v709
    %848 = vmatmul.mubr.f32.gmra.mrb[0].mxu0 %v708
    %v849 = vpop.f32.mrb[0].mxu0
    %v850 = vadd.f32 %v697, %v849
    %v851 = vpop.f32.mrb[0].mxu0
    %v852 = vadd.f32 %v699, %v851
    %853 = vdwg.mxu0
    %854 = vmatprep.subr.mxu0 %v110
    %855 = vmatpush1.msra.mxu0 %v109
    %856 = vmatprep.subr.mxu0 %v126
    %857 = vmatpush1.msra.mxu0 %v125
    %858 = vmatprep.subr.mxu0 %v142
    %859 = vmatpush1.msra.mxu0 %v141
    %860 = vmatprep.subr.mxu0 %v158
    %861 = vmatpush1.msra.mxu0 %v157
    %862 = vmatprep.subr.mxu0 %v174
    %863 = vmatpush1.msra.mxu0 %v173
    %864 = vmatprep.subr.mxu0 %v190
    %865 = vmatpush1.msra.mxu0 %v189
    %866 = vmatprep.subr.mxu0 %v206
    %867 = vmatpush1.msra.mxu0 %v205
    %868 = vmatprep.subr.mxu0 %v222
    %869 = vmatpush1.msra.mxu0 %v221
    %870 = vmatprep.subr.mxu0 %v238
    %871 = vmatpush1.msra.mxu0 %v237
    %872 = vmatprep.subr.mxu0 %v254
    %873 = vmatpush1.msra.mxu0 %v253
    %874 = vmatprep.subr.mxu0 %v270
    %875 = vmatpush1.msra.mxu0 %v269
    %876 = vmatprep.subr.mxu0 %v286
    %877 = vmatpush1.msra.mxu0 %v285
    %878 = vmatprep.subr.mxu0 %v302
    %879 = vmatpush1.msra.mxu0 %v301
    %880 = vmatprep.subr.mxu0 %v318
    %881 = vmatpush1.msra.mxu0 %v317
    %882 = vmatprep.subr.mxu0 %v334
    %883 = vmatpush1.msra.mxu0 %v333
    %884 = vmatprep.subr.mxu0 %v350
    %885 = vmatpush1.msra.mxu0 %v349
    %886 = vmatprep.subr.mxu0 %v366
    %887 = vmatpush1.msra.mxu0 %v365
    %888 = vmatprep.subr.mxu0 %v382
    %889 = vmatpush1.msra.mxu0 %v381
    %890 = vmatprep.subr.mxu0 %v398
    %891 = vmatpush1.msra.mxu0 %v397
    %892 = vmatprep.subr.mxu0 %v414
    %893 = vmatpush1.msra.mxu0 %v413
    %894 = vmatprep.subr.mxu0 %v430
    %895 = vmatpush1.msra.mxu0 %v429
    %896 = vmatprep.subr.mxu0 %v446
    %897 = vmatpush1.msra.mxu0 %v445
    %898 = vmatprep.subr.mxu0 %v462
    %899 = vmatpush1.msra.mxu0 %v461
    %900 = vmatprep.subr.mxu0 %v478
    %901 = vmatpush1.msra.mxu0 %v477
    %902 = vmatprep.subr.mxu0 %v494
    %903 = vmatpush1.msra.mxu0 %v493
    %904 = vmatprep.subr.mxu0 %v510
    %905 = vmatpush1.msra.mxu0 %v509
    %906 = vmatprep.subr.mxu0 %v526
    %907 = vmatpush1.msra.mxu0 %v525
    %908 = vmatprep.subr.mxu0 %v542
    %909 = vmatpush1.msra.mxu0 %v541
    %910 = vmatprep.subr.mxu0 %v558
    %911 = vmatpush1.msra.mxu0 %v557
    %912 = vmatprep.subr.mxu0 %v574
    %913 = vmatpush1.msra.mxu0 %v573
    %914 = vmatprep.subr.mxu0 %v590
    %915 = vmatpush1.msra.mxu0 %v589
    %916 = vmatprep.subr.mxu0 %v606
    %917 = vmatpush1.msra.mxu0 %v605
    %918 = vmatprep.mubr.f32.mxu0 %v709
    %919 = vmatmul.mubr.f32.gmra.mrb[0].mxu0 %v708
    %v920 = vpop.f32.mrb[0].mxu0
    %v921 = vadd.f32 %v697, %v920
    %v922 = vpop.f32.mrb[0].mxu0
    %v923 = vadd.f32 %v699, %v922
    %924 = vdwg.mxu0
    %925 = vmatprep.subr.mxu0 %v112
    %926 = vmatpush1.msra.mxu0 %v111
    %927 = vmatprep.subr.mxu0 %v128
    %928 = vmatpush1.msra.mxu0 %v127
    %929 = vmatprep.subr.mxu0 %v144
    %930 = vmatpush1.msra.mxu0 %v143
    %931 = vmatprep.subr.mxu0 %v160
    %932 = vmatpush1.msra.mxu0 %v159
    %933 = vmatprep.subr.mxu0 %v176
    %934 = vmatpush1.msra.mxu0 %v175
    %935 = vmatprep.subr.mxu0 %v192
    %936 = vmatpush1.msra.mxu0 %v191
    %937 = vmatprep.subr.mxu0 %v208
    %938 = vmatpush1.msra.mxu0 %v207
    %939 = vmatprep.subr.mxu0 %v224
    %940 = vmatpush1.msra.mxu0 %v223
    %941 = vmatprep.subr.mxu0 %v240
    %942 = vmatpush1.msra.mxu0 %v239
    %943 = vmatprep.subr.mxu0 %v256
    %944 = vmatpush1.msra.mxu0 %v255
    %945 = vmatprep.subr.mxu0 %v272
    %946 = vmatpush1.msra.mxu0 %v271
    %947 = vmatprep.subr.mxu0 %v288
    %948 = vmatpush1.msra.mxu0 %v287
    %949 = vmatprep.subr.mxu0 %v304
    %950 = vmatpush1.msra.mxu0 %v303
    %951 = vmatprep.subr.mxu0 %v320
    %952 = vmatpush1.msra.mxu0 %v319
    %953 = vmatprep.subr.mxu0 %v336
    %954 = vmatpush1.msra.mxu0 %v335
    %955 = vmatprep.subr.mxu0 %v352
    %956 = vmatpush1.msra.mxu0 %v351
    %957 = vmatprep.subr.mxu0 %v368
    %958 = vmatpush1.msra.mxu0 %v367
    %959 = vmatprep.subr.mxu0 %v384
    %960 = vmatpush1.msra.mxu0 %v383
    %961 = vmatprep.subr.mxu0 %v400
    %962 = vmatpush1.msra.mxu0 %v399
    %963 = vmatprep.subr.mxu0 %v416
    %964 = vmatpush1.msra.mxu0 %v415
    %965 = vmatprep.subr.mxu0 %v432
    %966 = vmatpush1.msra.mxu0 %v431
    %967 = vmatprep.subr.mxu0 %v448
    %968 = vmatpush1.msra.mxu0 %v447
    %969 = vmatprep.subr.mxu0 %v464
    %970 = vmatpush1.msra.mxu0 %v463
    %971 = vmatprep.subr.mxu0 %v480
    %972 = vmatpush1.msra.mxu0 %v479
    %973 = vmatprep.subr.mxu0 %v496
    %974 = vmatpush1.msra.mxu0 %v495
    %975 = vmatprep.subr.mxu0 %v512
    %976 = vmatpush1.msra.mxu0 %v511
    %977 = vmatprep.subr.mxu0 %v528
    %978 = vmatpush1.msra.mxu0 %v527
    %979 = vmatprep.subr.mxu0 %v544
    %980 = vmatpush1.msra.mxu0 %v543
    %981 = vmatprep.subr.mxu0 %v560
    %982 = vmatpush1.msra.mxu0 %v559
    %983 = vmatprep.subr.mxu0 %v576
    %984 = vmatpush1.msra.mxu0 %v575
    %985 = vmatprep.subr.mxu0 %v592
    %986 = vmatpush1.msra.mxu0 %v591
    %987 = vmatprep.subr.mxu0 %v608
    %988 = vmatpush1.msra.mxu0 %v607
    %989 = vmatprep.mubr.f32.mxu0 %v709
    %990 = vmatmul.mubr.f32.gmra.mrb[0].mxu0 %v708
    %v991 = vpop.f32.mrb[0].mxu0
    %v992 = vadd.f32 %v697, %v991
    %v993 = vpop.f32.mrb[0].mxu0
    %v994 = vadd.f32 %v699, %v993
    %995 = vdwg.mxu0
    %996 = vmatprep.subr.mxu0 %v114
    %997 = vmatpush1.msra.mxu0 %v113
    %998 = vmatprep.subr.mxu0 %v130
    %999 = vmatpush1.msra.mxu0 %v129
    %1000 = vmatprep.subr.mxu0 %v146
    %1001 = vmatpush1.msra.mxu0 %v145
    %1002 = vmatprep.subr.mxu0 %v162
    %1003 = vmatpush1.msra.mxu0 %v161
    %1004 = vmatprep.subr.mxu0 %v178
    %1005 = vmatpush1.msra.mxu0 %v177
    %1006 = vmatprep.subr.mxu0 %v194
    %1007 = vmatpush1.msra.mxu0 %v193
    %1008 = vmatprep.subr.mxu0 %v210
    %1009 = vmatpush1.msra.mxu0 %v209
    %1010 = vmatprep.subr.mxu0 %v226
    %1011 = vmatpush1.msra.mxu0 %v225
    %1012 = vmatprep.subr.mxu0 %v242
    %1013 = vmatpush1.msra.mxu0 %v241
    %1014 = vmatprep.subr.mxu0 %v258
    %1015 = vmatpush1.msra.mxu0 %v257
    %1016 = vmatprep.subr.mxu0 %v274
    %1017 = vmatpush1.msra.mxu0 %v273
    %1018 = vmatprep.subr.mxu0 %v290
    %1019 = vmatpush1.msra.mxu0 %v289
    %1020 = vmatprep.subr.mxu0 %v306
    %1021 = vmatpush1.msra.mxu0 %v305
    %1022 = vmatprep.subr.mxu0 %v322
    %1023 = vmatpush1.msra.mxu0 %v321
    %1024 = vmatprep.subr.mxu0 %v338
    %1025 = vmatpush1.msra.mxu0 %v337
    %1026 = vmatprep.subr.mxu0 %v354
    %1027 = vmatpush1.msra.mxu0 %v353
    %1028 = vmatprep.subr.mxu0 %v370
    %1029 = vmatpush1.msra.mxu0 %v369
    %1030 = vmatprep.subr.mxu0 %v386
    %1031 = vmatpush1.msra.mxu0 %v385
    %1032 = vmatprep.subr.mxu0 %v402
    %1033 = vmatpush1.msra.mxu0 %v401
    %1034 = vmatprep.subr.mxu0 %v418
    %1035 = vmatpush1.msra.mxu0 %v417
    %1036 = vmatprep.subr.mxu0 %v434
    %1037 = vmatpush1.msra.mxu0 %v433
    %1038 = vmatprep.subr.mxu0 %v450
    %1039 = vmatpush1.msra.mxu0 %v449
    %1040 = vmatprep.subr.mxu0 %v466
    %1041 = vmatpush1.msra.mxu0 %v465
    %1042 = vmatprep.subr.mxu0 %v482
    %1043 = vmatpush1.msra.mxu0 %v481
    %1044 = vmatprep.subr.mxu0 %v498
    %1045 = vmatpush1.msra.mxu0 %v497
    %1046 = vmatprep.subr.mxu0 %v514
    %1047 = vmatpush1.msra.mxu0 %v513
    %1048 = vmatprep.subr.mxu0 %v530
    %1049 = vmatpush1.msra.mxu0 %v529
    %1050 = vmatprep.subr.mxu0 %v546
    %1051 = vmatpush1.msra.mxu0 %v545
    %1052 = vmatprep.subr.mxu0 %v562
    %1053 = vmatpush1.msra.mxu0 %v561
    %1054 = vmatprep.subr.mxu0 %v578
    %1055 = vmatpush1.msra.mxu0 %v577
    %1056 = vmatprep.subr.mxu0 %v594
    %1057 = vmatpush1.msra.mxu0 %v593
    %1058 = vmatprep.subr.mxu0 %v610
    %1059 = vmatpush1.msra.mxu0 %v609
    %1060 = vmatprep.mubr.f32.mxu0 %v709
    %1061 = vmatmul.mubr.f32.gmra.mrb[0].mxu0 %v708
    %v1062 = vpop.f32.mrb[0].mxu0
    %v1063 = vadd.f32 %v697, %v1062
    %v1064 = vpop.f32.mrb[0].mxu0
    %v1065 = vadd.f32 %v699, %v1064
    %1066 = vdwg.mxu0
    %1067 = vmatprep.subr.mxu0 %v116
    %1068 = vmatpush1.msra.mxu0 %v115
    %1069 = vmatprep.subr.mxu0 %v132
    %1070 = vmatpush1.msra.mxu0 %v131
    %1071 = vmatprep.subr.mxu0 %v148
    %1072 = vmatpush1.msra.mxu0 %v147
    %1073 = vmatprep.subr.mxu0 %v164
    %1074 = vmatpush1.msra.mxu0 %v163
    %1075 = vmatprep.subr.mxu0 %v180
    %1076 = vmatpush1.msra.mxu0 %v179
    %1077 = vmatprep.subr.mxu0 %v196
    %1078 = vmatpush1.msra.mxu0 %v195
    %1079 = vmatprep.subr.mxu0 %v212
    %1080 = vmatpush1.msra.mxu0 %v211
    %1081 = vmatprep.subr.mxu0 %v228
    %1082 = vmatpush1.msra.mxu0 %v227
    %1083 = vmatprep.subr.mxu0 %v244
    %1084 = vmatpush1.msra.mxu0 %v243
    %1085 = vmatprep.subr.mxu0 %v260
    %1086 = vmatpush1.msra.mxu0 %v259
    %1087 = vmatprep.subr.mxu0 %v276
    %1088 = vmatpush1.msra.mxu0 %v275
    %1089 = vmatprep.subr.mxu0 %v292
    %1090 = vmatpush1.msra.mxu0 %v291
    %1091 = vmatprep.subr.mxu0 %v308
    %1092 = vmatpush1.msra.mxu0 %v307
    %1093 = vmatprep.subr.mxu0 %v324
    %1094 = vmatpush1.msra.mxu0 %v323
    %1095 = vmatprep.subr.mxu0 %v340
    %1096 = vmatpush1.msra.mxu0 %v339
    %1097 = vmatprep.subr.mxu0 %v356
    %1098 = vmatpush1.msra.mxu0 %v355
    %1099 = vmatprep.subr.mxu0 %v372
    %1100 = vmatpush1.msra.mxu0 %v371
    %1101 = vmatprep.subr.mxu0 %v388
    %1102 = vmatpush1.msra.mxu0 %v387
    %1103 = vmatprep.subr.mxu0 %v404
    %1104 = vmatpush1.msra.mxu0 %v403
    %1105 = vmatprep.subr.mxu0 %v420
    %1106 = vmatpush1.msra.mxu0 %v419
    %1107 = vmatprep.subr.mxu0 %v436
    %1108 = vmatpush1.msra.mxu0 %v435
    %1109 = vmatprep.subr.mxu0 %v452
    %1110 = vmatpush1.msra.mxu0 %v451
    %1111 = vmatprep.subr.mxu0 %v468
    %1112 = vmatpush1.msra.mxu0 %v467
    %1113 = vmatprep.subr.mxu0 %v484
    %1114 = vmatpush1.msra.mxu0 %v483
    %1115 = vmatprep.subr.mxu0 %v500
    %1116 = vmatpush1.msra.mxu0 %v499
    %1117 = vmatprep.subr.mxu0 %v516
    %1118 = vmatpush1.msra.mxu0 %v515
    %1119 = vmatprep.subr.mxu0 %v532
    %1120 = vmatpush1.msra.mxu0 %v531
    %1121 = vmatprep.subr.mxu0 %v548
    %1122 = vmatpush1.msra.mxu0 %v547
    %1123 = vmatprep.subr.mxu0 %v564
    %1124 = vmatpush1.msra.mxu0 %v563
    %1125 = vmatprep.subr.mxu0 %v580
    %1126 = vmatpush1.msra.mxu0 %v579
    %1127 = vmatprep.subr.mxu0 %v596
    %1128 = vmatpush1.msra.mxu0 %v595
    %1129 = vmatprep.subr.mxu0 %v612
    %1130 = vmatpush1.msra.mxu0 %v611
    %1131 = vmatprep.mubr.f32.mxu0 %v709
    %1132 = vmatmul.mubr.f32.gmra.mrb[0].mxu0 %v708
    %v1133 = vpop.f32.mrb[0].mxu0
    %v1134 = vadd.f32 %v697, %v1133
    %v1135 = vpop.f32.mrb[0].mxu0
    %v1136 = vadd.f32 %v699, %v1135
    %1137 = vdwg.mxu0
    %1138 = vmatprep.subr.mxu0 %v118
    %1139 = vmatpush1.msra.mxu0 %v117
    %1140 = vmatprep.subr.mxu0 %v134
    %1141 = vmatpush1.msra.mxu0 %v133
    %1142 = vmatprep.subr.mxu0 %v150
    %1143 = vmatpush1.msra.mxu0 %v149
    %1144 = vmatprep.subr.mxu0 %v166
    %1145 = vmatpush1.msra.mxu0 %v165
    %1146 = vmatprep.subr.mxu0 %v182
    %1147 = vmatpush1.msra.mxu0 %v181
    %1148 = vmatprep.subr.mxu0 %v198
    %1149 = vmatpush1.msra.mxu0 %v197
    %1150 = vmatprep.subr.mxu0 %v214
    %1151 = vmatpush1.msra.mxu0 %v213
    %1152 = vmatprep.subr.mxu0 %v230
    %1153 = vmatpush1.msra.mxu0 %v229
    %1154 = vmatprep.subr.mxu0 %v246
    %1155 = vmatpush1.msra.mxu0 %v245
    %1156 = vmatprep.subr.mxu0 %v262
    %1157 = vmatpush1.msra.mxu0 %v261
    %1158 = vmatprep.subr.mxu0 %v278
    %1159 = vmatpush1.msra.mxu0 %v277
    %1160 = vmatprep.subr.mxu0 %v294
    %1161 = vmatpush1.msra.mxu0 %v293
    %1162 = vmatprep.subr.mxu0 %v310
    %1163 = vmatpush1.msra.mxu0 %v309
    %1164 = vmatprep.subr.mxu0 %v326
    %1165 = vmatpush1.msra.mxu0 %v325
    %1166 = vmatprep.subr.mxu0 %v342
    %1167 = vmatpush1.msra.mxu0 %v341
    %1168 = vmatprep.subr.mxu0 %v358
    %1169 = vmatpush1.msra.mxu0 %v357
    %1170 = vmatprep.subr.mxu0 %v374
    %1171 = vmatpush1.msra.mxu0 %v373
    %1172 = vmatprep.subr.mxu0 %v390
    %1173 = vmatpush1.msra.mxu0 %v389
    %1174 = vmatprep.subr.mxu0 %v406
    %1175 = vmatpush1.msra.mxu0 %v405
    %1176 = vmatprep.subr.mxu0 %v422
    %1177 = vmatpush1.msra.mxu0 %v421
    %1178 = vmatprep.subr.mxu0 %v438
    %1179 = vmatpush1.msra.mxu0 %v437
    %1180 = vmatprep.subr.mxu0 %v454
    %1181 = vmatpush1.msra.mxu0 %v453
    %1182 = vmatprep.subr.mxu0 %v470
    %1183 = vmatpush1.msra.mxu0 %v469
    %1184 = vmatprep.subr.mxu0 %v486
    %1185 = vmatpush1.msra.mxu0 %v485
    %1186 = vmatprep.subr.mxu0 %v502
    %1187 = vmatpush1.msra.mxu0 %v501
    %1188 = vmatprep.subr.mxu0 %v518
    %1189 = vmatpush1.msra.mxu0 %v517
    %1190 = vmatprep.subr.mxu0 %v534
    %1191 = vmatpush1.msra.mxu0 %v533
    %1192 = vmatprep.subr.mxu0 %v550
    %1193 = vmatpush1.msra.mxu0 %v549
    %1194 = vmatprep.subr.mxu0 %v566
    %1195 = vmatpush1.msra.mxu0 %v565
    %1196 = vmatprep.subr.mxu0 %v582
    %1197 = vmatpush1.msra.mxu0 %v581
    %1198 = vmatprep.subr.mxu0 %v598
    %1199 = vmatpush1.msra.mxu0 %v597
    %1200 = vmatprep.subr.mxu0 %v614
    %1201 = vmatpush1.msra.mxu0 %v613
    %1202 = vmatprep.mubr.f32.mxu0 %v709
    %1203 = vmatmul.mubr.f32.gmra.mrb[0].mxu0 %v708
    %v1204 = vpop.f32.mrb[0].mxu0
    %v1205 = vadd.f32 %v697, %v1204
    %v1206 = vpop.f32.mrb[0].mxu0
    %v1207 = vadd.f32 %v699, %v1206
    %1208 = vdwg.mxu0
    %1209 = vmatprep.subr.mxu0 %v120
    %1210 = vmatpush1.msra.mxu0 %v119
    %1211 = vmatprep.subr.mxu0 %v136
    %1212 = vmatpush1.msra.mxu0 %v135
    %1213 = vmatprep.subr.mxu0 %v152
    %1214 = vmatpush1.msra.mxu0 %v151
    %1215 = vmatprep.subr.mxu0 %v168
    %1216 = vmatpush1.msra.mxu0 %v167
    %1217 = vmatprep.subr.mxu0 %v184
    %1218 = vmatpush1.msra.mxu0 %v183
    %1219 = vmatprep.subr.mxu0 %v200
    %1220 = vmatpush1.msra.mxu0 %v199
    %1221 = vmatprep.subr.mxu0 %v216
    %1222 = vmatpush1.msra.mxu0 %v215
    %1223 = vmatprep.subr.mxu0 %v232
    %1224 = vmatpush1.msra.mxu0 %v231
    %1225 = vmatprep.subr.mxu0 %v248
    %1226 = vmatpush1.msra.mxu0 %v247
    %1227 = vmatprep.subr.mxu0 %v264
    %1228 = vmatpush1.msra.mxu0 %v263
    %1229 = vmatprep.subr.mxu0 %v280
    %1230 = vmatpush1.msra.mxu0 %v279
    %1231 = vmatprep.subr.mxu0 %v296
    %1232 = vmatpush1.msra.mxu0 %v295
    %1233 = vmatprep.subr.mxu0 %v312
    %1234 = vmatpush1.msra.mxu0 %v311
    %1235 = vmatprep.subr.mxu0 %v328
    %1236 = vmatpush1.msra.mxu0 %v327
    %1237 = vmatprep.subr.mxu0 %v344
    %1238 = vmatpush1.msra.mxu0 %v343
    %1239 = vmatprep.subr.mxu0 %v360
    %1240 = vmatpush1.msra.mxu0 %v359
    %1241 = vmatprep.subr.mxu0 %v376
    %1242 = vmatpush1.msra.mxu0 %v375
    %1243 = vmatprep.subr.mxu0 %v392
    %1244 = vmatpush1.msra.mxu0 %v391
    %1245 = vmatprep.subr.mxu0 %v408
    %1246 = vmatpush1.msra.mxu0 %v407
    %1247 = vmatprep.subr.mxu0 %v424
    %1248 = vmatpush1.msra.mxu0 %v423
    %1249 = vmatprep.subr.mxu0 %v440
    %1250 = vmatpush1.msra.mxu0 %v439
    %1251 = vmatprep.subr.mxu0 %v456
    %1252 = vmatpush1.msra.mxu0 %v455
    %1253 = vmatprep.subr.mxu0 %v472
    %1254 = vmatpush1.msra.mxu0 %v471
    %1255 = vmatprep.subr.mxu0 %v488
    %1256 = vmatpush1.msra.mxu0 %v487
    %1257 = vmatprep.subr.mxu0 %v504
    %1258 = vmatpush1.msra.mxu0 %v503
    %1259 = vmatprep.subr.mxu0 %v520
    %1260 = vmatpush1.msra.mxu0 %v519
    %1261 = vmatprep.subr.mxu0 %v536
    %1262 = vmatpush1.msra.mxu0 %v535
    %1263 = vmatprep.subr.mxu0 %v552
    %1264 = vmatpush1.msra.mxu0 %v551
    %1265 = vmatprep.subr.mxu0 %v568
    %1266 = vmatpush1.msra.mxu0 %v567
    %1267 = vmatprep.subr.mxu0 %v584
    %1268 = vmatpush1.msra.mxu0 %v583
    %1269 = vmatprep.subr.mxu0 %v600
    %1270 = vmatpush1.msra.mxu0 %v599
    %1271 = vmatprep.subr.mxu0 %v616
    %1272 = vmatpush1.msra.mxu0 %v615
    %1273 = vmatprep.mubr.f32.mxu0 %v709
    %1274 = vmatmul.mubr.f32.gmra.mrb[0].mxu0 %v708
    %v1275 = vpop.f32.mrb[0].mxu0
    %v1276 = vadd.f32 %v697, %v1275
    %v1277 = vpop.f32.mrb[0].mxu0
    %v1278 = vadd.f32 %v699, %v1277
    %1279 = vdwg.mxu0
    %v1280 = vtanh.pop %v779
    %v1281 = vtanh.pop %v781
    %v1282 = vtanh.pop %v850
    %v1283 = vtanh.pop %v852
    %v1284 = vtanh.pop %v921
    %v1285 = vtanh.pop %v923
    %v1286 = vtanh.pop %v992
    %v1287 = vtanh.pop %v994
    %v1288 = vtanh.pop %v1063
    %v1289 = vtanh.pop %v1065
    %v1290 = vtanh.pop %v1134
    %v1291 = vtanh.pop %v1136
    %v1292 = vtanh.pop %v1205
    %v1293 = vtanh.pop %v1207
    %v1294 = vtanh.pop %v1276
    %v1295 = vtanh.pop %v1278
    %v1296 = vld [vmem:[%s5] sm:$0xff]
    %v1297 = vld [vmem:[%s5 + $0x8] sm:$0xff]
    %v1298 = vld [vmem:[%s5 + $0x10] sm:$0xff]
    %v1299 = vld [vmem:[%s5 + $0x18] sm:$0xff]
    %v1300 = vld [vmem:[%s5 + $0x20] sm:$0xff]
    %v1301 = vld [vmem:[%s5 + $0x28] sm:$0xff]
    %v1302 = vld [vmem:[%s5 + $0x30] sm:$0xff]
    %v1303 = vld [vmem:[%s5 + $0x38] sm:$0xff]
    %v1304 = vld [vmem:[%s5 + $0x40] sm:$0xff]
    %v1305 = vld [vmem:[%s5 + $0x48] sm:$0xff]
    %v1306 = vld [vmem:[%s5 + $0x50] sm:$0xff]
    %v1307 = vld [vmem:[%s5 + $0x58] sm:$0xff]
    %v1308 = vld [vmem:[%s5 + $0x60] sm:$0xff]
    %v1309 = vld [vmem:[%s5 + $0x68] sm:$0xff]
    %v1310 = vld [vmem:[%s5 + $0x70] sm:$0xff]
    %v1311 = vld [vmem:[%s5 + $0x78] sm:$0xff]
    %v1312 = vld [vmem:[%s5 + $0x80] sm:$0xff]
    %v1313 = vld [vmem:[%s5 + $0x88] sm:$0xff]
    %v1314 = vld [vmem:[%s5 + $0x90] sm:$0xff]
    %v1315 = vld [vmem:[%s5 + $0x98] sm:$0xff]
    %v1316 = vld [vmem:[%s5 + $0xa0] sm:$0xff]
    %v1317 = vld [vmem:[%s5 + $0xa8] sm:$0xff]
    %v1318 = vld [vmem:[%s5 + $0xb0] sm:$0xff]
    %v1319 = vld [vmem:[%s5 + $0xb8] sm:$0xff]
    %v1320 = vld [vmem:[%s5 + $0xc0] sm:$0xff]
    %v1321 = vld [vmem:[%s5 + $0xc8] sm:$0xff]
    %v1322 = vld [vmem:[%s5 + $0xd0] sm:$0xff]
    %v1323 = vld [vmem:[%s5 + $0xd8] sm:$0xff]
    %v1324 = vld [vmem:[%s5 + $0xe0] sm:$0xff]
    %v1325 = vld [vmem:[%s5 + $0xe8] sm:$0xff]
    %v1326 = vld [vmem:[%s5 + $0xf0] sm:$0xff]
    %v1327 = vld [vmem:[%s5 + $0xf8] sm:$0xff]
    %v1328 = vld [vmem:[%s5 + $0x100] sm:$0xff]
    %v1329 = vld [vmem:[%s5 + $0x108] sm:$0xff]
    %v1330 = vld [vmem:[%s5 + $0x110] sm:$0xff]
    %v1331 = vld [vmem:[%s5 + $0x118] sm:$0xff]
    %v1332 = vld [vmem:[%s5 + $0x120] sm:$0xff]
    %v1333 = vld [vmem:[%s5 + $0x128] sm:$0xff]
    %v1334 = vld [vmem:[%s5 + $0x130] sm:$0xff]
    %v1335 = vld [vmem:[%s5 + $0x138] sm:$0xff]
    %v1336 = vld [vmem:[%s5 + $0x140] sm:$0xff]
    %v1337 = vld [vmem:[%s5 + $0x148] sm:$0xff]
    %v1338 = vld [vmem:[%s5 + $0x150] sm:$0xff]
    %v1339 = vld [vmem:[%s5 + $0x158] sm:$0xff]
    %v1340 = vld [vmem:[%s5 + $0x160] sm:$0xff]
    %v1341 = vld [vmem:[%s5 + $0x168] sm:$0xff]
    %v1342 = vld [vmem:[%s5 + $0x170] sm:$0xff]
    %v1343 = vld [vmem:[%s5 + $0x178] sm:$0xff]
    %v1344 = vld [vmem:[%s5 + $0x180] sm:$0xff]
    %v1345 = vld [vmem:[%s5 + $0x188] sm:$0xff]
    %v1346 = vld [vmem:[%s5 + $0x190] sm:$0xff]
    %v1347 = vld [vmem:[%s5 + $0x198] sm:$0xff]
    %v1348 = vld [vmem:[%s5 + $0x1a0] sm:$0xff]
    %v1349 = vld [vmem:[%s5 + $0x1a8] sm:$0xff]
    %v1350 = vld [vmem:[%s5 + $0x1b0] sm:$0xff]
    %v1351 = vld [vmem:[%s5 + $0x1b8] sm:$0xff]
    %v1352 = vld [vmem:[%s5 + $0x1c0] sm:$0xff]
    %v1353 = vld [vmem:[%s5 + $0x1c8] sm:$0xff]
    %v1354 = vld [vmem:[%s5 + $0x1d0] sm:$0xff]
    %v1355 = vld [vmem:[%s5 + $0x1d8] sm:$0xff]
    %v1356 = vld [vmem:[%s5 + $0x1e0] sm:$0xff]
    %v1357 = vld [vmem:[%s5 + $0x1e8] sm:$0xff]
    %v1358 = vld [vmem:[%s5 + $0x1f0] sm:$0xff]
    %v1359 = vld [vmem:[%s5 + $0x1f8] sm:$0xff]
    %v1360 = vld [vmem:[%s5 + $0x200] sm:$0xff]
    %v1361 = vld [vmem:[%s5 + $0x208] sm:$0xff]
    %v1362 = vld [vmem:[%s5 + $0x210] sm:$0xff]
    %v1363 = vld [vmem:[%s5 + $0x218] sm:$0xff]
    %v1364 = vld [vmem:[%s5 + $0x220] sm:$0xff]
    %v1365 = vld [vmem:[%s5 + $0x228] sm:$0xff]
    %v1366 = vld [vmem:[%s5 + $0x230] sm:$0xff]
    %v1367 = vld [vmem:[%s5 + $0x238] sm:$0xff]
    %v1368 = vld [vmem:[%s5 + $0x240] sm:$0xff]
    %v1369 = vld [vmem:[%s5 + $0x248] sm:$0xff]
    %v1370 = vld [vmem:[%s5 + $0x250] sm:$0xff]
    %v1371 = vld [vmem:[%s5 + $0x258] sm:$0xff]
    %v1372 = vld [vmem:[%s5 + $0x260] sm:$0xff]
    %v1373 = vld [vmem:[%s5 + $0x268] sm:$0xff]
    %v1374 = vld [vmem:[%s5 + $0x270] sm:$0xff]
    %v1375 = vld [vmem:[%s5 + $0x278] sm:$0xff]
    %v1376 = vld [vmem:[%s5 + $0x280] sm:$0xff]
    %v1377 = vld [vmem:[%s5 + $0x288] sm:$0xff]
    %v1378 = vld [vmem:[%s5 + $0x290] sm:$0xff]
    %v1379 = vld [vmem:[%s5 + $0x298] sm:$0xff]
    %v1380 = vld [vmem:[%s5 + $0x2a0] sm:$0xff]
    %v1381 = vld [vmem:[%s5 + $0x2a8] sm:$0xff]
    %v1382 = vld [vmem:[%s5 + $0x2b0] sm:$0xff]
    %v1383 = vld [vmem:[%s5 + $0x2b8] sm:$0xff]
    %v1384 = vld [vmem:[%s5 + $0x2c0] sm:$0xff]
    %v1385 = vld [vmem:[%s5 + $0x2c8] sm:$0xff]
    %v1386 = vld [vmem:[%s5 + $0x2d0] sm:$0xff]
    %v1387 = vld [vmem:[%s5 + $0x2d8] sm:$0xff]
    %v1388 = vld [vmem:[%s5 + $0x2e0] sm:$0xff]
    %v1389 = vld [vmem:[%s5 + $0x2e8] sm:$0xff]
    %v1390 = vld [vmem:[%s5 + $0x2f0] sm:$0xff]
    %v1391 = vld [vmem:[%s5 + $0x2f8] sm:$0xff]
    %v1392 = vld [vmem:[%s5 + $0x300] sm:$0xff]
    %v1393 = vld [vmem:[%s5 + $0x308] sm:$0xff]
    %v1394 = vld [vmem:[%s5 + $0x310] sm:$0xff]
    %v1395 = vld [vmem:[%s5 + $0x318] sm:$0xff]
    %v1396 = vld [vmem:[%s5 + $0x320] sm:$0xff]
    %v1397 = vld [vmem:[%s5 + $0x328] sm:$0xff]
    %v1398 = vld [vmem:[%s5 + $0x330] sm:$0xff]
    %v1399 = vld [vmem:[%s5 + $0x338] sm:$0xff]
    %v1400 = vld [vmem:[%s5 + $0x340] sm:$0xff]
    %v1401 = vld [vmem:[%s5 + $0x348] sm:$0xff]
    %v1402 = vld [vmem:[%s5 + $0x350] sm:$0xff]
    %v1403 = vld [vmem:[%s5 + $0x358] sm:$0xff]
    %v1404 = vld [vmem:[%s5 + $0x360] sm:$0xff]
    %v1405 = vld [vmem:[%s5 + $0x368] sm:$0xff]
    %v1406 = vld [vmem:[%s5 + $0x370] sm:$0xff]
    %v1407 = vld [vmem:[%s5 + $0x378] sm:$0xff]
    %v1408 = vld [vmem:[%s5 + $0x380] sm:$0xff]
    %v1409 = vld [vmem:[%s5 + $0x388] sm:$0xff]
    %v1410 = vld [vmem:[%s5 + $0x390] sm:$0xff]
    %v1411 = vld [vmem:[%s5 + $0x398] sm:$0xff]
    %v1412 = vld [vmem:[%s5 + $0x3a0] sm:$0xff]
    %v1413 = vld [vmem:[%s5 + $0x3a8] sm:$0xff]
    %v1414 = vld [vmem:[%s5 + $0x3b0] sm:$0xff]
    %v1415 = vld [vmem:[%s5 + $0x3b8] sm:$0xff]
    %v1416 = vld [vmem:[%s5 + $0x3c0] sm:$0xff]
    %v1417 = vld [vmem:[%s5 + $0x3c8] sm:$0xff]
    %v1418 = vld [vmem:[%s5 + $0x3d0] sm:$0xff]
    %v1419 = vld [vmem:[%s5 + $0x3d8] sm:$0xff]
    %v1420 = vld [vmem:[%s5 + $0x3e0] sm:$0xff]
    %v1421 = vld [vmem:[%s5 + $0x3e8] sm:$0xff]
    %v1422 = vld [vmem:[%s5 + $0x3f0] sm:$0xff]
    %v1423 = vld [vmem:[%s5 + $0x3f8] sm:$0xff]
    %v1424 = vld [vmem:[%s5 + $0x400] sm:$0xff]
    %v1425 = vld [vmem:[%s5 + $0x408] sm:$0xff]
    %v1426 = vld [vmem:[%s5 + $0x410] sm:$0xff]
    %v1427 = vld [vmem:[%s5 + $0x418] sm:$0xff]
    %v1428 = vld [vmem:[%s5 + $0x420] sm:$0xff]
    %v1429 = vld [vmem:[%s5 + $0x428] sm:$0xff]
    %v1430 = vld [vmem:[%s5 + $0x430] sm:$0xff]
    %v1431 = vld [vmem:[%s5 + $0x438] sm:$0xff]
    %v1432 = vld [vmem:[%s5 + $0x440] sm:$0xff]
    %v1433 = vld [vmem:[%s5 + $0x448] sm:$0xff]
    %v1434 = vld [vmem:[%s5 + $0x450] sm:$0xff]
    %v1435 = vld [vmem:[%s5 + $0x458] sm:$0xff]
    %v1436 = vld [vmem:[%s5 + $0x460] sm:$0xff]
    %v1437 = vld [vmem:[%s5 + $0x468] sm:$0xff]
    %v1438 = vld [vmem:[%s5 + $0x470] sm:$0xff]
    %v1439 = vld [vmem:[%s5 + $0x478] sm:$0xff]
    %v1440 = vld [vmem:[%s5 + $0x480] sm:$0xff]
    %v1441 = vld [vmem:[%s5 + $0x488] sm:$0xff]
    %v1442 = vld [vmem:[%s5 + $0x490] sm:$0xff]
    %v1443 = vld [vmem:[%s5 + $0x498] sm:$0xff]
    %v1444 = vld [vmem:[%s5 + $0x4a0] sm:$0xff]
    %v1445 = vld [vmem:[%s5 + $0x4a8] sm:$0xff]
    %v1446 = vld [vmem:[%s5 + $0x4b0] sm:$0xff]
    %v1447 = vld [vmem:[%s5 + $0x4b8] sm:$0xff]
    %v1448 = vld [vmem:[%s5 + $0x4c0] sm:$0xff]
    %v1449 = vld [vmem:[%s5 + $0x4c8] sm:$0xff]
    %v1450 = vld [vmem:[%s5 + $0x4d0] sm:$0xff]
    %v1451 = vld [vmem:[%s5 + $0x4d8] sm:$0xff]
    %v1452 = vld [vmem:[%s5 + $0x4e0] sm:$0xff]
    %v1453 = vld [vmem:[%s5 + $0x4e8] sm:$0xff]
    %v1454 = vld [vmem:[%s5 + $0x4f0] sm:$0xff]
    %v1455 = vld [vmem:[%s5 + $0x4f8] sm:$0xff]
    %v1456 = vld [vmem:[%s5 + $0x500] sm:$0xff]
    %v1457 = vld [vmem:[%s5 + $0x508] sm:$0xff]
    %v1458 = vld [vmem:[%s5 + $0x510] sm:$0xff]
    %v1459 = vld [vmem:[%s5 + $0x518] sm:$0xff]
    %v1460 = vld [vmem:[%s5 + $0x520] sm:$0xff]
    %v1461 = vld [vmem:[%s5 + $0x528] sm:$0xff]
    %v1462 = vld [vmem:[%s5 + $0x530] sm:$0xff]
    %v1463 = vld [vmem:[%s5 + $0x538] sm:$0xff]
    %v1464 = vld [vmem:[%s5 + $0x540] sm:$0xff]
    %v1465 = vld [vmem:[%s5 + $0x548] sm:$0xff]
    %v1466 = vld [vmem:[%s5 + $0x550] sm:$0xff]
    %v1467 = vld [vmem:[%s5 + $0x558] sm:$0xff]
    %v1468 = vld [vmem:[%s5 + $0x560] sm:$0xff]
    %v1469 = vld [vmem:[%s5 + $0x568] sm:$0xff]
    %v1470 = vld [vmem:[%s5 + $0x570] sm:$0xff]
    %v1471 = vld [vmem:[%s5 + $0x578] sm:$0xff]
    %v1472 = vld [vmem:[%s5 + $0x580] sm:$0xff]
    %v1473 = vld [vmem:[%s5 + $0x588] sm:$0xff]
    %v1474 = vld [vmem:[%s5 + $0x590] sm:$0xff]
    %v1475 = vld [vmem:[%s5 + $0x598] sm:$0xff]
    %v1476 = vld [vmem:[%s5 + $0x5a0] sm:$0xff]
    %v1477 = vld [vmem:[%s5 + $0x5a8] sm:$0xff]
    %v1478 = vld [vmem:[%s5 + $0x5b0] sm:$0xff]
    %v1479 = vld [vmem:[%s5 + $0x5b8] sm:$0xff]
    %v1480 = vld [vmem:[%s5 + $0x5c0] sm:$0xff]
    %v1481 = vld [vmem:[%s5 + $0x5c8] sm:$0xff]
    %v1482 = vld [vmem:[%s5 + $0x5d0] sm:$0xff]
    %v1483 = vld [vmem:[%s5 + $0x5d8] sm:$0xff]
    %v1484 = vld [vmem:[%s5 + $0x5e0] sm:$0xff]
    %v1485 = vld [vmem:[%s5 + $0x5e8] sm:$0xff]
    %v1486 = vld [vmem:[%s5 + $0x5f0] sm:$0xff]
    %v1487 = vld [vmem:[%s5 + $0x5f8] sm:$0xff]
    %v1488 = vld [vmem:[%s5 + $0x600] sm:$0xff]
    %v1489 = vld [vmem:[%s5 + $0x608] sm:$0xff]
    %v1490 = vld [vmem:[%s5 + $0x610] sm:$0xff]
    %v1491 = vld [vmem:[%s5 + $0x618] sm:$0xff]
    %v1492 = vld [vmem:[%s5 + $0x620] sm:$0xff]
    %v1493 = vld [vmem:[%s5 + $0x628] sm:$0xff]
    %v1494 = vld [vmem:[%s5 + $0x630] sm:$0xff]
    %v1495 = vld [vmem:[%s5 + $0x638] sm:$0xff]
    %v1496 = vld [vmem:[%s5 + $0x640] sm:$0xff]
    %v1497 = vld [vmem:[%s5 + $0x648] sm:$0xff]
    %v1498 = vld [vmem:[%s5 + $0x650] sm:$0xff]
    %v1499 = vld [vmem:[%s5 + $0x658] sm:$0xff]
    %v1500 = vld [vmem:[%s5 + $0x660] sm:$0xff]
    %v1501 = vld [vmem:[%s5 + $0x668] sm:$0xff]
    %v1502 = vld [vmem:[%s5 + $0x670] sm:$0xff]
    %v1503 = vld [vmem:[%s5 + $0x678] sm:$0xff]
    %v1504 = vld [vmem:[%s5 + $0x680] sm:$0xff]
    %v1505 = vld [vmem:[%s5 + $0x688] sm:$0xff]
    %v1506 = vld [vmem:[%s5 + $0x690] sm:$0xff]
    %v1507 = vld [vmem:[%s5 + $0x698] sm:$0xff]
    %v1508 = vld [vmem:[%s5 + $0x6a0] sm:$0xff]
    %v1509 = vld [vmem:[%s5 + $0x6a8] sm:$0xff]
    %v1510 = vld [vmem:[%s5 + $0x6b0] sm:$0xff]
    %v1511 = vld [vmem:[%s5 + $0x6b8] sm:$0xff]
    %v1512 = vld [vmem:[%s5 + $0x6c0] sm:$0xff]
    %v1513 = vld [vmem:[%s5 + $0x6c8] sm:$0xff]
    %v1514 = vld [vmem:[%s5 + $0x6d0] sm:$0xff]
    %v1515 = vld [vmem:[%s5 + $0x6d8] sm:$0xff]
    %v1516 = vld [vmem:[%s5 + $0x6e0] sm:$0xff]
    %v1517 = vld [vmem:[%s5 + $0x6e8] sm:$0xff]
    %v1518 = vld [vmem:[%s5 + $0x6f0] sm:$0xff]
    %v1519 = vld [vmem:[%s5 + $0x6f8] sm:$0xff]
    %v1520 = vld [vmem:[%s5 + $0x700] sm:$0xff]
    %v1521 = vld [vmem:[%s5 + $0x708] sm:$0xff]
    %v1522 = vld [vmem:[%s5 + $0x710] sm:$0xff]
    %v1523 = vld [vmem:[%s5 + $0x718] sm:$0xff]
    %v1524 = vld [vmem:[%s5 + $0x720] sm:$0xff]
    %v1525 = vld [vmem:[%s5 + $0x728] sm:$0xff]
    %v1526 = vld [vmem:[%s5 + $0x730] sm:$0xff]
    %v1527 = vld [vmem:[%s5 + $0x738] sm:$0xff]
    %v1528 = vld [vmem:[%s5 + $0x740] sm:$0xff]
    %v1529 = vld [vmem:[%s5 + $0x748] sm:$0xff]
    %v1530 = vld [vmem:[%s5 + $0x750] sm:$0xff]
    %v1531 = vld [vmem:[%s5 + $0x758] sm:$0xff]
    %v1532 = vld [vmem:[%s5 + $0x760] sm:$0xff]
    %v1533 = vld [vmem:[%s5 + $0x768] sm:$0xff]
    %v1534 = vld [vmem:[%s5 + $0x770] sm:$0xff]
    %v1535 = vld [vmem:[%s5 + $0x778] sm:$0xff]
    %v1536 = vld [vmem:[%s5 + $0x780] sm:$0xff]
    %v1537 = vld [vmem:[%s5 + $0x788] sm:$0xff]
    %v1538 = vld [vmem:[%s5 + $0x790] sm:$0xff]
    %v1539 = vld [vmem:[%s5 + $0x798] sm:$0xff]
    %v1540 = vld [vmem:[%s5 + $0x7a0] sm:$0xff]
    %v1541 = vld [vmem:[%s5 + $0x7a8] sm:$0xff]
    %v1542 = vld [vmem:[%s5 + $0x7b0] sm:$0xff]
    %v1543 = vld [vmem:[%s5 + $0x7b8] sm:$0xff]
    %v1544 = vld [vmem:[%s5 + $0x7c0] sm:$0xff]
    %v1545 = vld [vmem:[%s5 + $0x7c8] sm:$0xff]
    %v1546 = vld [vmem:[%s5 + $0x7d0] sm:$0xff]
    %v1547 = vld [vmem:[%s5 + $0x7d8] sm:$0xff]
    %v1548 = vld [vmem:[%s5 + $0x7e0] sm:$0xff]
    %v1549 = vld [vmem:[%s5 + $0x7e8] sm:$0xff]
    %v1550 = vld [vmem:[%s5 + $0x7f0] sm:$0xff]
    %v1551 = vld [vmem:[%s5 + $0x7f8] sm:$0xff]
    %1552 = vmatprep.subr.mxu0 0.0
    %1553 = vmatpush1.msra.mxu0 %v1296
    %1554 = vmatprep.subr.mxu0 0.0
    %1555 = vmatpush1.msra.mxu0 %v1297
    %1556 = vmatprep.subr.mxu0 0.0
    %1557 = vmatpush1.msra.mxu0 %v1298
    %1558 = vmatprep.subr.mxu0 0.0
    %1559 = vmatpush1.msra.mxu0 %v1299
    %1560 = vmatprep.subr.mxu0 0.0
    %1561 = vmatpush1.msra.mxu0 %v1300
    %1562 = vmatprep.subr.mxu0 0.0
    %1563 = vmatpush1.msra.mxu0 %v1301
    %1564 = vmatprep.subr.mxu0 0.0
    %1565 = vmatpush1.msra.mxu0 %v1302
    %1566 = vmatprep.subr.mxu0 0.0
    %1567 = vmatpush1.msra.mxu0 %v1303
    %1568 = vmatprep.subr.mxu0 0.0
    %1569 = vmatpush1.msra.mxu0 %v1304
    %1570 = vmatprep.subr.mxu0 0.0
    %1571 = vmatpush1.msra.mxu0 %v1305
    %1572 = vmatprep.subr.mxu0 0.0
    %1573 = vmatpush1.msra.mxu0 %v1306
    %1574 = vmatprep.subr.mxu0 0.0
    %1575 = vmatpush1.msra.mxu0 %v1307
    %1576 = vmatprep.subr.mxu0 0.0
    %1577 = vmatpush1.msra.mxu0 %v1308
    %1578 = vmatprep.subr.mxu0 0.0
    %1579 = vmatpush1.msra.mxu0 %v1309
    %1580 = vmatprep.subr.mxu0 0.0
    %1581 = vmatpush1.msra.mxu0 %v1310
    %1582 = vmatprep.subr.mxu0 0.0
    %1583 = vmatpush1.msra.mxu0 %v1311
    %1584 = vmatprep.subr.mxu0 0.0
    %1585 = vmatpush1.msra.mxu0 %v1312
    %1586 = vmatprep.subr.mxu0 0.0
    %1587 = vmatpush1.msra.mxu0 %v1313
    %1588 = vmatprep.subr.mxu0 0.0
    %1589 = vmatpush1.msra.mxu0 %v1314
    %1590 = vmatprep.subr.mxu0 0.0
    %1591 = vmatpush1.msra.mxu0 %v1315
    %1592 = vmatprep.subr.mxu0 0.0
    %1593 = vmatpush1.msra.mxu0 %v1316
    %1594 = vmatprep.subr.mxu0 0.0
    %1595 = vmatpush1.msra.mxu0 %v1317
    %1596 = vmatprep.subr.mxu0 0.0
    %1597 = vmatpush1.msra.mxu0 %v1318
    %1598 = vmatprep.subr.mxu0 0.0
    %1599 = vmatpush1.msra.mxu0 %v1319
    %1600 = vmatprep.subr.mxu0 0.0
    %1601 = vmatpush1.msra.mxu0 %v1320
    %1602 = vmatprep.subr.mxu0 0.0
    %1603 = vmatpush1.msra.mxu0 %v1321
    %1604 = vmatprep.subr.mxu0 0.0
    %1605 = vmatpush1.msra.mxu0 %v1322
    %1606 = vmatprep.subr.mxu0 0.0
    %1607 = vmatpush1.msra.mxu0 %v1323
    %1608 = vmatprep.subr.mxu0 0.0
    %1609 = vmatpush1.msra.mxu0 %v1324
    %1610 = vmatprep.subr.mxu0 0.0
    %1611 = vmatpush1.msra.mxu0 %v1325
    %1612 = vmatprep.subr.mxu0 0.0
    %1613 = vmatpush1.msra.mxu0 %v1326
    %1614 = vmatprep.subr.mxu0 0.0
    %1615 = vmatpush1.msra.mxu0 %v1327
    %1616 = vmatprep.mubr.f32.mxu0 %v1281
    %1617 = vmatmul.mubr.f32.gmra.mrb[0].mxu0 %v1280
    %v1618 = vpop.f32.mrb[0].mxu0
    %v1619 = vadd.f32 0.0, %v1618
    %v1620 = vpop.f32.mrb[0].mxu0
    %1621 = vdwg.mxu0
    %1622 = vmatprep.subr.mxu0 0.0
    %1623 = vmatpush1.msra.mxu0 %v1328
    %1624 = vmatprep.subr.mxu0 0.0
    %1625 = vmatpush1.msra.mxu0 %v1329
    %1626 = vmatprep.subr.mxu0 0.0
    %1627 = vmatpush1.msra.mxu0 %v1330
    %1628 = vmatprep.subr.mxu0 0.0
    %1629 = vmatpush1.msra.mxu0 %v1331
    %1630 = vmatprep.subr.mxu0 0.0
    %1631 = vmatpush1.msra.mxu0 %v1332
    %1632 = vmatprep.subr.mxu0 0.0
    %1633 = vmatpush1.msra.mxu0 %v1333
    %1634 = vmatprep.subr.mxu0 0.0
    %1635 = vmatpush1.msra.mxu0 %v1334
    %1636 = vmatprep.subr.mxu0 0.0
    %1637 = vmatpush1.msra.mxu0 %v1335
    %1638 = vmatprep.subr.mxu0 0.0
    %1639 = vmatpush1.msra.mxu0 %v1336
    %1640 = vmatprep.subr.mxu0 0.0
    %1641 = vmatpush1.msra.mxu0 %v1337
    %1642 = vmatprep.subr.mxu0 0.0
    %1643 = vmatpush1.msra.mxu0 %v1338
    %1644 = vmatprep.subr.mxu0 0.0
    %1645 = vmatpush1.msra.mxu0 %v1339
    %1646 = vmatprep.subr.mxu0 0.0
    %1647 = vmatpush1.msra.mxu0 %v1340
    %1648 = vmatprep.subr.mxu0 0.0
    %1649 = vmatpush1.msra.mxu0 %v1341
    %1650 = vmatprep.subr.mxu0 0.0
    %1651 = vmatpush1.msra.mxu0 %v1342
    %1652 = vmatprep.subr.mxu0 0.0
    %1653 = vmatpush1.msra.mxu0 %v1343
    %1654 = vmatprep.subr.mxu0 0.0
    %1655 = vmatpush1.msra.mxu0 %v1344
    %1656 = vmatprep.subr.mxu0 0.0
    %1657 = vmatpush1.msra.mxu0 %v1345
    %1658 = vmatprep.subr.mxu0 0.0
    %1659 = vmatpush1.msra.mxu0 %v1346
    %1660 = vmatprep.subr.mxu0 0.0
    %1661 = vmatpush1.msra.mxu0 %v1347
    %1662 = vmatprep.subr.mxu0 0.0
    %1663 = vmatpush1.msra.mxu0 %v1348
    %1664 = vmatprep.subr.mxu0 0.0
    %1665 = vmatpush1.msra.mxu0 %v1349
    %1666 = vmatprep.subr.mxu0 0.0
    %1667 = vmatpush1.msra.mxu0 %v1350
    %1668 = vmatprep.subr.mxu0 0.0
    %1669 = vmatpush1.msra.mxu0 %v1351
    %1670 = vmatprep.subr.mxu0 0.0
    %1671 = vmatpush1.msra.mxu0 %v1352
    %1672 = vmatprep.subr.mxu0 0.0
    %1673 = vmatpush1.msra.mxu0 %v1353
    %1674 = vmatprep.subr.mxu0 0.0
    %1675 = vmatpush1.msra.mxu0 %v1354
    %1676 = vmatprep.subr.mxu0 0.0
    %1677 = vmatpush1.msra.mxu0 %v1355
    %1678 = vmatprep.subr.mxu0 0.0
    %1679 = vmatpush1.msra.mxu0 %v1356
    %1680 = vmatprep.subr.mxu0 0.0
    %1681 = vmatpush1.msra.mxu0 %v1357
    %1682 = vmatprep.subr.mxu0 0.0
    %1683 = vmatpush1.msra.mxu0 %v1358
    %1684 = vmatprep.subr.mxu0 0.0
    %1685 = vmatpush1.msra.mxu0 %v1359
    %1686 = vmatprep.mubr.f32.mxu0 %v1283
    %1687 = vmatmul.mubr.f32.gmra.mrb[0].mxu0 %v1282
    %v1688 = vpop.f32.mrb[0].mxu0
    %v1689 = vadd.f32 %v1619, %v1688
    %v1690 = vpop.f32.mrb[0].mxu0
    %1691 = vdwg.mxu0
    %1692 = vmatprep.subr.mxu0 0.0
    %1693 = vmatpush1.msra.mxu0 %v1360
    %1694 = vmatprep.subr.mxu0 0.0
    %1695 = vmatpush1.msra.mxu0 %v1361
    %1696 = vmatprep.subr.mxu0 0.0
    %1697 = vmatpush1.msra.mxu0 %v1362
    %1698 = vmatprep.subr.mxu0 0.0
    %1699 = vmatpush1.msra.mxu0 %v1363
    %1700 = vmatprep.subr.mxu0 0.0
    %1701 = vmatpush1.msra.mxu0 %v1364
    %1702 = vmatprep.subr.mxu0 0.0
    %1703 = vmatpush1.msra.mxu0 %v1365
    %1704 = vmatprep.subr.mxu0 0.0
    %1705 = vmatpush1.msra.mxu0 %v1366
    %1706 = vmatprep.subr.mxu0 0.0
    %1707 = vmatpush1.msra.mxu0 %v1367
    %1708 = vmatprep.subr.mxu0 0.0
    %1709 = vmatpush1.msra.mxu0 %v1368
    %1710 = vmatprep.subr.mxu0 0.0
    %1711 = vmatpush1.msra.mxu0 %v1369
    %1712 = vmatprep.subr.mxu0 0.0
    %1713 = vmatpush1.msra.mxu0 %v1370
    %1714 = vmatprep.subr.mxu0 0.0
    %1715 = vmatpush1.msra.mxu0 %v1371
    %1716 = vmatprep.subr.mxu0 0.0
    %1717 = vmatpush1.msra.mxu0 %v1372
    %1718 = vmatprep.subr.mxu0 0.0
    %1719 = vmatpush1.msra.mxu0 %v1373
    %1720 = vmatprep.subr.mxu0 0.0
    %1721 = vmatpush1.msra.mxu0 %v1374
    %1722 = vmatprep.subr.mxu0 0.0
    %1723 = vmatpush1.msra.mxu0 %v1375
    %1724 = vmatprep.subr.mxu0 0.0
    %1725 = vmatpush1.msra.mxu0 %v1376
    %1726 = vmatprep.subr.mxu0 0.0
    %1727 = vmatpush1.msra.mxu0 %v1377
    %1728 = vmatprep.subr.mxu0 0.0
    %1729 = vmatpush1.msra.mxu0 %v1378
    %1730 = vmatprep.subr.mxu0 0.0
    %1731 = vmatpush1.msra.mxu0 %v1379
    %1732 = vmatprep.subr.mxu0 0.0
    %1733 = vmatpush1.msra.mxu0 %v1380
    %1734 = vmatprep.subr.mxu0 0.0
    %1735 = vmatpush1.msra.mxu0 %v1381
    %1736 = vmatprep.subr.mxu0 0.0
    %1737 = vmatpush1.msra.mxu0 %v1382
    %1738 = vmatprep.subr.mxu0 0.0
    %1739 = vmatpush1.msra.mxu0 %v1383
    %1740 = vmatprep.subr.mxu0 0.0
    %1741 = vmatpush1.msra.mxu0 %v1384
    %1742 = vmatprep.subr.mxu0 0.0
    %1743 = vmatpush1.msra.mxu0 %v1385
    %1744 = vmatprep.subr.mxu0 0.0
    %1745 = vmatpush1.msra.mxu0 %v1386
    %1746 = vmatprep.subr.mxu0 0.0
    %1747 = vmatpush1.msra.mxu0 %v1387
    %1748 = vmatprep.subr.mxu0 0.0
    %1749 = vmatpush1.msra.mxu0 %v1388
    %1750 = vmatprep.subr.mxu0 0.0
    %1751 = vmatpush1.msra.mxu0 %v1389
    %1752 = vmatprep.subr.mxu0 0.0
    %1753 = vmatpush1.msra.mxu0 %v1390
    %1754 = vmatprep.subr.mxu0 0.0
    %1755 = vmatpush1.msra.mxu0 %v1391
    %1756 = vmatprep.mubr.f32.mxu0 %v1285
    %1757 = vmatmul.mubr.f32.gmra.mrb[0].mxu0 %v1284
    %v1758 = vpop.f32.mrb[0].mxu0
    %v1759 = vadd.f32 %v1689, %v1758
    %v1760 = vpop.f32.mrb[0].mxu0
    %1761 = vdwg.mxu0
    %1762 = vmatprep.subr.mxu0 0.0
    %1763 = vmatpush1.msra.mxu0 %v1392
    %1764 = vmatprep.subr.mxu0 0.0
    %1765 = vmatpush1.msra.mxu0 %v1393
    %1766 = vmatprep.subr.mxu0 0.0
    %1767 = vmatpush1.msra.mxu0 %v1394
    %1768 = vmatprep.subr.mxu0 0.0
    %1769 = vmatpush1.msra.mxu0 %v1395
    %1770 = vmatprep.subr.mxu0 0.0
    %1771 = vmatpush1.msra.mxu0 %v1396
    %1772 = vmatprep.subr.mxu0 0.0
    %1773 = vmatpush1.msra.mxu0 %v1397
    %1774 = vmatprep.subr.mxu0 0.0
    %1775 = vmatpush1.msra.mxu0 %v1398
    %1776 = vmatprep.subr.mxu0 0.0
    %1777 = vmatpush1.msra.mxu0 %v1399
    %1778 = vmatprep.subr.mxu0 0.0
    %1779 = vmatpush1.msra.mxu0 %v1400
    %1780 = vmatprep.subr.mxu0 0.0
    %1781 = vmatpush1.msra.mxu0 %v1401
    %1782 = vmatprep.subr.mxu0 0.0
    %1783 = vmatpush1.msra.mxu0 %v1402
    %1784 = vmatprep.subr.mxu0 0.0
    %1785 = vmatpush1.msra.mxu0 %v1403
    %1786 = vmatprep.subr.mxu0 0.0
    %1787 = vmatpush1.msra.mxu0 %v1404
    %1788 = vmatprep.subr.mxu0 0.0
    %1789 = vmatpush1.msra.mxu0 %v1405
    %1790 = vmatprep.subr.mxu0 0.0
    %1791 = vmatpush1.msra.mxu0 %v1406
    %1792 = vmatprep.subr.mxu0 0.0
    %1793 = vmatpush1.msra.mxu0 %v1407
    %1794 = vmatprep.subr.mxu0 0.0
    %1795 = vmatpush1.msra.mxu0 %v1408
    %1796 = vmatprep.subr.mxu0 0.0
    %1797 = vmatpush1.msra.mxu0 %v1409
    %1798 = vmatprep.subr.mxu0 0.0
    %1799 = vmatpush1.msra.mxu0 %v1410
    %1800 = vmatprep.subr.mxu0 0.0
    %1801 = vmatpush1.msra.mxu0 %v1411
    %1802 = vmatprep.subr.mxu0 0.0
    %1803 = vmatpush1.msra.mxu0 %v1412
    %1804 = vmatprep.subr.mxu0 0.0
    %1805 = vmatpush1.msra.mxu0 %v1413
    %1806 = vmatprep.subr.mxu0 0.0
    %1807 = vmatpush1.msra.mxu0 %v1414
    %1808 = vmatprep.subr.mxu0 0.0
    %1809 = vmatpush1.msra.mxu0 %v1415
    %1810 = vmatprep.subr.mxu0 0.0
    %1811 = vmatpush1.msra.mxu0 %v1416
    %1812 = vmatprep.subr.mxu0 0.0
    %1813 = vmatpush1.msra.mxu0 %v1417
    %1814 = vmatprep.subr.mxu0 0.0
    %1815 = vmatpush1.msra.mxu0 %v1418
    %1816 = vmatprep.subr.mxu0 0.0
    %1817 = vmatpush1.msra.mxu0 %v1419
    %1818 = vmatprep.subr.mxu0 0.0
    %1819 = vmatpush1.msra.mxu0 %v1420
    %1820 = vmatprep.subr.mxu0 0.0
    %1821 = vmatpush1.msra.mxu0 %v1421
    %1822 = vmatprep.subr.mxu0 0.0
    %1823 = vmatpush1.msra.mxu0 %v1422
    %1824 = vmatprep.subr.mxu0 0.0
    %1825 = vmatpush1.msra.mxu0 %v1423
    %1826 = vmatprep.mubr.f32.mxu0 %v1287
    %1827 = vmatmul.mubr.f32.gmra.mrb[0].mxu0 %v1286
    %v1828 = vpop.f32.mrb[0].mxu0
    %v1829 = vadd.f32 %v1759, %v1828
    %v1830 = vpop.f32.mrb[0].mxu0
    %1831 = vdwg.mxu0
    %1832 = vmatprep.subr.mxu0 0.0
    %1833 = vmatpush1.msra.mxu0 %v1424
    %1834 = vmatprep.subr.mxu0 0.0
    %1835 = vmatpush1.msra.mxu0 %v1425
    %1836 = vmatprep.subr.mxu0 0.0
    %1837 = vmatpush1.msra.mxu0 %v1426
    %1838 = vmatprep.subr.mxu0 0.0
    %1839 = vmatpush1.msra.mxu0 %v1427
    %1840 = vmatprep.subr.mxu0 0.0
    %1841 = vmatpush1.msra.mxu0 %v1428
    %1842 = vmatprep.subr.mxu0 0.0
    %1843 = vmatpush1.msra.mxu0 %v1429
    %1844 = vmatprep.subr.mxu0 0.0
    %1845 = vmatpush1.msra.mxu0 %v1430
    %1846 = vmatprep.subr.mxu0 0.0
    %1847 = vmatpush1.msra.mxu0 %v1431
    %1848 = vmatprep.subr.mxu0 0.0
    %1849 = vmatpush1.msra.mxu0 %v1432
    %1850 = vmatprep.subr.mxu0 0.0
    %1851 = vmatpush1.msra.mxu0 %v1433
    %1852 = vmatprep.subr.mxu0 0.0
    %1853 = vmatpush1.msra.mxu0 %v1434
    %1854 = vmatprep.subr.mxu0 0.0
    %1855 = vmatpush1.msra.mxu0 %v1435
    %1856 = vmatprep.subr.mxu0 0.0
    %1857 = vmatpush1.msra.mxu0 %v1436
    %1858 = vmatprep.subr.mxu0 0.0
    %1859 = vmatpush1.msra.mxu0 %v1437
    %1860 = vmatprep.subr.mxu0 0.0
    %1861 = vmatpush1.msra.mxu0 %v1438
    %1862 = vmatprep.subr.mxu0 0.0
    %1863 = vmatpush1.msra.mxu0 %v1439
    %1864 = vmatprep.subr.mxu0 0.0
    %1865 = vmatpush1.msra.mxu0 %v1440
    %1866 = vmatprep.subr.mxu0 0.0
    %1867 = vmatpush1.msra.mxu0 %v1441
    %1868 = vmatprep.subr.mxu0 0.0
    %1869 = vmatpush1.msra.mxu0 %v1442
    %1870 = vmatprep.subr.mxu0 0.0
    %1871 = vmatpush1.msra.mxu0 %v1443
    %1872 = vmatprep.subr.mxu0 0.0
    %1873 = vmatpush1.msra.mxu0 %v1444
    %1874 = vmatprep.subr.mxu0 0.0
    %1875 = vmatpush1.msra.mxu0 %v1445
    %1876 = vmatprep.subr.mxu0 0.0
    %1877 = vmatpush1.msra.mxu0 %v1446
    %1878 = vmatprep.subr.mxu0 0.0
    %1879 = vmatpush1.msra.mxu0 %v1447
    %1880 = vmatprep.subr.mxu0 0.0
    %1881 = vmatpush1.msra.mxu0 %v1448
    %1882 = vmatprep.subr.mxu0 0.0
    %1883 = vmatpush1.msra.mxu0 %v1449
    %1884 = vmatprep.subr.mxu0 0.0
    %1885 = vmatpush1.msra.mxu0 %v1450
    %1886 = vmatprep.subr.mxu0 0.0
    %1887 = vmatpush1.msra.mxu0 %v1451
    %1888 = vmatprep.subr.mxu0 0.0
    %1889 = vmatpush1.msra.mxu0 %v1452
    %1890 = vmatprep.subr.mxu0 0.0
    %1891 = vmatpush1.msra.mxu0 %v1453
    %1892 = vmatprep.subr.mxu0 0.0
    %1893 = vmatpush1.msra.mxu0 %v1454
    %1894 = vmatprep.subr.mxu0 0.0
    %1895 = vmatpush1.msra.mxu0 %v1455
    %1896 = vmatprep.mubr.f32.mxu0 %v1289
    %1897 = vmatmul.mubr.f32.gmra.mrb[0].mxu0 %v1288
    %v1898 = vpop.f32.mrb[0].mxu0
    %v1899 = vadd.f32 %v1829, %v1898
    %v1900 = vpop.f32.mrb[0].mxu0
    %1901 = vdwg.mxu0
    %1902 = vmatprep.subr.mxu0 0.0
    %1903 = vmatpush1.msra.mxu0 %v1456
    %1904 = vmatprep.subr.mxu0 0.0
    %1905 = vmatpush1.msra.mxu0 %v1457
    %1906 = vmatprep.subr.mxu0 0.0
    %1907 = vmatpush1.msra.mxu0 %v1458
    %1908 = vmatprep.subr.mxu0 0.0
    %1909 = vmatpush1.msra.mxu0 %v1459
    %1910 = vmatprep.subr.mxu0 0.0
    %1911 = vmatpush1.msra.mxu0 %v1460
    %1912 = vmatprep.subr.mxu0 0.0
    %1913 = vmatpush1.msra.mxu0 %v1461
    %1914 = vmatprep.subr.mxu0 0.0
    %1915 = vmatpush1.msra.mxu0 %v1462
    %1916 = vmatprep.subr.mxu0 0.0
    %1917 = vmatpush1.msra.mxu0 %v1463
    %1918 = vmatprep.subr.mxu0 0.0
    %1919 = vmatpush1.msra.mxu0 %v1464
    %1920 = vmatprep.subr.mxu0 0.0
    %1921 = vmatpush1.msra.mxu0 %v1465
    %1922 = vmatprep.subr.mxu0 0.0
    %1923 = vmatpush1.msra.mxu0 %v1466
    %1924 = vmatprep.subr.mxu0 0.0
    %1925 = vmatpush1.msra.mxu0 %v1467
    %1926 = vmatprep.subr.mxu0 0.0
    %1927 = vmatpush1.msra.mxu0 %v1468
    %1928 = vmatprep.subr.mxu0 0.0
    %1929 = vmatpush1.msra.mxu0 %v1469
    %1930 = vmatprep.subr.mxu0 0.0
    %1931 = vmatpush1.msra.mxu0 %v1470
    %1932 = vmatprep.subr.mxu0 0.0
    %1933 = vmatpush1.msra.mxu0 %v1471
    %1934 = vmatprep.subr.mxu0 0.0
    %1935 = vmatpush1.msra.mxu0 %v1472
    %1936 = vmatprep.subr.mxu0 0.0
    %1937 = vmatpush1.msra.mxu0 %v1473
    %1938 = vmatprep.subr.mxu0 0.0
    %1939 = vmatpush1.msra.mxu0 %v1474
    %1940 = vmatprep.subr.mxu0 0.0
    %1941 = vmatpush1.msra.mxu0 %v1475
    %1942 = vmatprep.subr.mxu0 0.0
    %1943 = vmatpush1.msra.mxu0 %v1476
    %1944 = vmatprep.subr.mxu0 0.0
    %1945 = vmatpush1.msra.mxu0 %v1477
    %1946 = vmatprep.subr.mxu0 0.0
    %1947 = vmatpush1.msra.mxu0 %v1478
    %1948 = vmatprep.subr.mxu0 0.0
    %1949 = vmatpush1.msra.mxu0 %v1479
    %1950 = vmatprep.subr.mxu0 0.0
    %1951 = vmatpush1.msra.mxu0 %v1480
    %1952 = vmatprep.subr.mxu0 0.0
    %1953 = vmatpush1.msra.mxu0 %v1481
    %1954 = vmatprep.subr.mxu0 0.0
    %1955 = vmatpush1.msra.mxu0 %v1482
    %1956 = vmatprep.subr.mxu0 0.0
    %1957 = vmatpush1.msra.mxu0 %v1483
    %1958 = vmatprep.subr.mxu0 0.0
    %1959 = vmatpush1.msra.mxu0 %v1484
    %1960 = vmatprep.subr.mxu0 0.0
    %1961 = vmatpush1.msra.mxu0 %v1485
    %1962 = vmatprep.subr.mxu0 0.0
    %1963 = vmatpush1.msra.mxu0 %v1486
    %1964 = vmatprep.subr.mxu0 0.0
    %1965 = vmatpush1.msra.mxu0 %v1487
    %1966 = vmatprep.mubr.f32.mxu0 %v1291
    %1967 = vmatmul.mubr.f32.gmra.mrb[0].mxu0 %v1290
    %v1968 = vpop.f32.mrb[0].mxu0
    %v1969 = vadd.f32 %v1899, %v1968
    %v1970 = vpop.f32.mrb[0].mxu0
    %1971 = vdwg.mxu0
    %1972 = vmatprep.subr.mxu0 0.0
    %1973 = vmatpush1.msra.mxu0 %v1488
    %1974 = vmatprep.subr.mxu0 0.0
    %1975 = vmatpush1.msra.mxu0 %v1489
    %1976 = vmatprep.subr.mxu0 0.0
    %1977 = vmatpush1.msra.mxu0 %v1490
    %1978 = vmatprep.subr.mxu0 0.0
    %1979 = vmatpush1.msra.mxu0 %v1491
    %1980 = vmatprep.subr.mxu0 0.0
    %1981 = vmatpush1.msra.mxu0 %v1492
    %1982 = vmatprep.subr.mxu0 0.0
    %1983 = vmatpush1.msra.mxu0 %v1493
    %1984 = vmatprep.subr.mxu0 0.0
    %1985 = vmatpush1.msra.mxu0 %v1494
    %1986 = vmatprep.subr.mxu0 0.0
    %1987 = vmatpush1.msra.mxu0 %v1495
    %1988 = vmatprep.subr.mxu0 0.0
    %1989 = vmatpush1.msra.mxu0 %v1496
    %1990 = vmatprep.subr.mxu0 0.0
    %1991 = vmatpush1.msra.mxu0 %v1497
    %1992 = vmatprep.subr.mxu0 0.0
    %1993 = vmatpush1.msra.mxu0 %v1498
    %1994 = vmatprep.subr.mxu0 0.0
    %1995 = vmatpush1.msra.mxu0 %v1499
    %1996 = vmatprep.subr.mxu0 0.0
    %1997 = vmatpush1.msra.mxu0 %v1500
    %1998 = vmatprep.subr.mxu0 0.0
    %1999 = vmatpush1.msra.mxu0 %v1501
    %2000 = vmatprep.subr.mxu0 0.0
    %2001 = vmatpush1.msra.mxu0 %v1502
    %2002 = vmatprep.subr.mxu0 0.0
    %2003 = vmatpush1.msra.mxu0 %v1503
    %2004 = vmatprep.subr.mxu0 0.0
    %2005 = vmatpush1.msra.mxu0 %v1504
    %2006 = vmatprep.subr.mxu0 0.0
    %2007 = vmatpush1.msra.mxu0 %v1505
    %2008 = vmatprep.subr.mxu0 0.0
    %2009 = vmatpush1.msra.mxu0 %v1506
    %2010 = vmatprep.subr.mxu0 0.0
    %2011 = vmatpush1.msra.mxu0 %v1507
    %2012 = vmatprep.subr.mxu0 0.0
    %2013 = vmatpush1.msra.mxu0 %v1508
    %2014 = vmatprep.subr.mxu0 0.0
    %2015 = vmatpush1.msra.mxu0 %v1509
    %2016 = vmatprep.subr.mxu0 0.0
    %2017 = vmatpush1.msra.mxu0 %v1510
    %2018 = vmatprep.subr.mxu0 0.0
    %2019 = vmatpush1.msra.mxu0 %v1511
    %2020 = vmatprep.subr.mxu0 0.0
    %2021 = vmatpush1.msra.mxu0 %v1512
    %2022 = vmatprep.subr.mxu0 0.0
    %2023 = vmatpush1.msra.mxu0 %v1513
    %2024 = vmatprep.subr.mxu0 0.0
    %2025 = vmatpush1.msra.mxu0 %v1514
    %2026 = vmatprep.subr.mxu0 0.0
    %2027 = vmatpush1.msra.mxu0 %v1515
    %2028 = vmatprep.subr.mxu0 0.0
    %2029 = vmatpush1.msra.mxu0 %v1516
    %2030 = vmatprep.subr.mxu0 0.0
    %2031 = vmatpush1.msra.mxu0 %v1517
    %2032 = vmatprep.subr.mxu0 0.0
    %2033 = vmatpush1.msra.mxu0 %v1518
    %2034 = vmatprep.subr.mxu0 0.0
    %2035 = vmatpush1.msra.mxu0 %v1519
    %2036 = vmatprep.mubr.f32.mxu0 %v1293
    %2037 = vmatmul.mubr.f32.gmra.mrb[0].mxu0 %v1292
    %v2038 = vpop.f32.mrb[0].mxu0
    %v2039 = vadd.f32 %v1969, %v2038
    %v2040 = vpop.f32.mrb[0].mxu0
    %2041 = vdwg.mxu0
    %2042 = vmatprep.subr.mxu0 0.0
    %2043 = vmatpush1.msra.mxu0 %v1520
    %2044 = vmatprep.subr.mxu0 0.0
    %2045 = vmatpush1.msra.mxu0 %v1521
    %2046 = vmatprep.subr.mxu0 0.0
    %2047 = vmatpush1.msra.mxu0 %v1522
    %2048 = vmatprep.subr.mxu0 0.0
    %2049 = vmatpush1.msra.mxu0 %v1523
    %2050 = vmatprep.subr.mxu0 0.0
    %2051 = vmatpush1.msra.mxu0 %v1524
    %2052 = vmatprep.subr.mxu0 0.0
    %2053 = vmatpush1.msra.mxu0 %v1525
    %2054 = vmatprep.subr.mxu0 0.0
    %2055 = vmatpush1.msra.mxu0 %v1526
    %2056 = vmatprep.subr.mxu0 0.0
    %2057 = vmatpush1.msra.mxu0 %v1527
    %2058 = vmatprep.subr.mxu0 0.0
    %2059 = vmatpush1.msra.mxu0 %v1528
    %2060 = vmatprep.subr.mxu0 0.0
    %2061 = vmatpush1.msra.mxu0 %v1529
    %2062 = vmatprep.subr.mxu0 0.0
    %2063 = vmatpush1.msra.mxu0 %v1530
    %2064 = vmatprep.subr.mxu0 0.0
    %2065 = vmatpush1.msra.mxu0 %v1531
    %2066 = vmatprep.subr.mxu0 0.0
    %2067 = vmatpush1.msra.mxu0 %v1532
    %2068 = vmatprep.subr.mxu0 0.0
    %2069 = vmatpush1.msra.mxu0 %v1533
    %2070 = vmatprep.subr.mxu0 0.0
    %2071 = vmatpush1.msra.mxu0 %v1534
    %2072 = vmatprep.subr.mxu0 0.0
    %2073 = vmatpush1.msra.mxu0 %v1535
    %2074 = vmatprep.subr.mxu0 0.0
    %2075 = vmatpush1.msra.mxu0 %v1536
    %2076 = vmatprep.subr.mxu0 0.0
    %2077 = vmatpush1.msra.mxu0 %v1537
    %2078 = vmatprep.subr.mxu0 0.0
    %2079 = vmatpush1.msra.mxu0 %v1538
    %2080 = vmatprep.subr.mxu0 0.0
    %2081 = vmatpush1.msra.mxu0 %v1539
    %2082 = vmatprep.subr.mxu0 0.0
    %2083 = vmatpush1.msra.mxu0 %v1540
    %2084 = vmatprep.subr.mxu0 0.0
    %2085 = vmatpush1.msra.mxu0 %v1541
    %2086 = vmatprep.subr.mxu0 0.0
    %2087 = vmatpush1.msra.mxu0 %v1542
    %2088 = vmatprep.subr.mxu0 0.0
    %2089 = vmatpush1.msra.mxu0 %v1543
    %2090 = vmatprep.subr.mxu0 0.0
    %2091 = vmatpush1.msra.mxu0 %v1544
    %2092 = vmatprep.subr.mxu0 0.0
    %2093 = vmatpush1.msra.mxu0 %v1545
    %2094 = vmatprep.subr.mxu0 0.0
    %2095 = vmatpush1.msra.mxu0 %v1546
    %2096 = vmatprep.subr.mxu0 0.0
    %2097 = vmatpush1.msra.mxu0 %v1547
    %2098 = vmatprep.subr.mxu0 0.0
    %2099 = vmatpush1.msra.mxu0 %v1548
    %2100 = vmatprep.subr.mxu0 0.0
    %2101 = vmatpush1.msra.mxu0 %v1549
    %2102 = vmatprep.subr.mxu0 0.0
    %2103 = vmatpush1.msra.mxu0 %v1550
    %2104 = vmatprep.subr.mxu0 0.0
    %2105 = vmatpush1.msra.mxu0 %v1551
    %2106 = vmatprep.mubr.f32.mxu0 %v1295
    %2107 = vmatmul.mubr.f32.gmra.mrb[0].mxu0 %v1294
    %v2108 = vpop.f32.mrb[0].mxu0
    %v2109 = vadd.f32 %v2039, %v2108
    %v2110 = vpop.f32.mrb[0].mxu0
    %2111 = vdwg.mxu0
    %vm2112 = vcmask 58368
    %v2113 = vsel %vm2112, %v2109, -inf
    %2114 = vmax.xlane.f32.xlu0 %v2113
    %v2115 = vpop.xlane.xlu0 %2114
    %v2116 = vsub.f32 %v2109, %v2115
    %v2117 = vmul.f32 %v2116, 1.442695
    %v2118 = vpow.pop %v2117
    %v2119 = vsel %vm2112, %v2118, 0.0
    %2120 = vadd.xlane.f32.xlu0 %v2119
    %v2121 = vpop.xlane.xlu0 %2120
    %v2122 = vrcp.pop %v2121
    %v2123 = vmul.f32 %v2118, %v2122
    %v2124 = vld [vmem:[#allocation7] sm:$0x3]
    %v2125 = vmul.f32 %v2123, %v2124
    %v2126 = vld [vmem:[#allocation11] sm:$0xff]
    %v2127 = vld [vmem:[#allocation11 + $0x8] sm:$0xff]
    %vm2128 = vcmask 64512
    %v2130 = vsel %vm2128, %v2125, 0
    %2132 = vmatprep.subr.mxu0 %v2127
    %2133 = vmatpush1.msra.mxu0 %v2126
    %2134 = vmatprep.subr.mxu0 0.0
    %2135 = vmatpush1.msra.mxu0 0.0
    %2136 = vmatprep.subr.mxu0 0.0
    %2137 = vmatpush1.msra.mxu0 0.0
    %2138 = vmatprep.subr.mxu0 0.0
    %2139 = vmatpush1.msra.mxu0 0.0
    %2140 = vmatprep.subr.mxu0 0.0
    %2141 = vmatpush1.msra.mxu0 0.0
    %2142 = vmatprep.subr.mxu0 0.0
    %2143 = vmatpush1.msra.mxu0 0.0
    %2144 = vmatprep.subr.mxu0 0.0
    %2145 = vmatpush1.msra.mxu0 0.0
    %2146 = vmatprep.subr.mxu0 0.0
    %2147 = vmatpush1.msra.mxu0 0.0
    %2148 = vmatprep.subr.mxu0 0.0
    %2149 = vmatpush1.msra.mxu0 0.0
    %2150 = vmatprep.subr.mxu0 0.0
    %2151 = vmatpush1.msra.mxu0 0.0
    %2152 = vmatprep.subr.mxu0 0.0
    %2153 = vmatpush1.msra.mxu0 0.0
    %2154 = vmatprep.subr.mxu0 0.0
    %2155 = vmatpush1.msra.mxu0 0.0
    %2156 = vmatprep.subr.mxu0 0.0
    %2157 = vmatpush1.msra.mxu0 0.0
    %2158 = vmatprep.subr.mxu0 0.0
    %2159 = vmatpush1.msra.mxu0 0.0
    %2160 = vmatprep.subr.mxu0 0.0
    %2161 = vmatpush1.msra.mxu0 0.0
    %2162 = vmatprep.subr.mxu0 0.0
    %2163 = vmatpush1.msra.mxu0 0.0
    %2164 = vmatprep.subr.mxu0 0.0
    %2165 = vmatpush1.msra.mxu0 0.0
    %2166 = vmatprep.subr.mxu0 0.0
    %2167 = vmatpush1.msra.mxu0 0.0
    %2168 = vmatprep.subr.mxu0 0.0
    %2169 = vmatpush1.msra.mxu0 0.0
    %2170 = vmatprep.subr.mxu0 0.0
    %2171 = vmatpush1.msra.mxu0 0.0
    %2172 = vmatprep.subr.mxu0 0.0
    %2173 = vmatpush1.msra.mxu0 0.0
    %2174 = vmatprep.subr.mxu0 0.0
    %2175 = vmatpush1.msra.mxu0 0.0
    %2176 = vmatprep.subr.mxu0 0.0
    %2177 = vmatpush1.msra.mxu0 0.0
    %2178 = vmatprep.subr.mxu0 0.0
    %2179 = vmatpush1.msra.mxu0 0.0
    %2180 = vmatprep.subr.mxu0 0.0
    %2181 = vmatpush1.msra.mxu0 0.0
    %2182 = vmatprep.subr.mxu0 0.0
    %2183 = vmatpush1.msra.mxu0 0.0
    %2184 = vmatprep.subr.mxu0 0.0
    %2185 = vmatpush1.msra.mxu0 0.0
    %2186 = vmatprep.subr.mxu0 0.0
    %2187 = vmatpush1.msra.mxu0 0.0
    %2188 = vmatprep.subr.mxu0 0.0
    %2189 = vmatpush1.msra.mxu0 0.0
    %2190 = vmatprep.subr.mxu0 0.0
    %2191 = vmatpush1.msra.mxu0 0.0
    %2192 = vmatprep.subr.mxu0 0.0
    %2193 = vmatpush1.msra.mxu0 0.0
    %2194 = vmatprep.subr.mxu0 0.0
    %2195 = vmatpush1.msra.mxu0 0.0
    %2196 = vmatprep.mubr.f32.mxu0 0.0
    %2197 = vmatmul.mubr.f32.gmra.mrb[0].mxu0 %v2130
    %v2198 = vpop.f32.mrb[0].mxu0
    %v2199 = vadd.f32 0.0, %v2198
    %v2200 = vpop.f32.mrb[0].mxu0
    %v2201 = vadd.f32 0.0, %v2200
    %2202 = vdwg.mxu0
    %v2205 = vcombine.low %v2199, %v2201
    %v2207 = vunpack.c.l.s4 1983009808
    %v2208 = vunpack.c.0.s8 %v2207
    %v2209 = vlaneseq
    %v2210 = vshrl.u32 %v2209, 7
    %v2211 = vsub.s32 %v2208, %v2210
    %v2212 = vrot.slane %v2205, %v2211
    %v2214 = vmul.f32 %v104, %v2212
    %v2215 = vld [vmem:[%s7] sm:$0xff]
    %v2216 = vld [vmem:[%s7 + $0x8] sm:$0xff]
    %v2217 = vld [vmem:[%s7 + $0x10] sm:$0xff]
    %v2218 = vld [vmem:[%s7 + $0x18] sm:$0xff]
    %v2219 = vld [vmem:[%s7 + $0x20] sm:$0xff]
    %v2220 = vld [vmem:[%s7 + $0x28] sm:$0xff]
    %v2221 = vld [vmem:[%s7 + $0x30] sm:$0xff]
    %v2222 = vld [vmem:[%s7 + $0x38] sm:$0xff]
    %v2223 = vld [vmem:[%s7 + $0x40] sm:$0xff]
    %v2224 = vld [vmem:[%s7 + $0x48] sm:$0xff]
    %v2225 = vld [vmem:[%s7 + $0x50] sm:$0xff]
    %v2226 = vld [vmem:[%s7 + $0x58] sm:$0xff]
    %v2227 = vld [vmem:[%s7 + $0x60] sm:$0xff]
    %v2228 = vld [vmem:[%s7 + $0x68] sm:$0xff]
    %v2229 = vld [vmem:[%s7 + $0x70] sm:$0xff]
    %v2230 = vld [vmem:[%s7 + $0x78] sm:$0xff]
    %v2231 = vld [vmem:[%s7 + $0x80] sm:$0xff]
    %v2232 = vld [vmem:[%s7 + $0x88] sm:$0xff]
    %v2233 = vld [vmem:[%s7 + $0x90] sm:$0xff]
    %v2234 = vld [vmem:[%s7 + $0x98] sm:$0xff]
    %v2235 = vld [vmem:[%s7 + $0xa0] sm:$0xff]
    %v2236 = vld [vmem:[%s7 + $0xa8] sm:$0xff]
    %v2237 = vld [vmem:[%s7 + $0xb0] sm:$0xff]
    %v2238 = vld [vmem:[%s7 + $0xb8] sm:$0xff]
    %v2239 = vld [vmem:[%s7 + $0xc0] sm:$0xff]
    %v2240 = vld [vmem:[%s7 + $0xc8] sm:$0xff]
    %v2241 = vld [vmem:[%s7 + $0xd0] sm:$0xff]
    %v2242 = vld [vmem:[%s7 + $0xd8] sm:$0xff]
    %v2243 = vld [vmem:[%s7 + $0xe0] sm:$0xff]
    %v2244 = vld [vmem:[%s7 + $0xe8] sm:$0xff]
    %v2245 = vld [vmem:[%s7 + $0xf0] sm:$0xff]
    %v2246 = vld [vmem:[%s7 + $0xf8] sm:$0xff]
    %v2249 = vunpack.c.l.s4 1983009808
    %v2250 = vunpack.c.0.s8 %v2249
    %v2251 = vlaneseq
    %v2252 = vshrl.u32 %v2251, 7
    %v2253 = vsub.s32 %v2250, %v2252
    %v2254 = vrot.slane %v2214, %v2253
    %v2255 = vcombine.high %v2254, %v2254
    %2258 = vmatprep.subr.mxu0 0.0
    %2259 = vmatpush1.msra.mxu0 %v2215
    %2260 = vmatprep.subr.mxu0 0.0
    %2261 = vmatpush1.msra.mxu0 %v2216
    %2262 = vmatprep.subr.mxu0 0.0
    %2263 = vmatpush1.msra.mxu0 %v2217
    %2264 = vmatprep.subr.mxu0 0.0
    %2265 = vmatpush1.msra.mxu0 %v2218
    %2266 = vmatprep.subr.mxu0 0.0
    %2267 = vmatpush1.msra.mxu0 %v2219
    %2268 = vmatprep.subr.mxu0 0.0
    %2269 = vmatpush1.msra.mxu0 %v2220
    %2270 = vmatprep.subr.mxu0 0.0
    %2271 = vmatpush1.msra.mxu0 %v2221
    %2272 = vmatprep.subr.mxu0 0.0
    %2273 = vmatpush1.msra.mxu0 %v2222
    %2274 = vmatprep.subr.mxu0 0.0
    %2275 = vmatpush1.msra.mxu0 %v2223
    %2276 = vmatprep.subr.mxu0 0.0
    %2277 = vmatpush1.msra.mxu0 %v2224
    %2278 = vmatprep.subr.mxu0 0.0
    %2279 = vmatpush1.msra.mxu0 %v2225
    %2280 = vmatprep.subr.mxu0 0.0
    %2281 = vmatpush1.msra.mxu0 %v2226
    %2282 = vmatprep.subr.mxu0 0.0
    %2283 = vmatpush1.msra.mxu0 %v2227
    %2284 = vmatprep.subr.mxu0 0.0
    %2285 = vmatpush1.msra.mxu0 %v2228
    %2286 = vmatprep.subr.mxu0 0.0
    %2287 = vmatpush1.msra.mxu0 %v2229
    %2288 = vmatprep.subr.mxu0 0.0
    %2289 = vmatpush1.msra.mxu0 %v2230
    %2290 = vmatprep.subr.mxu0 0.0
    %2291 = vmatpush1.msra.mxu0 %v2231
    %2292 = vmatprep.subr.mxu0 0.0
    %2293 = vmatpush1.msra.mxu0 %v2232
    %2294 = vmatprep.subr.mxu0 0.0
    %2295 = vmatpush1.msra.mxu0 %v2233
    %2296 = vmatprep.subr.mxu0 0.0
    %2297 = vmatpush1.msra.mxu0 %v2234
    %2298 = vmatprep.subr.mxu0 0.0
    %2299 = vmatpush1.msra.mxu0 %v2235
    %2300 = vmatprep.subr.mxu0 0.0
    %2301 = vmatpush1.msra.mxu0 %v2236
    %2302 = vmatprep.subr.mxu0 0.0
    %2303 = vmatpush1.msra.mxu0 %v2237
    %2304 = vmatprep.subr.mxu0 0.0
    %2305 = vmatpush1.msra.mxu0 %v2238
    %2306 = vmatprep.subr.mxu0 0.0
    %2307 = vmatpush1.msra.mxu0 %v2239
    %2308 = vmatprep.subr.mxu0 0.0
    %2309 = vmatpush1.msra.mxu0 %v2240
    %2310 = vmatprep.subr.mxu0 0.0
    %2311 = vmatpush1.msra.mxu0 %v2241
    %2312 = vmatprep.subr.mxu0 0.0
    %2313 = vmatpush1.msra.mxu0 %v2242
    %2314 = vmatprep.subr.mxu0 0.0
    %2315 = vmatpush1.msra.mxu0 %v2243
    %2316 = vmatprep.subr.mxu0 0.0
    %2317 = vmatpush1.msra.mxu0 %v2244
    %2318 = vmatprep.subr.mxu0 0.0
    %2319 = vmatpush1.msra.mxu0 %v2245
    %2320 = vmatprep.subr.mxu0 0.0
    %2321 = vmatpush1.msra.mxu0 %v2246
    %2322 = vmatprep.mubr.f32.mxu0 %v2255
    %2323 = vmatmul.mubr.f32.gmra.mrb[0].mxu0 %v2254
    %v2324 = vpop.f32.mrb[0].mxu0
    %v2325 = vadd.f32 0.0, %v2324
    %v2326 = vpop.f32.mrb[0].mxu0
    %2327 = vdwg.mxu0
    %vm2328 = vcmask 254976
    %2329 = vst.msk [vmem:[#allocation13] sm:$0x3] %vm2328, %v2325
    // Predicated region
    $region58: #{tpu_custom_call.1} parent=1 // pred_check
      _
    $region59: #{tpu_custom_call.1} parent=1 // pred_check_branch
      %2331 = sbr.rel (0) target = $region61
    $region60: #{tpu_custom_call.1} parent=1 // pred_region
      %s2333 = ssub.s32 32, 32
      %2334 = vsyncadd [#allocation4], %s2333
      %s2336 = sshll.u32 [#allocation13], 4
      %s2337 = int_to_ptr.vmem [resolvable:$true] %s2336
      %2339 = dma.vmem_to_hbm [thread:$0]  %s2337, 32, %s8, [#allocation4]
    $region61: #{tpu_custom_call.1} parent=1 // pred_fallthru
      _
    // Predicated region
    $region62: #{tpu_custom_call.1} parent=1 // pred_check
      _
    $region63: #{tpu_custom_call.1} parent=1 // pred_check_branch
      %2341 = sbr.rel (0) target = $region65
    $region64: #{tpu_custom_call.1} parent=1 // pred_region
      %2342 = dma.done [#allocation4], 32
    $region65: #{tpu_custom_call.1} parent=1 // pred_fallthru
      _
    %2343 = vsyncpa [#allocation3], 1
    %2344 = vsyncpa [#allocation6], 1
    %2345 = vsyncpa [#allocation9], 1
    %2346 = vsyncpa [#allocation12], 1
    %2347 = vsyncpa [#allocation4], 1

// kernel: tpu_custom_call.1
$region0: #{tpu_custom_call.1}
  #allocation0 [shape = 'u32[]', space=smem, size = 0x4, offset = 0x4, fixed_abs, tag = 'smem constant byte address 0x4 - core index']
  #allocation1 [shape = 'u32[144,128]{1,0:T(1,128)}', space=vmem, size = 0x12000, scoped, tag = 'internal scratch']
  %s0 = inlined_call_operand.hbm [shape: f32[2,256], index: 0, kind: input, shape index: {}]
  %s1 = inlined_call_operand.hbm [shape: f32[2,32], index: 1, kind: input, shape index: {}]
  %s2 = inlined_call_operand.hbm [shape: f32[2,8], index: 2, kind: input, shape index: {}]
  %s3 = inlined_call_operand.hbm [shape: f32[32,256], index: 3, kind: input, shape index: {}]
  %s4 = inlined_call_operand.hbm [shape: f32[256,2048], index: 4, kind: input, shape index: {}]
  %s5 = inlined_call_operand.vmem [shape: f32[2048,8], index: 5, kind: input, shape index: {}]
  %s6 = inlined_call_operand.hbm [shape: f32[8,256], index: 6, kind: input, shape index: {}]
  %s7 = inlined_call_operand.vmem [shape: f32[256,32], index: 7, kind: input, shape index: {}]
  %s8 = inlined_call_operand.hbm [shape: f32[2,32], index: 8, kind: output, shape index: {}]
  %s9 = sld [smem:[#allocation0]]
  $region66: #{tpu_custom_call.1} parent=0
    _
  %s11 = ssub.s32 1, %s9
  %s12 = scalar_select 0, %s11, %s9
  $region1: #{tpu_custom_call.1} parent=0
    #allocation2 [shape = 'u8[2048]{0}', space=vmem, size = 0x800, scoped, tag = 'input window, operand 0, single buffered']
    #allocation3 [shape = 's32[1]{0}', space=sflag, size = 0x4, scoped, tag = 'scoped memory for tpu_custom_call.1']
    #allocation4 [shape = 's32[1]{0}', space=sflag, size = 0x4, scoped, tag = 'scoped memory for tpu_custom_call.1']
    #allocation5 [shape = 'u8[1024]{0}', space=vmem, size = 0x400, scoped, tag = 'input window, operand 1, single buffered']
    #allocation6 [shape = 's32[1]{0}', space=sflag, size = 0x4, scoped, tag = 'scoped memory for tpu_custom_call.1']
    #allocation7 [shape = 'u8[1024]{0}', space=vmem, size = 0x400, scoped, tag = 'input window, operand 2, single buffered']
    #allocation8 [shape = 'u8[32768]{0}', space=vmem, size = 0x8000, scoped, tag = 'input window, operand 3, single buffered']
    #allocation9 [shape = 's32[1]{0}', space=sflag, size = 0x4, scoped, tag = 'scoped memory for tpu_custom_call.1']
    #allocation10 [shape = 'u8[2097152]{0}', space=vmem, size = 0x200000, scoped, tag = 'input window, operand 4, single buffered']
    #allocation11 [shape = 'u8[8192]{0}', space=vmem, size = 0x2000, scoped, tag = 'input window, operand 6, single buffered']
    #allocation12 [shape = 's32[1]{0}', space=sflag, size = 0x4, scoped, tag = 'scoped memory for tpu_custom_call.1']
    #allocation13 [shape = 'u8[1024]{0}', space=vmem, size = 0x400, scoped, tag = 'output window, operand 0, single buffered']
    %13 = vsyncpa [#allocation3], 0
    %14 = vsyncpa [#allocation6], 0
    %15 = vsyncpa [#allocation9], 0
    %16 = vsyncpa [#allocation12], 0
    %17 = vsyncpa [#allocation4], 0
    // Predicated region
    $region2: #{tpu_custom_call.1} parent=1 // pred_check
      _
    $region3: #{tpu_custom_call.1} parent=1 // pred_check_branch
      %19 = sbr.rel (0) target = $region5
    $region4: #{tpu_custom_call.1} parent=1 // pred_region
      %s21 = ssub.s32 64, 64
      %22 = vsyncadd [#allocation3], %s21
      %s24 = sshll.u32 [#allocation2], 4
      %s25 = int_to_ptr.vmem [resolvable:$true] %s24
      %27 = dma.hbm_to_vmem [thread:$0]  %s0, 64, %s25, [#allocation3]
    $region5: #{tpu_custom_call.1} parent=1 // pred_fallthru
      _
    // Predicated region
    $region6: #{tpu_custom_call.1} parent=1 // pred_check
      _
    $region7: #{tpu_custom_call.1} parent=1 // pred_check_branch
      %29 = sbr.rel (0) target = $region9
    $region8: #{tpu_custom_call.1} parent=1 // pred_region
      %s31 = ssub.s32 32, 32
      %32 = vsyncadd [#allocation6], %s31
      %s34 = sshll.u32 [#allocation5], 4
      %s35 = int_to_ptr.vmem [resolvable:$true] %s34
      %37 = dma.hbm_to_vmem [thread:$0]  %s1, 32, %s35, [#allocation6]
    $region9: #{tpu_custom_call.1} parent=1 // pred_fallthru
      _
    // Predicated region
    $region10: #{tpu_custom_call.1} parent=1 // pred_check
      _
    $region11: #{tpu_custom_call.1} parent=1 // pred_check_branch
      %39 = sbr.rel (0) target = $region13
    $region12: #{tpu_custom_call.1} parent=1 // pred_region
      %s41 = ssub.s32 32, 32
      %42 = vsyncadd [#allocation6], %s41
      %s44 = sshll.u32 [#allocation7], 4
      %s45 = int_to_ptr.vmem [resolvable:$true] %s44
      %47 = dma.hbm_to_vmem [thread:$0]  %s2, 32, %s45, [#allocation6]
    $region13: #{tpu_custom_call.1} parent=1 // pred_fallthru
      _
    // Predicated region
    $region14: #{tpu_custom_call.1} parent=1 // pred_check
      _
    $region15: #{tpu_custom_call.1} parent=1 // pred_check_branch
      %49 = sbr.rel (0) target = $region17
    $region16: #{tpu_custom_call.1} parent=1 // pred_region
      %s51 = ssub.s32 1024, 1024
      %52 = vsyncadd [#allocation9], %s51
      %s53 = sshll.u32 [#allocation8], 4
      %s54 = int_to_ptr.vmem [resolvable:$true] %s53
      %59 = dma.hbm_to_vmem [thread:$0]  %s3, 1024, %s54, [#allocation9], 256, 256, 16
    $region17: #{tpu_custom_call.1} parent=1 // pred_fallthru
      _
    // Predicated region
    $region18: #{tpu_custom_call.1} parent=1 // pred_check
      _
    $region19: #{tpu_custom_call.1} parent=1 // pred_check_branch
      %61 = sbr.rel (0) target = $region21
    $region20: #{tpu_custom_call.1} parent=1 // pred_region
      %s63 = ssub.s32 65536, 65536
      %64 = vsyncadd [#allocation9], %s63
      %s65 = sshll.u32 [#allocation10], 4
      %s66 = int_to_ptr.vmem [resolvable:$true] %s65
      %71 = dma.hbm_to_vmem [thread:$0]  %s4, 65536, %s66, [#allocation9], 2048, 2048, 128
    $region21: #{tpu_custom_call.1} parent=1 // pred_fallthru
      _
    // Predicated region
    $region22: #{tpu_custom_call.1} parent=1 // pred_check
      _
    $region23: #{tpu_custom_call.1} parent=1 // pred_check_branch
      %73 = sbr.rel (0) target = $region25
    $region24: #{tpu_custom_call.1} parent=1 // pred_region
      _
    $region25: #{tpu_custom_call.1} parent=1 // pred_fallthru
      _
    // Predicated region
    $region26: #{tpu_custom_call.1} parent=1 // pred_check
      _
    $region27: #{tpu_custom_call.1} parent=1 // pred_check_branch
      %75 = sbr.rel (0) target = $region29
    $region28: #{tpu_custom_call.1} parent=1 // pred_region
      %s77 = ssub.s32 256, 256
      %78 = vsyncadd [#allocation12], %s77
      %s80 = sshll.u32 [#allocation11], 4
      %s81 = int_to_ptr.vmem [resolvable:$true] %s80
      %83 = dma.hbm_to_vmem [thread:$0]  %s6, 256, %s81, [#allocation12]
    $region29: #{tpu_custom_call.1} parent=1 // pred_fallthru
      _
    // Predicated region
    $region30: #{tpu_custom_call.1} parent=1 // pred_check
      _
    $region31: #{tpu_custom_call.1} parent=1 // pred_check_branch
      %85 = sbr.rel (0) target = $region33
    $region32: #{tpu_custom_call.1} parent=1 // pred_region
      _
    $region33: #{tpu_custom_call.1} parent=1 // pred_fallthru
      _
    // Predicated region
    $region34: #{tpu_custom_call.1} parent=1 // pred_check
      _
    $region35: #{tpu_custom_call.1} parent=1 // pred_check_branch
      %87 = sbr.rel (0) target = $region37
    $region36: #{tpu_custom_call.1} parent=1 // pred_region
      %88 = dma.done [#allocation3], 64
    $region37: #{tpu_custom_call.1} parent=1 // pred_fallthru
      _
    // Predicated region
    $region38: #{tpu_custom_call.1} parent=1 // pred_check
      _
    $region39: #{tpu_custom_call.1} parent=1 // pred_check_branch
      %90 = sbr.rel (0) target = $region41
    $region40: #{tpu_custom_call.1} parent=1 // pred_region
      %91 = dma.done [#allocation6], 32
    $region41: #{tpu_custom_call.1} parent=1 // pred_fallthru
      _
    // Predicated region
    $region42: #{tpu_custom_call.1} parent=1 // pred_check
      _
    $region43: #{tpu_custom_call.1} parent=1 // pred_check_branch
      %93 = sbr.rel (0) target = $region45
    $region44: #{tpu_custom_call.1} parent=1 // pred_region
      %94 = dma.done [#allocation6], 32
    $region45: #{tpu_custom_call.1} parent=1 // pred_fallthru
      _
    // Predicated region
    $region46: #{tpu_custom_call.1} parent=1 // pred_check
      _
    $region47: #{tpu_custom_call.1} parent=1 // pred_check_branch
      %96 = sbr.rel (0) target = $region49
    $region48: #{tpu_custom_call.1} parent=1 // pred_region
      %97 = dma.done [#allocation9], 1024
    $region49: #{tpu_custom_call.1} parent=1 // pred_fallthru
      _
    // Predicated region
    $region50: #{tpu_custom_call.1} parent=1 // pred_check
      _
    $region51: #{tpu_custom_call.1} parent=1 // pred_check_branch
      %99 = sbr.rel (0) target = $region53
    $region52: #{tpu_custom_call.1} parent=1 // pred_region
      %100 = dma.done [#allocation9], 65536
    $region53: #{tpu_custom_call.1} parent=1 // pred_fallthru
      _
    // Predicated region
    $region54: #{tpu_custom_call.1} parent=1 // pred_check
      _
    $region55: #{tpu_custom_call.1} parent=1 // pred_check_branch
      %102 = sbr.rel (0) target = $region57
    $region56: #{tpu_custom_call.1} parent=1 // pred_region
      %103 = dma.done [#allocation12], 256
    $region57: #{tpu_custom_call.1} parent=1 // pred_fallthru
      _
    %v104 = vld [vmem:[#allocation2] sm:$0xf]
    %v105 = vld [vmem:[#allocation10] sm:$0xff]
    %v106 = vld [vmem:[#allocation10 + $0x8] sm:$0xff]
    %v107 = vld [vmem:[#allocation10 + $0x10] sm:$0xff]
    %v108 = vld [vmem:[#allocation10 + $0x18] sm:$0xff]
    %v109 = vld [vmem:[#allocation10 + $0x20] sm:$0xff]
    %v110 = vld [vmem:[#allocation10 + $0x28] sm:$0xff]
    %v111 = vld [vmem:[#allocation10 + $0x30] sm:$0xff]
    %v112 = vld [vmem:[#allocation10 + $0x38] sm:$0xff]
    %v113 = vld [vmem:[#allocation10 + $0x40] sm:$0xff]
    %v114 = vld [vmem:[#allocation10 + $0x48] sm:$0xff]
    %v115 = vld [vmem:[#allocation10 + $0x50] sm:$0xff]
    %v116 = vld [vmem:[#allocation10 + $0x58] sm:$0xff]
    %v117 = vld [vmem:[#allocation10 + $0x60] sm:$0xff]
    %v118 = vld [vmem:[#allocation10 + $0x68] sm:$0xff]
    %v119 = vld [vmem:[#allocation10 + $0x70] sm:$0xff]
    %v120 = vld [vmem:[#allocation10 + $0x78] sm:$0xff]
    %v121 = vld [vmem:[#allocation10 + $0x80] sm:$0xff]
    %v122 = vld [vmem:[#allocation10 + $0x88] sm:$0xff]
    %v123 = vld [vmem:[#allocation10 + $0x90] sm:$0xff]
    %v124 = vld [vmem:[#allocation10 + $0x98] sm:$0xff]
    %v125 = vld [vmem:[#allocation10 + $0xa0] sm:$0xff]
    %v126 = vld [vmem:[#allocation10 + $0xa8] sm:$0xff]
    %v127 = vld [vmem:[#allocation10 + $0xb0] sm:$0xff]
    %v128 = vld [vmem:[#allocation10 + $0xb8] sm:$0xff]
    %v129 = vld [vmem:[#allocation10 + $0xc0] sm:$0xff]
    %v130 = vld [vmem:[#allocation10 + $0xc8] sm:$0xff]
    %v131 = vld [vmem:[#allocation10 + $0xd0] sm:$0xff]
    %v132 = vld [vmem:[#allocation10 + $0xd8] sm:$0xff]
    %v133 = vld [vmem:[#allocation10 + $0xe0] sm:$0xff]
    %v134 = vld [vmem:[#allocation10 + $0xe8] sm:$0xff]
    %v135 = vld [vmem:[#allocation10 + $0xf0] sm:$0xff]
    %v136 = vld [vmem:[#allocation10 + $0xf8] sm:$0xff]
    %v137 = vld [vmem:[#allocation10 + $0x100] sm:$0xff]
    %v138 = vld [vmem:[#allocation10 + $0x108] sm:$0xff]
    %v139 = vld [vmem:[#allocation10 + $0x110] sm:$0xff]
    %v140 = vld [vmem:[#allocation10 + $0x118] sm:$0xff]
    %v141 = vld [vmem:[#allocation10 + $0x120] sm:$0xff]
    %v142 = vld [vmem:[#allocation10 + $0x128] sm:$0xff]
    %v143 = vld [vmem:[#allocation10 + $0x130] sm:$0xff]
    %v144 = vld [vmem:[#allocation10 + $0x138] sm:$0xff]
    %v145 = vld [vmem:[#allocation10 + $0x140] sm:$0xff]
    %v146 = vld [vmem:[#allocation10 + $0x148] sm:$0xff]
    %v147 = vld [vmem:[#allocation10 + $0x150] sm:$0xff]
    %v148 = vld [vmem:[#allocation10 + $0x158] sm:$0xff]
    %v149 = vld [vmem:[#allocation10 + $0x160] sm:$0xff]
    %v150 = vld [vmem:[#allocation10 + $0x168] sm:$0xff]
    %v151 = vld [vmem:[#allocation10 + $0x170] sm:$0xff]
    %v152 = vld [vmem:[#allocation10 + $0x178] sm:$0xff]
    %v153 = vld [vmem:[#allocation10 + $0x180] sm:$0xff]
    %v154 = vld [vmem:[#allocation10 + $0x188] sm:$0xff]
    %v155 = vld [vmem:[#allocation10 + $0x190] sm:$0xff]
    %v156 = vld [vmem:[#allocation10 + $0x198] sm:$0xff]
    %v157 = vld [vmem:[#allocation10 + $0x1a0] sm:$0xff]
    %v158 = vld [vmem:[#allocation10 + $0x1a8] sm:$0xff]
    %v159 = vld [vmem:[#allocation10 + $0x1b0] sm:$0xff]
    %v160 = vld [vmem:[#allocation10 + $0x1b8] sm:$0xff]
    %v161 = vld [vmem:[#allocation10 + $0x1c0] sm:$0xff]
    %v162 = vld [vmem:[#allocation10 + $0x1c8] sm:$0xff]
    %v163 = vld [vmem:[#allocation10 + $0x1d0] sm:$0xff]
    %v164 = vld [vmem:[#allocation10 + $0x1d8] sm:$0xff]
    %v165 = vld [vmem:[#allocation10 + $0x1e0] sm:$0xff]
    %v166 = vld [vmem:[#allocation10 + $0x1e8] sm:$0xff]
    %v167 = vld [vmem:[#allocation10 + $0x1f0] sm:$0xff]
    %v168 = vld [vmem:[#allocation10 + $0x1f8] sm:$0xff]
    %v169 = vld [vmem:[#allocation10 + $0x200] sm:$0xff]
    %v170 = vld [vmem:[#allocation10 + $0x208] sm:$0xff]
    %v171 = vld [vmem:[#allocation10 + $0x210] sm:$0xff]
    %v172 = vld [vmem:[#allocation10 + $0x218] sm:$0xff]
    %v173 = vld [vmem:[#allocation10 + $0x220] sm:$0xff]
    %v174 = vld [vmem:[#allocation10 + $0x228] sm:$0xff]
    %v175 = vld [vmem:[#allocation10 + $0x230] sm:$0xff]
    %v176 = vld [vmem:[#allocation10 + $0x238] sm:$0xff]
    %v177 = vld [vmem:[#allocation10 + $0x240] sm:$0xff]
    %v178 = vld [vmem:[#allocation10 + $0x248] sm:$0xff]
    %v179 = vld [vmem:[#allocation10 + $0x250] sm:$0xff]
    %v180 = vld [vmem:[#allocation10 + $0x258] sm:$0xff]
    %v181 = vld [vmem:[#allocation10 + $0x260] sm:$0xff]
    %v182 = vld [vmem:[#allocation10 + $0x268] sm:$0xff]
    %v183 = vld [vmem:[#allocation10 + $0x270] sm:$0xff]
    %v184 = vld [vmem:[#allocation10 + $0x278] sm:$0xff]
    %v185 = vld [vmem:[#allocation10 + $0x280] sm:$0xff]
    %v186 = vld [vmem:[#allocation10 + $0x288] sm:$0xff]
    %v187 = vld [vmem:[#allocation10 + $0x290] sm:$0xff]
    %v188 = vld [vmem:[#allocation10 + $0x298] sm:$0xff]
    %v189 = vld [vmem:[#allocation10 + $0x2a0] sm:$0xff]
    %v190 = vld [vmem:[#allocation10 + $0x2a8] sm:$0xff]
    %v191 = vld [vmem:[#allocation10 + $0x2b0] sm:$0xff]
    %v192 = vld [vmem:[#allocation10 + $0x2b8] sm:$0xff]
    %v193 = vld [vmem:[#allocation10 + $0x2c0] sm:$0xff]
    %v194 = vld [vmem:[#allocation10 + $0x2c8] sm:$0xff]
    %v195 = vld [vmem:[#allocation10 + $0x2d0] sm:$0xff]
    %v196 = vld [vmem:[#allocation10 + $0x2d8] sm:$0xff]
    %v197 = vld [vmem:[#allocation10 + $0x2e0] sm:$0xff]
    %v198 = vld [vmem:[#allocation10 + $0x2e8] sm:$0xff]
    %v199 = vld [vmem:[#allocation10 + $0x2f0] sm:$0xff]
    %v200 = vld [vmem:[#allocation10 + $0x2f8] sm:$0xff]
    %v201 = vld [vmem:[#allocation10 + $0x300] sm:$0xff]
    %v202 = vld [vmem:[#allocation10 + $0x308] sm:$0xff]
    %v203 = vld [vmem:[#allocation10 + $0x310] sm:$0xff]
    %v204 = vld [vmem:[#allocation10 + $0x318] sm:$0xff]
    %v205 = vld [vmem:[#allocation10 + $0x320] sm:$0xff]
    %v206 = vld [vmem:[#allocation10 + $0x328] sm:$0xff]
    %v207 = vld [vmem:[#allocation10 + $0x330] sm:$0xff]
    %v208 = vld [vmem:[#allocation10 + $0x338] sm:$0xff]
    %v209 = vld [vmem:[#allocation10 + $0x340] sm:$0xff]
    %v210 = vld [vmem:[#allocation10 + $0x348] sm:$0xff]
    %v211 = vld [vmem:[#allocation10 + $0x350] sm:$0xff]
    %v212 = vld [vmem:[#allocation10 + $0x358] sm:$0xff]
    %v213 = vld [vmem:[#allocation10 + $0x360] sm:$0xff]
    %v214 = vld [vmem:[#allocation10 + $0x368] sm:$0xff]
    %v215 = vld [vmem:[#allocation10 + $0x370] sm:$0xff]
    %v216 = vld [vmem:[#allocation10 + $0x378] sm:$0xff]
    %v217 = vld [vmem:[#allocation10 + $0x380] sm:$0xff]
    %v218 = vld [vmem:[#allocation10 + $0x388] sm:$0xff]
    %v219 = vld [vmem:[#allocation10 + $0x390] sm:$0xff]
    %v220 = vld [vmem:[#allocation10 + $0x398] sm:$0xff]
    %v221 = vld [vmem:[#allocation10 + $0x3a0] sm:$0xff]
    %v222 = vld [vmem:[#allocation10 + $0x3a8] sm:$0xff]
    %v223 = vld [vmem:[#allocation10 + $0x3b0] sm:$0xff]
    %v224 = vld [vmem:[#allocation10 + $0x3b8] sm:$0xff]
    %v225 = vld [vmem:[#allocation10 + $0x3c0] sm:$0xff]
    %v226 = vld [vmem:[#allocation10 + $0x3c8] sm:$0xff]
    %v227 = vld [vmem:[#allocation10 + $0x3d0] sm:$0xff]
    %v228 = vld [vmem:[#allocation10 + $0x3d8] sm:$0xff]
    %v229 = vld [vmem:[#allocation10 + $0x3e0] sm:$0xff]
    %v230 = vld [vmem:[#allocation10 + $0x3e8] sm:$0xff]
    %v231 = vld [vmem:[#allocation10 + $0x3f0] sm:$0xff]
    %v232 = vld [vmem:[#allocation10 + $0x3f8] sm:$0xff]
    %v233 = vld [vmem:[#allocation10 + $0x400] sm:$0xff]
    %v234 = vld [vmem:[#allocation10 + $0x408] sm:$0xff]
    %v235 = vld [vmem:[#allocation10 + $0x410] sm:$0xff]
    %v236 = vld [vmem:[#allocation10 + $0x418] sm:$0xff]
    %v237 = vld [vmem:[#allocation10 + $0x420] sm:$0xff]
    %v238 = vld [vmem:[#allocation10 + $0x428] sm:$0xff]
    %v239 = vld [vmem:[#allocation10 + $0x430] sm:$0xff]
    %v240 = vld [vmem:[#allocation10 + $0x438] sm:$0xff]
    %v241 = vld [vmem:[#allocation10 + $0x440] sm:$0xff]
    %v242 = vld [vmem:[#allocation10 + $0x448] sm:$0xff]
    %v243 = vld [vmem:[#allocation10 + $0x450] sm:$0xff]
    %v244 = vld [vmem:[#allocation10 + $0x458] sm:$0xff]
    %v245 = vld [vmem:[#allocation10 + $0x460] sm:$0xff]
    %v246 = vld [vmem:[#allocation10 + $0x468] sm:$0xff]
    %v247 = vld [vmem:[#allocation10 + $0x470] sm:$0xff]
    %v248 = vld [vmem:[#allocation10 + $0x478] sm:$0xff]
    %v249 = vld [vmem:[#allocation10 + $0x480] sm:$0xff]
    %v250 = vld [vmem:[#allocation10 + $0x488] sm:$0xff]
    %v251 = vld [vmem:[#allocation10 + $0x490] sm:$0xff]
    %v252 = vld [vmem:[#allocation10 + $0x498] sm:$0xff]
    %v253 = vld [vmem:[#allocation10 + $0x4a0] sm:$0xff]
    %v254 = vld [vmem:[#allocation10 + $0x4a8] sm:$0xff]
    %v255 = vld [vmem:[#allocation10 + $0x4b0] sm:$0xff]
    %v256 = vld [vmem:[#allocation10 + $0x4b8] sm:$0xff]
    %v257 = vld [vmem:[#allocation10 + $0x4c0] sm:$0xff]
    %v258 = vld [vmem:[#allocation10 + $0x4c8] sm:$0xff]
    %v259 = vld [vmem:[#allocation10 + $0x4d0] sm:$0xff]
    %v260 = vld [vmem:[#allocation10 + $0x4d8] sm:$0xff]
    %v261 = vld [vmem:[#allocation10 + $0x4e0] sm:$0xff]
    %v262 = vld [vmem:[#allocation10 + $0x4e8] sm:$0xff]
    %v263 = vld [vmem:[#allocation10 + $0x4f0] sm:$0xff]
    %v264 = vld [vmem:[#allocation10 + $0x4f8] sm:$0xff]
    %v265 = vld [vmem:[#allocation10 + $0x500] sm:$0xff]
    %v266 = vld [vmem:[#allocation10 + $0x508] sm:$0xff]
    %v267 = vld [vmem:[#allocation10 + $0x510] sm:$0xff]
    %v268 = vld [vmem:[#allocation10 + $0x518] sm:$0xff]
    %v269 = vld [vmem:[#allocation10 + $0x520] sm:$0xff]
    %v270 = vld [vmem:[#allocation10 + $0x528] sm:$0xff]
    %v271 = vld [vmem:[#allocation10 + $0x530] sm:$0xff]
    %v272 = vld [vmem:[#allocation10 + $0x538] sm:$0xff]
    %v273 = vld [vmem:[#allocation10 + $0x540] sm:$0xff]
    %v274 = vld [vmem:[#allocation10 + $0x548] sm:$0xff]
    %v275 = vld [vmem:[#allocation10 + $0x550] sm:$0xff]
    %v276 = vld [vmem:[#allocation10 + $0x558] sm:$0xff]
    %v277 = vld [vmem:[#allocation10 + $0x560] sm:$0xff]
    %v278 = vld [vmem:[#allocation10 + $0x568] sm:$0xff]
    %v279 = vld [vmem:[#allocation10 + $0x570] sm:$0xff]
    %v280 = vld [vmem:[#allocation10 + $0x578] sm:$0xff]
    %v281 = vld [vmem:[#allocation10 + $0x580] sm:$0xff]
    %v282 = vld [vmem:[#allocation10 + $0x588] sm:$0xff]
    %v283 = vld [vmem:[#allocation10 + $0x590] sm:$0xff]
    %v284 = vld [vmem:[#allocation10 + $0x598] sm:$0xff]
    %v285 = vld [vmem:[#allocation10 + $0x5a0] sm:$0xff]
    %v286 = vld [vmem:[#allocation10 + $0x5a8] sm:$0xff]
    %v287 = vld [vmem:[#allocation10 + $0x5b0] sm:$0xff]
    %v288 = vld [vmem:[#allocation10 + $0x5b8] sm:$0xff]
    %v289 = vld [vmem:[#allocation10 + $0x5c0] sm:$0xff]
    %v290 = vld [vmem:[#allocation10 + $0x5c8] sm:$0xff]
    %v291 = vld [vmem:[#allocation10 + $0x5d0] sm:$0xff]
    %v292 = vld [vmem:[#allocation10 + $0x5d8] sm:$0xff]
    %v293 = vld [vmem:[#allocation10 + $0x5e0] sm:$0xff]
    %v294 = vld [vmem:[#allocation10 + $0x5e8] sm:$0xff]
    %v295 = vld [vmem:[#allocation10 + $0x5f0] sm:$0xff]
    %v296 = vld [vmem:[#allocation10 + $0x5f8] sm:$0xff]
    %v297 = vld [vmem:[#allocation10 + $0x600] sm:$0xff]
    %v298 = vld [vmem:[#allocation10 + $0x608] sm:$0xff]
    %v299 = vld [vmem:[#allocation10 + $0x610] sm:$0xff]
    %v300 = vld [vmem:[#allocation10 + $0x618] sm:$0xff]
    %v301 = vld [vmem:[#allocation10 + $0x620] sm:$0xff]
    %v302 = vld [vmem:[#allocation10 + $0x628] sm:$0xff]
    %v303 = vld [vmem:[#allocation10 + $0x630] sm:$0xff]
    %v304 = vld [vmem:[#allocation10 + $0x638] sm:$0xff]
    %v305 = vld [vmem:[#allocation10 + $0x640] sm:$0xff]
    %v306 = vld [vmem:[#allocation10 + $0x648] sm:$0xff]
    %v307 = vld [vmem:[#allocation10 + $0x650] sm:$0xff]
    %v308 = vld [vmem:[#allocation10 + $0x658] sm:$0xff]
    %v309 = vld [vmem:[#allocation10 + $0x660] sm:$0xff]
    %v310 = vld [vmem:[#allocation10 + $0x668] sm:$0xff]
    %v311 = vld [vmem:[#allocation10 + $0x670] sm:$0xff]
    %v312 = vld [vmem:[#allocation10 + $0x678] sm:$0xff]
    %v313 = vld [vmem:[#allocation10 + $0x680] sm:$0xff]
    %v314 = vld [vmem:[#allocation10 + $0x688] sm:$0xff]
    %v315 = vld [vmem:[#allocation10 + $0x690] sm:$0xff]
    %v316 = vld [vmem:[#allocation10 + $0x698] sm:$0xff]
    %v317 = vld [vmem:[#allocation10 + $0x6a0] sm:$0xff]
    %v318 = vld [vmem:[#allocation10 + $0x6a8] sm:$0xff]
    %v319 = vld [vmem:[#allocation10 + $0x6b0] sm:$0xff]
    %v320 = vld [vmem:[#allocation10 + $0x6b8] sm:$0xff]
    %v321 = vld [vmem:[#allocation10 + $0x6c0] sm:$0xff]
    %v322 = vld [vmem:[#allocation10 + $0x6c8] sm:$0xff]
    %v323 = vld [vmem:[#allocation10 + $0x6d0] sm:$0xff]
    %v324 = vld [vmem:[#allocation10 + $0x6d8] sm:$0xff]
    %v325 = vld [vmem:[#allocation10 + $0x6e0] sm:$0xff]
    %v326 = vld [vmem:[#allocation10 + $0x6e8] sm:$0xff]
    %v327 = vld [vmem:[#allocation10 + $0x6f0] sm:$0xff]
    %v328 = vld [vmem:[#allocation10 + $0x6f8] sm:$0xff]
    %v329 = vld [vmem:[#allocation10 + $0x700] sm:$0xff]
    %v330 = vld [vmem:[#allocation10 + $0x708] sm:$0xff]
    %v331 = vld [vmem:[#allocation10 + $0x710] sm:$0xff]
    %v332 = vld [vmem:[#allocation10 + $0x718] sm:$0xff]
    %v333 = vld [vmem:[#allocation10 + $0x720] sm:$0xff]
    %v334 = vld [vmem:[#allocation10 + $0x728] sm:$0xff]
    %v335 = vld [vmem:[#allocation10 + $0x730] sm:$0xff]
    %v336 = vld [vmem:[#allocation10 + $0x738] sm:$0xff]
    %v337 = vld [vmem:[#allocation10 + $0x740] sm:$0xff]
    %v338 = vld [vmem:[#allocation10 + $0x748] sm:$0xff]
    %v339 = vld [vmem:[#allocation10 + $0x750] sm:$0xff]
    %v340 = vld [vmem:[#allocation10 + $0x758] sm:$0xff]
    %v341 = vld [vmem:[#allocation10 + $0x760] sm:$0xff]
    %v342 = vld [vmem:[#allocation10 + $0x768] sm:$0xff]
    %v343 = vld [vmem:[#allocation10 + $0x770] sm:$0xff]
    %v344 = vld [vmem:[#allocation10 + $0x778] sm:$0xff]
    %v345 = vld [vmem:[#allocation10 + $0x780] sm:$0xff]
    %v346 = vld [vmem:[#allocation10 + $0x788] sm:$0xff]
    %v347 = vld [vmem:[#allocation10 + $0x790] sm:$0xff]
    %v348 = vld [vmem:[#allocation10 + $0x798] sm:$0xff]
    %v349 = vld [vmem:[#allocation10 + $0x7a0] sm:$0xff]
    %v350 = vld [vmem:[#allocation10 + $0x7a8] sm:$0xff]
    %v351 = vld [vmem:[#allocation10 + $0x7b0] sm:$0xff]
    %v352 = vld [vmem:[#allocation10 + $0x7b8] sm:$0xff]
    %v353 = vld [vmem:[#allocation10 + $0x7c0] sm:$0xff]
    %v354 = vld [vmem:[#allocation10 + $0x7c8] sm:$0xff]
    %v355 = vld [vmem:[#allocation10 + $0x7d0] sm:$0xff]
    %v356 = vld [vmem:[#allocation10 + $0x7d8] sm:$0xff]
    %v357 = vld [vmem:[#allocation10 + $0x7e0] sm:$0xff]
    %v358 = vld [vmem:[#allocation10 + $0x7e8] sm:$0xff]
    %v359 = vld [vmem:[#allocation10 + $0x7f0] sm:$0xff]
    %v360 = vld [vmem:[#allocation10 + $0x7f8] sm:$0xff]
    %v361 = vld [vmem:[#allocation10 + $0x800] sm:$0xff]
    %v362 = vld [vmem:[#allocation10 + $0x808] sm:$0xff]
    %v363 = vld [vmem:[#allocation10 + $0x810] sm:$0xff]
    %v364 = vld [vmem:[#allocation10 + $0x818] sm:$0xff]
    %v365 = vld [vmem:[#allocation10 + $0x820] sm:$0xff]
    %v366 = vld [vmem:[#allocation10 + $0x828] sm:$0xff]
    %v367 = vld [vmem:[#allocation10 + $0x830] sm:$0xff]
    %v368 = vld [vmem:[#allocation10 + $0x838] sm:$0xff]
    %v369 = vld [vmem:[#allocation10 + $0x840] sm:$0xff]
    %v370 = vld [vmem:[#allocation10 + $0x848] sm:$0xff]
    %v371 = vld [vmem:[#allocation10 + $0x850] sm:$0xff]
    %v372 = vld [vmem:[#allocation10 + $0x858] sm:$0xff]
    %v373 = vld [vmem:[#allocation10 + $0x860] sm:$0xff]
    %v374 = vld [vmem:[#allocation10 + $0x868] sm:$0xff]
    %v375 = vld [vmem:[#allocation10 + $0x870] sm:$0xff]
    %v376 = vld [vmem:[#allocation10 + $0x878] sm:$0xff]
    %v377 = vld [vmem:[#allocation10 + $0x880] sm:$0xff]
    %v378 = vld [vmem:[#allocation10 + $0x888] sm:$0xff]
    %v379 = vld [vmem:[#allocation10 + $0x890] sm:$0xff]
    %v380 = vld [vmem:[#allocation10 + $0x898] sm:$0xff]
    %v381 = vld [vmem:[#allocation10 + $0x8a0] sm:$0xff]
    %v382 = vld [vmem:[#allocation10 + $0x8a8] sm:$0xff]
    %v383 = vld [vmem:[#allocation10 + $0x8b0] sm:$0xff]
    %v384 = vld [vmem:[#allocation10 + $0x8b8] sm:$0xff]
    %v385 = vld [vmem:[#allocation10 + $0x8c0] sm:$0xff]
    %v386 = vld [vmem:[#allocation10 + $0x8c8] sm:$0xff]
    %v387 = vld [vmem:[#allocation10 + $0x8d0] sm:$0xff]
    %v388 = vld [vmem:[#allocation10 + $0x8d8] sm:$0xff]
    %v389 = vld [vmem:[#allocation10 + $0x8e0] sm:$0xff]
    %v390 = vld [vmem:[#allocation10 + $0x8e8] sm:$0xff]
    %v391 = vld [vmem:[#allocation10 + $0x8f0] sm:$0xff]
    %v392 = vld [vmem:[#allocation10 + $0x8f8] sm:$0xff]
    %v393 = vld [vmem:[#allocation10 + $0x900] sm:$0xff]
    %v394 = vld [vmem:[#allocation10 + $0x908] sm:$0xff]
    %v395 = vld [vmem:[#allocation10 + $0x910] sm:$0xff]
    %v396 = vld [vmem:[#allocation10 + $0x918] sm:$0xff]
    %v397 = vld [vmem:[#allocation10 + $0x920] sm:$0xff]
    %v398 = vld [vmem:[#allocation10 + $0x928] sm:$0xff]
    %v399 = vld [vmem:[#allocation10 + $0x930] sm:$0xff]
    %v400 = vld [vmem:[#allocation10 + $0x938] sm:$0xff]
    %v401 = vld [vmem:[#allocation10 + $0x940] sm:$0xff]
    %v402 = vld [vmem:[#allocation10 + $0x948] sm:$0xff]
    %v403 = vld [vmem:[#allocation10 + $0x950] sm:$0xff]
    %v404 = vld [vmem:[#allocation10 + $0x958] sm:$0xff]
    %v405 = vld [vmem:[#allocation10 + $0x960] sm:$0xff]
    %v406 = vld [vmem:[#allocation10 + $0x968] sm:$0xff]
    %v407 = vld [vmem:[#allocation10 + $0x970] sm:$0xff]
    %v408 = vld [vmem:[#allocation10 + $0x978] sm:$0xff]
    %v409 = vld [vmem:[#allocation10 + $0x980] sm:$0xff]
    %v410 = vld [vmem:[#allocation10 + $0x988] sm:$0xff]
    %v411 = vld [vmem:[#allocation10 + $0x990] sm:$0xff]
    %v412 = vld [vmem:[#allocation10 + $0x998] sm:$0xff]
    %v413 = vld [vmem:[#allocation10 + $0x9a0] sm:$0xff]
    %v414 = vld [vmem:[#allocation10 + $0x9a8] sm:$0xff]
    %v415 = vld [vmem:[#allocation10 + $0x9b0] sm:$0xff]
    %v416 = vld [vmem:[#allocation10 + $0x9b8] sm:$0xff]
    %v417 = vld [vmem:[#allocation10 + $0x9c0] sm:$0xff]
    %v418 = vld [vmem:[#allocation10 + $0x9c8] sm:$0xff]
    %v419 = vld [vmem:[#allocation10 + $0x9d0] sm:$0xff]
    %v420 = vld [vmem:[#allocation10 + $0x9d8] sm:$0xff]
    %v421 = vld [vmem:[#allocation10 + $0x9e0] sm:$0xff]
    %v422 = vld [vmem:[#allocation10 + $0x9e8] sm:$0xff]
    %v423 = vld [vmem:[#allocation10 + $0x9f0] sm:$0xff]
    %v424 = vld [vmem:[#allocation10 + $0x9f8] sm:$0xff]
    %v425 = vld [vmem:[#allocation10 + $0xa00] sm:$0xff]
    %v426 = vld [vmem:[#allocation10 + $0xa08] sm:$0xff]
    %v427 = vld [vmem:[#allocation10 + $0xa10] sm:$0xff]
    %v428 = vld [vmem:[#allocation10 + $0xa18] sm:$0xff]
    %v429 = vld [vmem:[#allocation10 + $0xa20] sm:$0xff]
    %v430 = vld [vmem:[#allocation10 + $0xa28] sm:$0xff]
    %v431 = vld [vmem:[#allocation10 + $0xa30] sm:$0xff]
    %v432 = vld [vmem:[#allocation10 + $0xa38] sm:$0xff]
    %v433 = vld [vmem:[#allocation10 + $0xa40] sm:$0xff]
    %v434 = vld [vmem:[#allocation10 + $0xa48] sm:$0xff]
    %v435 = vld [vmem:[#allocation10 + $0xa50] sm:$0xff]
    %v436 = vld [vmem:[#allocation10 + $0xa58] sm:$0xff]
    %v437 = vld [vmem:[#allocation10 + $0xa60] sm:$0xff]
    %v438 = vld [vmem:[#allocation10 + $0xa68] sm:$0xff]
    %v439 = vld [vmem:[#allocation10 + $0xa70] sm:$0xff]
    %v440 = vld [vmem:[#allocation10 + $0xa78] sm:$0xff]
    %v441 = vld [vmem:[#allocation10 + $0xa80] sm:$0xff]
    %v442 = vld [vmem:[#allocation10 + $0xa88] sm:$0xff]
    %v443 = vld [vmem:[#allocation10 + $0xa90] sm:$0xff]
    %v444 = vld [vmem:[#allocation10 + $0xa98] sm:$0xff]
    %v445 = vld [vmem:[#allocation10 + $0xaa0] sm:$0xff]
    %v446 = vld [vmem:[#allocation10 + $0xaa8] sm:$0xff]
    %v447 = vld [vmem:[#allocation10 + $0xab0] sm:$0xff]
    %v448 = vld [vmem:[#allocation10 + $0xab8] sm:$0xff]
    %v449 = vld [vmem:[#allocation10 + $0xac0] sm:$0xff]
    %v450 = vld [vmem:[#allocation10 + $0xac8] sm:$0xff]
    %v451 = vld [vmem:[#allocation10 + $0xad0] sm:$0xff]
    %v452 = vld [vmem:[#allocation10 + $0xad8] sm:$0xff]
    %v453 = vld [vmem:[#allocation10 + $0xae0] sm:$0xff]
    %v454 = vld [vmem:[#allocation10 + $0xae8] sm:$0xff]
    %v455 = vld [vmem:[#allocation10 + $0xaf0] sm:$0xff]
    %v456 = vld [vmem:[#allocation10 + $0xaf8] sm:$0xff]
    %v457 = vld [vmem:[#allocation10 + $0xb00] sm:$0xff]
    %v458 = vld [vmem:[#allocation10 + $0xb08] sm:$0xff]
    %v459 = vld [vmem:[#allocation10 + $0xb10] sm:$0xff]
    %v460 = vld [vmem:[#allocation10 + $0xb18] sm:$0xff]
    %v461 = vld [vmem:[#allocation10 + $0xb20] sm:$0xff]
    %v462 = vld [vmem:[#allocation10 + $0xb28] sm:$0xff]
    %v463 = vld [vmem:[#allocation10 + $0xb30] sm:$0xff]
    %v464 = vld [vmem:[#allocation10 + $0xb38] sm:$0xff]
    %v465 = vld [vmem:[#allocation10 + $0xb40] sm:$0xff]
    %v466 = vld [vmem:[#allocation10 + $0xb48] sm:$0xff]
    %v467 = vld [vmem:[#allocation10 + $0xb50] sm:$0xff]
    %v468 = vld [vmem:[#allocation10 + $0xb58] sm:$0xff]
    %v469 = vld [vmem:[#allocation10 + $0xb60] sm:$0xff]
    %v470 = vld [vmem:[#allocation10 + $0xb68] sm:$0xff]
    %v471 = vld [vmem:[#allocation10 + $0xb70] sm:$0xff]
    %v472 = vld [vmem:[#allocation10 + $0xb78] sm:$0xff]
    %v473 = vld [vmem:[#allocation10 + $0xb80] sm:$0xff]
    %v474 = vld [vmem:[#allocation10 + $0xb88] sm:$0xff]
    %v475 = vld [vmem:[#allocation10 + $0xb90] sm:$0xff]
    %v476 = vld [vmem:[#allocation10 + $0xb98] sm:$0xff]
    %v477 = vld [vmem:[#allocation10 + $0xba0] sm:$0xff]
    %v478 = vld [vmem:[#allocation10 + $0xba8] sm:$0xff]
    %v479 = vld [vmem:[#allocation10 + $0xbb0] sm:$0xff]
    %v480 = vld [vmem:[#allocation10 + $0xbb8] sm:$0xff]
    %v481 = vld [vmem:[#allocation10 + $0xbc0] sm:$0xff]
    %v482 = vld [vmem:[#allocation10 + $0xbc8] sm:$0xff]
    %v483 = vld [vmem:[#allocation10 + $0xbd0] sm:$0xff]
    %v484 = vld [vmem:[#allocation10 + $0xbd8] sm:$0xff]
    %v485 = vld [vmem:[#allocation10 + $0xbe0] sm:$0xff]
    %v486 = vld [vmem:[#allocation10 + $0xbe8] sm:$0xff]
    %v487 = vld [vmem:[#allocation10 + $0xbf0] sm:$0xff]
    %v488 = vld [vmem:[#allocation10 + $0xbf8] sm:$0xff]
    %v489 = vld [vmem:[#allocation10 + $0xc00] sm:$0xff]
    %v490 = vld [vmem:[#allocation10 + $0xc08] sm:$0xff]
    %v491 = vld [vmem:[#allocation10 + $0xc10] sm:$0xff]
    %v492 = vld [vmem:[#allocation10 + $0xc18] sm:$0xff]
    %v493 = vld [vmem:[#allocation10 + $0xc20] sm:$0xff]
    %v494 = vld [vmem:[#allocation10 + $0xc28] sm:$0xff]
    %v495 = vld [vmem:[#allocation10 + $0xc30] sm:$0xff]
    %v496 = vld [vmem:[#allocation10 + $0xc38] sm:$0xff]
    %v497 = vld [vmem:[#allocation10 + $0xc40] sm:$0xff]
    %v498 = vld [vmem:[#allocation10 + $0xc48] sm:$0xff]
    %v499 = vld [vmem:[#allocation10 + $0xc50] sm:$0xff]
    %v500 = vld [vmem:[#allocation10 + $0xc58] sm:$0xff]
    %v501 = vld [vmem:[#allocation10 + $0xc60] sm:$0xff]
    %v502 = vld [vmem:[#allocation10 + $0xc68] sm:$0xff]
    %v503 = vld [vmem:[#allocation10 + $0xc70] sm:$0xff]
    %v504 = vld [vmem:[#allocation10 + $0xc78] sm:$0xff]
    %v505 = vld [vmem:[#allocation10 + $0xc80] sm:$0xff]
    %v506 = vld [vmem:[#allocation10 + $0xc88] sm:$0xff]
    %v507 = vld [vmem:[#allocation10 + $0xc90] sm:$0xff]
    %v508 = vld [vmem:[#allocation10 + $0xc98] sm:$0xff]
    %v509 = vld [vmem:[#allocation10 + $0xca0] sm:$0xff]
    %v510 = vld [vmem:[#allocation10 + $0xca8] sm:$0xff]
    %v511 = vld [vmem:[#allocation10 + $0xcb0] sm:$0xff]
    %v512 = vld [vmem:[#allocation10 + $0xcb8] sm:$0xff]
    %v513 = vld [vmem:[#allocation10 + $0xcc0] sm:$0xff]
    %v514 = vld [vmem:[#allocation10 + $0xcc8] sm:$0xff]
    %v515 = vld [vmem:[#allocation10 + $0xcd0] sm:$0xff]
    %v516 = vld [vmem:[#allocation10 + $0xcd8] sm:$0xff]
    %v517 = vld [vmem:[#allocation10 + $0xce0] sm:$0xff]
    %v518 = vld [vmem:[#allocation10 + $0xce8] sm:$0xff]
    %v519 = vld [vmem:[#allocation10 + $0xcf0] sm:$0xff]
    %v520 = vld [vmem:[#allocation10 + $0xcf8] sm:$0xff]
    %v521 = vld [vmem:[#allocation10 + $0xd00] sm:$0xff]
    %v522 = vld [vmem:[#allocation10 + $0xd08] sm:$0xff]
    %v523 = vld [vmem:[#allocation10 + $0xd10] sm:$0xff]
    %v524 = vld [vmem:[#allocation10 + $0xd18] sm:$0xff]
    %v525 = vld [vmem:[#allocation10 + $0xd20] sm:$0xff]
    %v526 = vld [vmem:[#allocation10 + $0xd28] sm:$0xff]
    %v527 = vld [vmem:[#allocation10 + $0xd30] sm:$0xff]
    %v528 = vld [vmem:[#allocation10 + $0xd38] sm:$0xff]
    %v529 = vld [vmem:[#allocation10 + $0xd40] sm:$0xff]
    %v530 = vld [vmem:[#allocation10 + $0xd48] sm:$0xff]
    %v531 = vld [vmem:[#allocation10 + $0xd50] sm:$0xff]
    %v532 = vld [vmem:[#allocation10 + $0xd58] sm:$0xff]
    %v533 = vld [vmem:[#allocation10 + $0xd60] sm:$0xff]
    %v534 = vld [vmem:[#allocation10 + $0xd68] sm:$0xff]
    %v535 = vld [vmem:[#allocation10 + $0xd70] sm:$0xff]
    %v536 = vld [vmem:[#allocation10 + $0xd78] sm:$0xff]
    %v537 = vld [vmem:[#allocation10 + $0xd80] sm:$0xff]
    %v538 = vld [vmem:[#allocation10 + $0xd88] sm:$0xff]
    %v539 = vld [vmem:[#allocation10 + $0xd90] sm:$0xff]
    %v540 = vld [vmem:[#allocation10 + $0xd98] sm:$0xff]
    %v541 = vld [vmem:[#allocation10 + $0xda0] sm:$0xff]
    %v542 = vld [vmem:[#allocation10 + $0xda8] sm:$0xff]
    %v543 = vld [vmem:[#allocation10 + $0xdb0] sm:$0xff]
    %v544 = vld [vmem:[#allocation10 + $0xdb8] sm:$0xff]
    %v545 = vld [vmem:[#allocation10 + $0xdc0] sm:$0xff]
    %v546 = vld [vmem:[#allocation10 + $0xdc8] sm:$0xff]
    %v547 = vld [vmem:[#allocation10 + $0xdd0] sm:$0xff]
    %v548 = vld [vmem:[#allocation10 + $0xdd8] sm:$0xff]
    %v549 = vld [vmem:[#allocation10 + $0xde0] sm:$0xff]
    %v550 = vld [vmem:[#allocation10 + $0xde8] sm:$0xff]
    %v551 = vld [vmem:[#allocation10 + $0xdf0] sm:$0xff]
    %v552 = vld [vmem:[#allocation10 + $0xdf8] sm:$0xff]
    %v553 = vld [vmem:[#allocation10 + $0xe00] sm:$0xff]
    %v554 = vld [vmem:[#allocation10 + $0xe08] sm:$0xff]
    %v555 = vld [vmem:[#allocation10 + $0xe10] sm:$0xff]
    %v556 = vld [vmem:[#allocation10 + $0xe18] sm:$0xff]
    %v557 = vld [vmem:[#allocation10 + $0xe20] sm:$0xff]
    %v558 = vld [vmem:[#allocation10 + $0xe28] sm:$0xff]
    %v559 = vld [vmem:[#allocation10 + $0xe30] sm:$0xff]
    %v560 = vld [vmem:[#allocation10 + $0xe38] sm:$0xff]
    %v561 = vld [vmem:[#allocation10 + $0xe40] sm:$0xff]
    %v562 = vld [vmem:[#allocation10 + $0xe48] sm:$0xff]
    %v563 = vld [vmem:[#allocation10 + $0xe50] sm:$0xff]
    %v564 = vld [vmem:[#allocation10 + $0xe58] sm:$0xff]
    %v565 = vld [vmem:[#allocation10 + $0xe60] sm:$0xff]
    %v566 = vld [vmem:[#allocation10 + $0xe68] sm:$0xff]
    %v567 = vld [vmem:[#allocation10 + $0xe70] sm:$0xff]
    %v568 = vld [vmem:[#allocation10 + $0xe78] sm:$0xff]
    %v569 = vld [vmem:[#allocation10 + $0xe80] sm:$0xff]
    %v570 = vld [vmem:[#allocation10 + $0xe88] sm:$0xff]
    %v571 = vld [vmem:[#allocation10 + $0xe90] sm:$0xff]
    %v572 = vld [vmem:[#allocation10 + $0xe98] sm:$0xff]
    %v573 = vld [vmem:[#allocation10 + $0xea0] sm:$0xff]
    %v574 = vld [vmem:[#allocation10 + $0xea8] sm:$0xff]
    %v575 = vld [vmem:[#allocation10 + $0xeb0] sm:$0xff]
    %v576 = vld [vmem:[#allocation10 + $0xeb8] sm:$0xff]
    %v577 = vld [vmem:[#allocation10 + $0xec0] sm:$0xff]
    %v578 = vld [vmem:[#allocation10 + $0xec8] sm:$0xff]
    %v579 = vld [vmem:[#allocation10 + $0xed0] sm:$0xff]
    %v580 = vld [vmem:[#allocation10 + $0xed8] sm:$0xff]
    %v581 = vld [vmem:[#allocation10 + $0xee0] sm:$0xff]
    %v582 = vld [vmem:[#allocation10 + $0xee8] sm:$0xff]
    %v583 = vld [vmem:[#allocation10 + $0xef0] sm:$0xff]
    %v584 = vld [vmem:[#allocation10 + $0xef8] sm:$0xff]
    %v585 = vld [vmem:[#allocation10 + $0xf00] sm:$0xff]
    %v586 = vld [vmem:[#allocation10 + $0xf08] sm:$0xff]
    %v587 = vld [vmem:[#allocation10 + $0xf10] sm:$0xff]
    %v588 = vld [vmem:[#allocation10 + $0xf18] sm:$0xff]
    %v589 = vld [vmem:[#allocation10 + $0xf20] sm:$0xff]
    %v590 = vld [vmem:[#allocation10 + $0xf28] sm:$0xff]
    %v591 = vld [vmem:[#allocation10 + $0xf30] sm:$0xff]
    %v592 = vld [vmem:[#allocation10 + $0xf38] sm:$0xff]
    %v593 = vld [vmem:[#allocation10 + $0xf40] sm:$0xff]
    %v594 = vld [vmem:[#allocation10 + $0xf48] sm:$0xff]
    %v595 = vld [vmem:[#allocation10 + $0xf50] sm:$0xff]
    %v596 = vld [vmem:[#allocation10 + $0xf58] sm:$0xff]
    %v597 = vld [vmem:[#allocation10 + $0xf60] sm:$0xff]
    %v598 = vld [vmem:[#allocation10 + $0xf68] sm:$0xff]
    %v599 = vld [vmem:[#allocation10 + $0xf70] sm:$0xff]
    %v600 = vld [vmem:[#allocation10 + $0xf78] sm:$0xff]
    %v601 = vld [vmem:[#allocation10 + $0xf80] sm:$0xff]
    %v602 = vld [vmem:[#allocation10 + $0xf88] sm:$0xff]
    %v603 = vld [vmem:[#allocation10 + $0xf90] sm:$0xff]
    %v604 = vld [vmem:[#allocation10 + $0xf98] sm:$0xff]
    %v605 = vld [vmem:[#allocation10 + $0xfa0] sm:$0xff]
    %v606 = vld [vmem:[#allocation10 + $0xfa8] sm:$0xff]
    %v607 = vld [vmem:[#allocation10 + $0xfb0] sm:$0xff]
    %v608 = vld [vmem:[#allocation10 + $0xfb8] sm:$0xff]
    %v609 = vld [vmem:[#allocation10 + $0xfc0] sm:$0xff]
    %v610 = vld [vmem:[#allocation10 + $0xfc8] sm:$0xff]
    %v611 = vld [vmem:[#allocation10 + $0xfd0] sm:$0xff]
    %v612 = vld [vmem:[#allocation10 + $0xfd8] sm:$0xff]
    %v613 = vld [vmem:[#allocation10 + $0xfe0] sm:$0xff]
    %v614 = vld [vmem:[#allocation10 + $0xfe8] sm:$0xff]
    %v615 = vld [vmem:[#allocation10 + $0xff0] sm:$0xff]
    %v616 = vld [vmem:[#allocation10 + $0xff8] sm:$0xff]
    %v617 = vld [vmem:[#allocation5] sm:$0x3]
    %v618 = vld [vmem:[#allocation8] sm:$0xff]
    %v619 = vld [vmem:[#allocation8 + $0x8] sm:$0xff]
    %v620 = vld [vmem:[#allocation8 + $0x10] sm:$0xff]
    %v621 = vld [vmem:[#allocation8 + $0x18] sm:$0xff]
    %v622 = vld [vmem:[#allocation8 + $0x20] sm:$0xff]
    %v623 = vld [vmem:[#allocation8 + $0x28] sm:$0xff]
    %v624 = vld [vmem:[#allocation8 + $0x30] sm:$0xff]
    %v625 = vld [vmem:[#allocation8 + $0x38] sm:$0xff]
    %vm626 = vcmask 261120
    %v628 = vsel %vm626, %v617, 0
    %630 = vmatprep.subr.mxu0 %v619
    %631 = vmatpush1.msra.mxu0 %v618
    %632 = vmatprep.subr.mxu0 %v621
    %633 = vmatpush1.msra.mxu0 %v620
    %634 = vmatprep.subr.mxu0 %v623
    %635 = vmatpush1.msra.mxu0 %v622
    %636 = vmatprep.subr.mxu0 %v625
    %637 = vmatpush1.msra.mxu0 %v624
    %638 = vmatprep.subr.mxu0 0.0
    %639 = vmatpush1.msra.mxu0 0.0
    %640 = vmatprep.subr.mxu0 0.0
    %641 = vmatpush1.msra.mxu0 0.0
    %642 = vmatprep.subr.mxu0 0.0
    %643 = vmatpush1.msra.mxu0 0.0
    %644 = vmatprep.subr.mxu0 0.0
    %645 = vmatpush1.msra.mxu0 0.0
    %646 = vmatprep.subr.mxu0 0.0
    %647 = vmatpush1.msra.mxu0 0.0
    %648 = vmatprep.subr.mxu0 0.0
    %649 = vmatpush1.msra.mxu0 0.0
    %650 = vmatprep.subr.mxu0 0.0
    %651 = vmatpush1.msra.mxu0 0.0
    %652 = vmatprep.subr.mxu0 0.0
    %653 = vmatpush1.msra.mxu0 0.0
    %654 = vmatprep.subr.mxu0 0.0
    %655 = vmatpush1.msra.mxu0 0.0
    %656 = vmatprep.subr.mxu0 0.0
    %657 = vmatpush1.msra.mxu0 0.0
    %658 = vmatprep.subr.mxu0 0.0
    %659 = vmatpush1.msra.mxu0 0.0
    %660 = vmatprep.subr.mxu0 0.0
    %661 = vmatpush1.msra.mxu0 0.0
    %662 = vmatprep.subr.mxu0 0.0
    %663 = vmatpush1.msra.mxu0 0.0
    %664 = vmatprep.subr.mxu0 0.0
    %665 = vmatpush1.msra.mxu0 0.0
    %666 = vmatprep.subr.mxu0 0.0
    %667 = vmatpush1.msra.mxu0 0.0
    %668 = vmatprep.subr.mxu0 0.0
    %669 = vmatpush1.msra.mxu0 0.0
    %670 = vmatprep.subr.mxu0 0.0
    %671 = vmatpush1.msra.mxu0 0.0
    %672 = vmatprep.subr.mxu0 0.0
    %673 = vmatpush1.msra.mxu0 0.0
    %674 = vmatprep.subr.mxu0 0.0
    %675 = vmatpush1.msra.mxu0 0.0
    %676 = vmatprep.subr.mxu0 0.0
    %677 = vmatpush1.msra.mxu0 0.0
    %678 = vmatprep.subr.mxu0 0.0
    %679 = vmatpush1.msra.mxu0 0.0
    %680 = vmatprep.subr.mxu0 0.0
    %681 = vmatpush1.msra.mxu0 0.0
    %682 = vmatprep.subr.mxu0 0.0
    %683 = vmatpush1.msra.mxu0 0.0
    %684 = vmatprep.subr.mxu0 0.0
    %685 = vmatpush1.msra.mxu0 0.0
    %686 = vmatprep.subr.mxu0 0.0
    %687 = vmatpush1.msra.mxu0 0.0
    %688 = vmatprep.subr.mxu0 0.0
    %689 = vmatpush1.msra.mxu0 0.0
    %690 = vmatprep.subr.mxu0 0.0
    %691 = vmatpush1.msra.mxu0 0.0
    %692 = vmatprep.subr.mxu0 0.0
    %693 = vmatpush1.msra.mxu0 0.0
    %694 = vmatprep.mubr.f32.mxu0 0.0
    %695 = vmatmul.mubr.f32.gmra.mrb[0].mxu0 %v628
    %v696 = vpop.f32.mrb[0].mxu0
    %v697 = vadd.f32 0.0, %v696
    %v698 = vpop.f32.mrb[0].mxu0
    %v699 = vadd.f32 0.0, %v698
    %700 = vdwg.mxu0
    %v703 = vunpack.c.l.s4 1983009808
    %v704 = vunpack.c.0.s8 %v703
    %v705 = vlaneseq
    %v706 = vshrl.u32 %v705, 7
    %v707 = vsub.s32 %v704, %v706
    %v708 = vrot.slane %v104, %v707
    %v709 = vcombine.high %v708, %v708
    %712 = vmatprep.subr.mxu0 %v106
    %713 = vmatpush1.msra.mxu0 %v105
    %714 = vmatprep.subr.mxu0 %v122
    %715 = vmatpush1.msra.mxu0 %v121
    %716 = vmatprep.subr.mxu0 %v138
    %717 = vmatpush1.msra.mxu0 %v137
    %718 = vmatprep.subr.mxu0 %v154
    %719 = vmatpush1.msra.mxu0 %v153
    %720 = vmatprep.subr.mxu0 %v170
    %721 = vmatpush1.msra.mxu0 %v169
    %722 = vmatprep.subr.mxu0 %v186
    %723 = vmatpush1.msra.mxu0 %v185
    %724 = vmatprep.subr.mxu0 %v202
    %725 = vmatpush1.msra.mxu0 %v201
    %726 = vmatprep.subr.mxu0 %v218
    %727 = vmatpush1.msra.mxu0 %v217
    %728 = vmatprep.subr.mxu0 %v234
    %729 = vmatpush1.msra.mxu0 %v233
    %730 = vmatprep.subr.mxu0 %v250
    %731 = vmatpush1.msra.mxu0 %v249
    %732 = vmatprep.subr.mxu0 %v266
    %733 = vmatpush1.msra.mxu0 %v265
    %734 = vmatprep.subr.mxu0 %v282
    %735 = vmatpush1.msra.mxu0 %v281
    %736 = vmatprep.subr.mxu0 %v298
    %737 = vmatpush1.msra.mxu0 %v297
    %738 = vmatprep.subr.mxu0 %v314
    %739 = vmatpush1.msra.mxu0 %v313
    %740 = vmatprep.subr.mxu0 %v330
    %741 = vmatpush1.msra.mxu0 %v329
    %742 = vmatprep.subr.mxu0 %v346
    %743 = vmatpush1.msra.mxu0 %v345
    %744 = vmatprep.subr.mxu0 %v362
    %745 = vmatpush1.msra.mxu0 %v361
    %746 = vmatprep.subr.mxu0 %v378
    %747 = vmatpush1.msra.mxu0 %v377
    %748 = vmatprep.subr.mxu0 %v394
    %749 = vmatpush1.msra.mxu0 %v393
    %750 = vmatprep.subr.mxu0 %v410
    %751 = vmatpush1.msra.mxu0 %v409
    %752 = vmatprep.subr.mxu0 %v426
    %753 = vmatpush1.msra.mxu0 %v425
    %754 = vmatprep.subr.mxu0 %v442
    %755 = vmatpush1.msra.mxu0 %v441
    %756 = vmatprep.subr.mxu0 %v458
    %757 = vmatpush1.msra.mxu0 %v457
    %758 = vmatprep.subr.mxu0 %v474
    %759 = vmatpush1.msra.mxu0 %v473
    %760 = vmatprep.subr.mxu0 %v490
    %761 = vmatpush1.msra.mxu0 %v489
    %762 = vmatprep.subr.mxu0 %v506
    %763 = vmatpush1.msra.mxu0 %v505
    %764 = vmatprep.subr.mxu0 %v522
    %765 = vmatpush1.msra.mxu0 %v521
    %766 = vmatprep.subr.mxu0 %v538
    %767 = vmatpush1.msra.mxu0 %v537
    %768 = vmatprep.subr.mxu0 %v554
    %769 = vmatpush1.msra.mxu0 %v553
    %770 = vmatprep.subr.mxu0 %v570
    %771 = vmatpush1.msra.mxu0 %v569
    %772 = vmatprep.subr.mxu0 %v586
    %773 = vmatpush1.msra.mxu0 %v585
    %774 = vmatprep.subr.mxu0 %v602
    %775 = vmatpush1.msra.mxu0 %v601
    %776 = vmatprep.mubr.f32.mxu0 %v709
    %777 = vmatmul.mubr.f32.gmra.mrb[0].mxu0 %v708
    %v778 = vpop.f32.mrb[0].mxu0
    %v779 = vadd.f32 %v697, %v778
    %v780 = vpop.f32.mrb[0].mxu0
    %v781 = vadd.f32 %v699, %v780
    %782 = vdwg.mxu0
    %783 = vmatprep.subr.mxu0 %v108
    %784 = vmatpush1.msra.mxu0 %v107
    %785 = vmatprep.subr.mxu0 %v124
    %786 = vmatpush1.msra.mxu0 %v123
    %787 = vmatprep.subr.mxu0 %v140
    %788 = vmatpush1.msra.mxu0 %v139
    %789 = vmatprep.subr.mxu0 %v156
    %790 = vmatpush1.msra.mxu0 %v155
    %791 = vmatprep.subr.mxu0 %v172
    %792 = vmatpush1.msra.mxu0 %v171
    %793 = vmatprep.subr.mxu0 %v188
    %794 = vmatpush1.msra.mxu0 %v187
    %795 = vmatprep.subr.mxu0 %v204
    %796 = vmatpush1.msra.mxu0 %v203
    %797 = vmatprep.subr.mxu0 %v220
    %798 = vmatpush1.msra.mxu0 %v219
    %799 = vmatprep.subr.mxu0 %v236
    %800 = vmatpush1.msra.mxu0 %v235
    %801 = vmatprep.subr.mxu0 %v252
    %802 = vmatpush1.msra.mxu0 %v251
    %803 = vmatprep.subr.mxu0 %v268
    %804 = vmatpush1.msra.mxu0 %v267
    %805 = vmatprep.subr.mxu0 %v284
    %806 = vmatpush1.msra.mxu0 %v283
    %807 = vmatprep.subr.mxu0 %v300
    %808 = vmatpush1.msra.mxu0 %v299
    %809 = vmatprep.subr.mxu0 %v316
    %810 = vmatpush1.msra.mxu0 %v315
    %811 = vmatprep.subr.mxu0 %v332
    %812 = vmatpush1.msra.mxu0 %v331
    %813 = vmatprep.subr.mxu0 %v348
    %814 = vmatpush1.msra.mxu0 %v347
    %815 = vmatprep.subr.mxu0 %v364
    %816 = vmatpush1.msra.mxu0 %v363
    %817 = vmatprep.subr.mxu0 %v380
    %818 = vmatpush1.msra.mxu0 %v379
    %819 = vmatprep.subr.mxu0 %v396
    %820 = vmatpush1.msra.mxu0 %v395
    %821 = vmatprep.subr.mxu0 %v412
    %822 = vmatpush1.msra.mxu0 %v411
    %823 = vmatprep.subr.mxu0 %v428
    %824 = vmatpush1.msra.mxu0 %v427
    %825 = vmatprep.subr.mxu0 %v444
    %826 = vmatpush1.msra.mxu0 %v443
    %827 = vmatprep.subr.mxu0 %v460
    %828 = vmatpush1.msra.mxu0 %v459
    %829 = vmatprep.subr.mxu0 %v476
    %830 = vmatpush1.msra.mxu0 %v475
    %831 = vmatprep.subr.mxu0 %v492
    %832 = vmatpush1.msra.mxu0 %v491
    %833 = vmatprep.subr.mxu0 %v508
    %834 = vmatpush1.msra.mxu0 %v507
    %835 = vmatprep.subr.mxu0 %v524
    %836 = vmatpush1.msra.mxu0 %v523
    %837 = vmatprep.subr.mxu0 %v540
    %838 = vmatpush1.msra.mxu0 %v539
    %839 = vmatprep.subr.mxu0 %v556
    %840 = vmatpush1.msra.mxu0 %v555
    %841 = vmatprep.subr.mxu0 %v572
    %842 = vmatpush1.msra.mxu0 %v571
    %843 = vmatprep.subr.mxu0 %v588
    %844 = vmatpush1.msra.mxu0 %v587
    %845 = vmatprep.subr.mxu0 %v604
    %846 = vmatpush1.msra.mxu0 %v603
    %847 = vmatprep.mubr.f32.mxu0 %v709
    %848 = vmatmul.mubr.f32.gmra.mrb[0].mxu0 %v708
    %v849 = vpop.f32.mrb[0].mxu0
    %v850 = vadd.f32 %v697, %v849
    %v851 = vpop.f32.mrb[0].mxu0
    %v852 = vadd.f32 %v699, %v851
    %853 = vdwg.mxu0
    %854 = vmatprep.subr.mxu0 %v110
    %855 = vmatpush1.msra.mxu0 %v109
    %856 = vmatprep.subr.mxu0 %v126
    %857 = vmatpush1.msra.mxu0 %v125
    %858 = vmatprep.subr.mxu0 %v142
    %859 = vmatpush1.msra.mxu0 %v141
    %860 = vmatprep.subr.mxu0 %v158
    %861 = vmatpush1.msra.mxu0 %v157
    %862 = vmatprep.subr.mxu0 %v174
    %863 = vmatpush1.msra.mxu0 %v173
    %864 = vmatprep.subr.mxu0 %v190
    %865 = vmatpush1.msra.mxu0 %v189
    %866 = vmatprep.subr.mxu0 %v206
    %867 = vmatpush1.msra.mxu0 %v205
    %868 = vmatprep.subr.mxu0 %v222
    %869 = vmatpush1.msra.mxu0 %v221
    %870 = vmatprep.subr.mxu0 %v238
    %871 = vmatpush1.msra.mxu0 %v237
    %872 = vmatprep.subr.mxu0 %v254
    %873 = vmatpush1.msra.mxu0 %v253
    %874 = vmatprep.subr.mxu0 %v270
    %875 = vmatpush1.msra.mxu0 %v269
    %876 = vmatprep.subr.mxu0 %v286
    %877 = vmatpush1.msra.mxu0 %v285
    %878 = vmatprep.subr.mxu0 %v302
    %879 = vmatpush1.msra.mxu0 %v301
    %880 = vmatprep.subr.mxu0 %v318
    %881 = vmatpush1.msra.mxu0 %v317
    %882 = vmatprep.subr.mxu0 %v334
    %883 = vmatpush1.msra.mxu0 %v333
    %884 = vmatprep.subr.mxu0 %v350
    %885 = vmatpush1.msra.mxu0 %v349
    %886 = vmatprep.subr.mxu0 %v366
    %887 = vmatpush1.msra.mxu0 %v365
    %888 = vmatprep.subr.mxu0 %v382
    %889 = vmatpush1.msra.mxu0 %v381
    %890 = vmatprep.subr.mxu0 %v398
    %891 = vmatpush1.msra.mxu0 %v397
    %892 = vmatprep.subr.mxu0 %v414
    %893 = vmatpush1.msra.mxu0 %v413
    %894 = vmatprep.subr.mxu0 %v430
    %895 = vmatpush1.msra.mxu0 %v429
    %896 = vmatprep.subr.mxu0 %v446
    %897 = vmatpush1.msra.mxu0 %v445
    %898 = vmatprep.subr.mxu0 %v462
    %899 = vmatpush1.msra.mxu0 %v461
    %900 = vmatprep.subr.mxu0 %v478
    %901 = vmatpush1.msra.mxu0 %v477
    %902 = vmatprep.subr.mxu0 %v494
    %903 = vmatpush1.msra.mxu0 %v493
    %904 = vmatprep.subr.mxu0 %v510
    %905 = vmatpush1.msra.mxu0 %v509
    %906 = vmatprep.subr.mxu0 %v526
    %907 = vmatpush1.msra.mxu0 %v525
    %908 = vmatprep.subr.mxu0 %v542
    %909 = vmatpush1.msra.mxu0 %v541
    %910 = vmatprep.subr.mxu0 %v558
    %911 = vmatpush1.msra.mxu0 %v557
    %912 = vmatprep.subr.mxu0 %v574
    %913 = vmatpush1.msra.mxu0 %v573
    %914 = vmatprep.subr.mxu0 %v590
    %915 = vmatpush1.msra.mxu0 %v589
    %916 = vmatprep.subr.mxu0 %v606
    %917 = vmatpush1.msra.mxu0 %v605
    %918 = vmatprep.mubr.f32.mxu0 %v709
    %919 = vmatmul.mubr.f32.gmra.mrb[0].mxu0 %v708
    %v920 = vpop.f32.mrb[0].mxu0
    %v921 = vadd.f32 %v697, %v920
    %v922 = vpop.f32.mrb[0].mxu0
    %v923 = vadd.f32 %v699, %v922
    %924 = vdwg.mxu0
    %925 = vmatprep.subr.mxu0 %v112
    %926 = vmatpush1.msra.mxu0 %v111
    %927 = vmatprep.subr.mxu0 %v128
    %928 = vmatpush1.msra.mxu0 %v127
    %929 = vmatprep.subr.mxu0 %v144
    %930 = vmatpush1.msra.mxu0 %v143
    %931 = vmatprep.subr.mxu0 %v160
    %932 = vmatpush1.msra.mxu0 %v159
    %933 = vmatprep.subr.mxu0 %v176
    %934 = vmatpush1.msra.mxu0 %v175
    %935 = vmatprep.subr.mxu0 %v192
    %936 = vmatpush1.msra.mxu0 %v191
    %937 = vmatprep.subr.mxu0 %v208
    %938 = vmatpush1.msra.mxu0 %v207
    %939 = vmatprep.subr.mxu0 %v224
    %940 = vmatpush1.msra.mxu0 %v223
    %941 = vmatprep.subr.mxu0 %v240
    %942 = vmatpush1.msra.mxu0 %v239
    %943 = vmatprep.subr.mxu0 %v256
    %944 = vmatpush1.msra.mxu0 %v255
    %945 = vmatprep.subr.mxu0 %v272
    %946 = vmatpush1.msra.mxu0 %v271
    %947 = vmatprep.subr.mxu0 %v288
    %948 = vmatpush1.msra.mxu0 %v287
    %949 = vmatprep.subr.mxu0 %v304
    %950 = vmatpush1.msra.mxu0 %v303
    %951 = vmatprep.subr.mxu0 %v320
    %952 = vmatpush1.msra.mxu0 %v319
    %953 = vmatprep.subr.mxu0 %v336
    %954 = vmatpush1.msra.mxu0 %v335
    %955 = vmatprep.subr.mxu0 %v352
    %956 = vmatpush1.msra.mxu0 %v351
    %957 = vmatprep.subr.mxu0 %v368
    %958 = vmatpush1.msra.mxu0 %v367
    %959 = vmatprep.subr.mxu0 %v384
    %960 = vmatpush1.msra.mxu0 %v383
    %961 = vmatprep.subr.mxu0 %v400
    %962 = vmatpush1.msra.mxu0 %v399
    %963 = vmatprep.subr.mxu0 %v416
    %964 = vmatpush1.msra.mxu0 %v415
    %965 = vmatprep.subr.mxu0 %v432
    %966 = vmatpush1.msra.mxu0 %v431
    %967 = vmatprep.subr.mxu0 %v448
    %968 = vmatpush1.msra.mxu0 %v447
    %969 = vmatprep.subr.mxu0 %v464
    %970 = vmatpush1.msra.mxu0 %v463
    %971 = vmatprep.subr.mxu0 %v480
    %972 = vmatpush1.msra.mxu0 %v479
    %973 = vmatprep.subr.mxu0 %v496
    %974 = vmatpush1.msra.mxu0 %v495
    %975 = vmatprep.subr.mxu0 %v512
    %976 = vmatpush1.msra.mxu0 %v511
    %977 = vmatprep.subr.mxu0 %v528
    %978 = vmatpush1.msra.mxu0 %v527
    %979 = vmatprep.subr.mxu0 %v544
    %980 = vmatpush1.msra.mxu0 %v543
    %981 = vmatprep.subr.mxu0 %v560
    %982 = vmatpush1.msra.mxu0 %v559
    %983 = vmatprep.subr.mxu0 %v576
    %984 = vmatpush1.msra.mxu0 %v575
    %985 = vmatprep.subr.mxu0 %v592
    %986 = vmatpush1.msra.mxu0 %v591
    %987 = vmatprep.subr.mxu0 %v608
    %988 = vmatpush1.msra.mxu0 %v607
    %989 = vmatprep.mubr.f32.mxu0 %v709
    %990 = vmatmul.mubr.f32.gmra.mrb[0].mxu0 %v708
    %v991 = vpop.f32.mrb[0].mxu0
    %v992 = vadd.f32 %v697, %v991
    %v993 = vpop.f32.mrb[0].mxu0
    %v994 = vadd.f32 %v699, %v993
    %995 = vdwg.mxu0
    %996 = vmatprep.subr.mxu0 %v114
    %997 = vmatpush1.msra.mxu0 %v113
    %998 = vmatprep.subr.mxu0 %v130
    %999 = vmatpush1.msra.mxu0 %v129
    %1000 = vmatprep.subr.mxu0 %v146
    %1001 = vmatpush1.msra.mxu0 %v145
    %1002 = vmatprep.subr.mxu0 %v162
    %1003 = vmatpush1.msra.mxu0 %v161
    %1004 = vmatprep.subr.mxu0 %v178
    %1005 = vmatpush1.msra.mxu0 %v177
    %1006 = vmatprep.subr.mxu0 %v194
    %1007 = vmatpush1.msra.mxu0 %v193
    %1008 = vmatprep.subr.mxu0 %v210
    %1009 = vmatpush1.msra.mxu0 %v209
    %1010 = vmatprep.subr.mxu0 %v226
    %1011 = vmatpush1.msra.mxu0 %v225
    %1012 = vmatprep.subr.mxu0 %v242
    %1013 = vmatpush1.msra.mxu0 %v241
    %1014 = vmatprep.subr.mxu0 %v258
    %1015 = vmatpush1.msra.mxu0 %v257
    %1016 = vmatprep.subr.mxu0 %v274
    %1017 = vmatpush1.msra.mxu0 %v273
    %1018 = vmatprep.subr.mxu0 %v290
    %1019 = vmatpush1.msra.mxu0 %v289
    %1020 = vmatprep.subr.mxu0 %v306
    %1021 = vmatpush1.msra.mxu0 %v305
    %1022 = vmatprep.subr.mxu0 %v322
    %1023 = vmatpush1.msra.mxu0 %v321
    %1024 = vmatprep.subr.mxu0 %v338
    %1025 = vmatpush1.msra.mxu0 %v337
    %1026 = vmatprep.subr.mxu0 %v354
    %1027 = vmatpush1.msra.mxu0 %v353
    %1028 = vmatprep.subr.mxu0 %v370
    %1029 = vmatpush1.msra.mxu0 %v369
    %1030 = vmatprep.subr.mxu0 %v386
    %1031 = vmatpush1.msra.mxu0 %v385
    %1032 = vmatprep.subr.mxu0 %v402
    %1033 = vmatpush1.msra.mxu0 %v401
    %1034 = vmatprep.subr.mxu0 %v418
    %1035 = vmatpush1.msra.mxu0 %v417
    %1036 = vmatprep.subr.mxu0 %v434
    %1037 = vmatpush1.msra.mxu0 %v433
    %1038 = vmatprep.subr.mxu0 %v450
    %1039 = vmatpush1.msra.mxu0 %v449
    %1040 = vmatprep.subr.mxu0 %v466
    %1041 = vmatpush1.msra.mxu0 %v465
    %1042 = vmatprep.subr.mxu0 %v482
    %1043 = vmatpush1.msra.mxu0 %v481
    %1044 = vmatprep.subr.mxu0 %v498
    %1045 = vmatpush1.msra.mxu0 %v497
    %1046 = vmatprep.subr.mxu0 %v514
    %1047 = vmatpush1.msra.mxu0 %v513
    %1048 = vmatprep.subr.mxu0 %v530
    %1049 = vmatpush1.msra.mxu0 %v529
    %1050 = vmatprep.subr.mxu0 %v546
    %1051 = vmatpush1.msra.mxu0 %v545
    %1052 = vmatprep.subr.mxu0 %v562
    %1053 = vmatpush1.msra.mxu0 %v561
    %1054 = vmatprep.subr.mxu0 %v578
    %1055 = vmatpush1.msra.mxu0 %v577
    %1056 = vmatprep.subr.mxu0 %v594
    %1057 = vmatpush1.msra.mxu0 %v593
    %1058 = vmatprep.subr.mxu0 %v610
    %1059 = vmatpush1.msra.mxu0 %v609
    %1060 = vmatprep.mubr.f32.mxu0 %v709
    %1061 = vmatmul.mubr.f32.gmra.mrb[0].mxu0 %v708
    %v1062 = vpop.f32.mrb[0].mxu0
    %v1063 = vadd.f32 %v697, %v1062
    %v1064 = vpop.f32.mrb[0].mxu0
    %v1065 = vadd.f32 %v699, %v1064
    %1066 = vdwg.mxu0
    %1067 = vmatprep.subr.mxu0 %v116
    %1068 = vmatpush1.msra.mxu0 %v115
    %1069 = vmatprep.subr.mxu0 %v132
    %1070 = vmatpush1.msra.mxu0 %v131
    %1071 = vmatprep.subr.mxu0 %v148
    %1072 = vmatpush1.msra.mxu0 %v147
    %1073 = vmatprep.subr.mxu0 %v164
    %1074 = vmatpush1.msra.mxu0 %v163
    %1075 = vmatprep.subr.mxu0 %v180
    %1076 = vmatpush1.msra.mxu0 %v179
    %1077 = vmatprep.subr.mxu0 %v196
    %1078 = vmatpush1.msra.mxu0 %v195
    %1079 = vmatprep.subr.mxu0 %v212
    %1080 = vmatpush1.msra.mxu0 %v211
    %1081 = vmatprep.subr.mxu0 %v228
    %1082 = vmatpush1.msra.mxu0 %v227
    %1083 = vmatprep.subr.mxu0 %v244
    %1084 = vmatpush1.msra.mxu0 %v243
    %1085 = vmatprep.subr.mxu0 %v260
    %1086 = vmatpush1.msra.mxu0 %v259
    %1087 = vmatprep.subr.mxu0 %v276
    %1088 = vmatpush1.msra.mxu0 %v275
    %1089 = vmatprep.subr.mxu0 %v292
    %1090 = vmatpush1.msra.mxu0 %v291
    %1091 = vmatprep.subr.mxu0 %v308
    %1092 = vmatpush1.msra.mxu0 %v307
    %1093 = vmatprep.subr.mxu0 %v324
    %1094 = vmatpush1.msra.mxu0 %v323
    %1095 = vmatprep.subr.mxu0 %v340
    %1096 = vmatpush1.msra.mxu0 %v339
    %1097 = vmatprep.subr.mxu0 %v356
    %1098 = vmatpush1.msra.mxu0 %v355
    %1099 = vmatprep.subr.mxu0 %v372
    %1100 = vmatpush1.msra.mxu0 %v371
    %1101 = vmatprep.subr.mxu0 %v388
    %1102 = vmatpush1.msra.mxu0 %v387
    %1103 = vmatprep.subr.mxu0 %v404
    %1104 = vmatpush1.msra.mxu0 %v403
    %1105 = vmatprep.subr.mxu0 %v420
    %1106 = vmatpush1.msra.mxu0 %v419
    %1107 = vmatprep.subr.mxu0 %v436
    %1108 = vmatpush1.msra.mxu0 %v435
    %1109 = vmatprep.subr.mxu0 %v452
    %1110 = vmatpush1.msra.mxu0 %v451
    %1111 = vmatprep.subr.mxu0 %v468
    %1112 = vmatpush1.msra.mxu0 %v467
    %1113 = vmatprep.subr.mxu0 %v484
    %1114 = vmatpush1.msra.mxu0 %v483
    %1115 = vmatprep.subr.mxu0 %v500
    %1116 = vmatpush1.msra.mxu0 %v499
    %1117 = vmatprep.subr.mxu0 %v516
    %1118 = vmatpush1.msra.mxu0 %v515
    %1119 = vmatprep.subr.mxu0 %v532
    %1120 = vmatpush1.msra.mxu0 %v531
    %1121 = vmatprep.subr.mxu0 %v548
    %1122 = vmatpush1.msra.mxu0 %v547
    %1123 = vmatprep.subr.mxu0 %v564
    %1124 = vmatpush1.msra.mxu0 %v563
    %1125 = vmatprep.subr.mxu0 %v580
    %1126 = vmatpush1.msra.mxu0 %v579
    %1127 = vmatprep.subr.mxu0 %v596
    %1128 = vmatpush1.msra.mxu0 %v595
    %1129 = vmatprep.subr.mxu0 %v612
    %1130 = vmatpush1.msra.mxu0 %v611
    %1131 = vmatprep.mubr.f32.mxu0 %v709
    %1132 = vmatmul.mubr.f32.gmra.mrb[0].mxu0 %v708
    %v1133 = vpop.f32.mrb[0].mxu0
    %v1134 = vadd.f32 %v697, %v1133
    %v1135 = vpop.f32.mrb[0].mxu0
    %v1136 = vadd.f32 %v699, %v1135
    %1137 = vdwg.mxu0
    %1138 = vmatprep.subr.mxu0 %v118
    %1139 = vmatpush1.msra.mxu0 %v117
    %1140 = vmatprep.subr.mxu0 %v134
    %1141 = vmatpush1.msra.mxu0 %v133
    %1142 = vmatprep.subr.mxu0 %v150
    %1143 = vmatpush1.msra.mxu0 %v149
    %1144 = vmatprep.subr.mxu0 %v166
    %1145 = vmatpush1.msra.mxu0 %v165
    %1146 = vmatprep.subr.mxu0 %v182
    %1147 = vmatpush1.msra.mxu0 %v181
    %1148 = vmatprep.subr.mxu0 %v198
    %1149 = vmatpush1.msra.mxu0 %v197
    %1150 = vmatprep.subr.mxu0 %v214
    %1151 = vmatpush1.msra.mxu0 %v213
    %1152 = vmatprep.subr.mxu0 %v230
    %1153 = vmatpush1.msra.mxu0 %v229
    %1154 = vmatprep.subr.mxu0 %v246
    %1155 = vmatpush1.msra.mxu0 %v245
    %1156 = vmatprep.subr.mxu0 %v262
    %1157 = vmatpush1.msra.mxu0 %v261
    %1158 = vmatprep.subr.mxu0 %v278
    %1159 = vmatpush1.msra.mxu0 %v277
    %1160 = vmatprep.subr.mxu0 %v294
    %1161 = vmatpush1.msra.mxu0 %v293
    %1162 = vmatprep.subr.mxu0 %v310
    %1163 = vmatpush1.msra.mxu0 %v309
    %1164 = vmatprep.subr.mxu0 %v326
    %1165 = vmatpush1.msra.mxu0 %v325
    %1166 = vmatprep.subr.mxu0 %v342
    %1167 = vmatpush1.msra.mxu0 %v341
    %1168 = vmatprep.subr.mxu0 %v358
    %1169 = vmatpush1.msra.mxu0 %v357
    %1170 = vmatprep.subr.mxu0 %v374
    %1171 = vmatpush1.msra.mxu0 %v373
    %1172 = vmatprep.subr.mxu0 %v390
    %1173 = vmatpush1.msra.mxu0 %v389
    %1174 = vmatprep.subr.mxu0 %v406
    %1175 = vmatpush1.msra.mxu0 %v405
    %1176 = vmatprep.subr.mxu0 %v422
    %1177 = vmatpush1.msra.mxu0 %v421
    %1178 = vmatprep.subr.mxu0 %v438
    %1179 = vmatpush1.msra.mxu0 %v437
    %1180 = vmatprep.subr.mxu0 %v454
    %1181 = vmatpush1.msra.mxu0 %v453
    %1182 = vmatprep.subr.mxu0 %v470
    %1183 = vmatpush1.msra.mxu0 %v469
    %1184 = vmatprep.subr.mxu0 %v486
    %1185 = vmatpush1.msra.mxu0 %v485
    %1186 = vmatprep.subr.mxu0 %v502
    %1187 = vmatpush1.msra.mxu0 %v501
    %1188 = vmatprep.subr.mxu0 %v518
    %1189 = vmatpush1.msra.mxu0 %v517
    %1190 = vmatprep.subr.mxu0 %v534
    %1191 = vmatpush1.msra.mxu0 %v533
    %1192 = vmatprep.subr.mxu0 %v550
    %1193 = vmatpush1.msra.mxu0 %v549
    %1194 = vmatprep.subr.mxu0 %v566
    %1195 = vmatpush1.msra.mxu0 %v565
    %1196 = vmatprep.subr.mxu0 %v582
    %1197 = vmatpush1.msra.mxu0 %v581
    %1198 = vmatprep.subr.mxu0 %v598
    %1199 = vmatpush1.msra.mxu0 %v597
    %1200 = vmatprep.subr.mxu0 %v614
    %1201 = vmatpush1.msra.mxu0 %v613
    %1202 = vmatprep.mubr.f32.mxu0 %v709
    %1203 = vmatmul.mubr.f32.gmra.mrb[0].mxu0 %v708
    %v1204 = vpop.f32.mrb[0].mxu0
    %v1205 = vadd.f32 %v697, %v1204
    %v1206 = vpop.f32.mrb[0].mxu0
    %v1207 = vadd.f32 %v699, %v1206
    %1208 = vdwg.mxu0
    %1209 = vmatprep.subr.mxu0 %v120
    %1210 = vmatpush1.msra.mxu0 %v119
    %1211 = vmatprep.subr.mxu0 %v136
    %1212 = vmatpush1.msra.mxu0 %v135
    %1213 = vmatprep.subr.mxu0 %v152
    %1214 = vmatpush1.msra.mxu0 %v151
    %1215 = vmatprep.subr.mxu0 %v168
    %1216 = vmatpush1.msra.mxu0 %v167
    %1217 = vmatprep.subr.mxu0 %v184
    %1218 = vmatpush1.msra.mxu0 %v183
    %1219 = vmatprep.subr.mxu0 %v200
    %1220 = vmatpush1.msra.mxu0 %v199
    %1221 = vmatprep.subr.mxu0 %v216
    %1222 = vmatpush1.msra.mxu0 %v215
    %1223 = vmatprep.subr.mxu0 %v232
    %1224 = vmatpush1.msra.mxu0 %v231
    %1225 = vmatprep.subr.mxu0 %v248
    %1226 = vmatpush1.msra.mxu0 %v247
    %1227 = vmatprep.subr.mxu0 %v264
    %1228 = vmatpush1.msra.mxu0 %v263
    %1229 = vmatprep.subr.mxu0 %v280
    %1230 = vmatpush1.msra.mxu0 %v279
    %1231 = vmatprep.subr.mxu0 %v296
    %1232 = vmatpush1.msra.mxu0 %v295
    %1233 = vmatprep.subr.mxu0 %v312
    %1234 = vmatpush1.msra.mxu0 %v311
    %1235 = vmatprep.subr.mxu0 %v328
    %1236 = vmatpush1.msra.mxu0 %v327
    %1237 = vmatprep.subr.mxu0 %v344
    %1238 = vmatpush1.msra.mxu0 %v343
    %1239 = vmatprep.subr.mxu0 %v360
    %1240 = vmatpush1.msra.mxu0 %v359
    %1241 = vmatprep.subr.mxu0 %v376
    %1242 = vmatpush1.msra.mxu0 %v375
    %1243 = vmatprep.subr.mxu0 %v392
    %1244 = vmatpush1.msra.mxu0 %v391
    %1245 = vmatprep.subr.mxu0 %v408
    %1246 = vmatpush1.msra.mxu0 %v407
    %1247 = vmatprep.subr.mxu0 %v424
    %1248 = vmatpush1.msra.mxu0 %v423
    %1249 = vmatprep.subr.mxu0 %v440
    %1250 = vmatpush1.msra.mxu0 %v439
    %1251 = vmatprep.subr.mxu0 %v456
    %1252 = vmatpush1.msra.mxu0 %v455
    %1253 = vmatprep.subr.mxu0 %v472
    %1254 = vmatpush1.msra.mxu0 %v471
    %1255 = vmatprep.subr.mxu0 %v488
    %1256 = vmatpush1.msra.mxu0 %v487
    %1257 = vmatprep.subr.mxu0 %v504
    %1258 = vmatpush1.msra.mxu0 %v503
    %1259 = vmatprep.subr.mxu0 %v520
    %1260 = vmatpush1.msra.mxu0 %v519
    %1261 = vmatprep.subr.mxu0 %v536
    %1262 = vmatpush1.msra.mxu0 %v535
    %1263 = vmatprep.subr.mxu0 %v552
    %1264 = vmatpush1.msra.mxu0 %v551
    %1265 = vmatprep.subr.mxu0 %v568
    %1266 = vmatpush1.msra.mxu0 %v567
    %1267 = vmatprep.subr.mxu0 %v584
    %1268 = vmatpush1.msra.mxu0 %v583
    %1269 = vmatprep.subr.mxu0 %v600
    %1270 = vmatpush1.msra.mxu0 %v599
    %1271 = vmatprep.subr.mxu0 %v616
    %1272 = vmatpush1.msra.mxu0 %v615
    %1273 = vmatprep.mubr.f32.mxu0 %v709
    %1274 = vmatmul.mubr.f32.gmra.mrb[0].mxu0 %v708
    %v1275 = vpop.f32.mrb[0].mxu0
    %v1276 = vadd.f32 %v697, %v1275
    %v1277 = vpop.f32.mrb[0].mxu0
    %v1278 = vadd.f32 %v699, %v1277
    %1279 = vdwg.mxu0
    %v1280 = vtanh.pop %v779
    %v1281 = vtanh.pop %v781
    %v1282 = vtanh.pop %v850
    %v1283 = vtanh.pop %v852
    %v1284 = vtanh.pop %v921
    %v1285 = vtanh.pop %v923
    %v1286 = vtanh.pop %v992
    %v1287 = vtanh.pop %v994
    %v1288 = vtanh.pop %v1063
    %v1289 = vtanh.pop %v1065
    %v1290 = vtanh.pop %v1134
    %v1291 = vtanh.pop %v1136
    %v1292 = vtanh.pop %v1205
    %v1293 = vtanh.pop %v1207
    %v1294 = vtanh.pop %v1276
    %v1295 = vtanh.pop %v1278
    %v1296 = vld [vmem:[%s5] sm:$0xff]
    %v1297 = vld [vmem:[%s5 + $0x8] sm:$0xff]
    %v1298 = vld [vmem:[%s5 + $0x10] sm:$0xff]
    %v1299 = vld [vmem:[%s5 + $0x18] sm:$0xff]
    %v1300 = vld [vmem:[%s5 + $0x20] sm:$0xff]
    %v1301 = vld [vmem:[%s5 + $0x28] sm:$0xff]
    %v1302 = vld [vmem:[%s5 + $0x30] sm:$0xff]
    %v1303 = vld [vmem:[%s5 + $0x38] sm:$0xff]
    %v1304 = vld [vmem:[%s5 + $0x40] sm:$0xff]
    %v1305 = vld [vmem:[%s5 + $0x48] sm:$0xff]
    %v1306 = vld [vmem:[%s5 + $0x50] sm:$0xff]
    %v1307 = vld [vmem:[%s5 + $0x58] sm:$0xff]
    %v1308 = vld [vmem:[%s5 + $0x60] sm:$0xff]
    %v1309 = vld [vmem:[%s5 + $0x68] sm:$0xff]
    %v1310 = vld [vmem:[%s5 + $0x70] sm:$0xff]
    %v1311 = vld [vmem:[%s5 + $0x78] sm:$0xff]
    %v1312 = vld [vmem:[%s5 + $0x80] sm:$0xff]
    %v1313 = vld [vmem:[%s5 + $0x88] sm:$0xff]
    %v1314 = vld [vmem:[%s5 + $0x90] sm:$0xff]
    %v1315 = vld [vmem:[%s5 + $0x98] sm:$0xff]
    %v1316 = vld [vmem:[%s5 + $0xa0] sm:$0xff]
    %v1317 = vld [vmem:[%s5 + $0xa8] sm:$0xff]
    %v1318 = vld [vmem:[%s5 + $0xb0] sm:$0xff]
    %v1319 = vld [vmem:[%s5 + $0xb8] sm:$0xff]
    %v1320 = vld [vmem:[%s5 + $0xc0] sm:$0xff]
    %v1321 = vld [vmem:[%s5 + $0xc8] sm:$0xff]
    %v1322 = vld [vmem:[%s5 + $0xd0] sm:$0xff]
    %v1323 = vld [vmem:[%s5 + $0xd8] sm:$0xff]
    %v1324 = vld [vmem:[%s5 + $0xe0] sm:$0xff]
    %v1325 = vld [vmem:[%s5 + $0xe8] sm:$0xff]
    %v1326 = vld [vmem:[%s5 + $0xf0] sm:$0xff]
    %v1327 = vld [vmem:[%s5 + $0xf8] sm:$0xff]
    %v1328 = vld [vmem:[%s5 + $0x100] sm:$0xff]
    %v1329 = vld [vmem:[%s5 + $0x108] sm:$0xff]
    %v1330 = vld [vmem:[%s5 + $0x110] sm:$0xff]
    %v1331 = vld [vmem:[%s5 + $0x118] sm:$0xff]
    %v1332 = vld [vmem:[%s5 + $0x120] sm:$0xff]
    %v1333 = vld [vmem:[%s5 + $0x128] sm:$0xff]
    %v1334 = vld [vmem:[%s5 + $0x130] sm:$0xff]
    %v1335 = vld [vmem:[%s5 + $0x138] sm:$0xff]
    %v1336 = vld [vmem:[%s5 + $0x140] sm:$0xff]
    %v1337 = vld [vmem:[%s5 + $0x148] sm:$0xff]
    %v1338 = vld [vmem:[%s5 + $0x150] sm:$0xff]
    %v1339 = vld [vmem:[%s5 + $0x158] sm:$0xff]
    %v1340 = vld [vmem:[%s5 + $0x160] sm:$0xff]
    %v1341 = vld [vmem:[%s5 + $0x168] sm:$0xff]
    %v1342 = vld [vmem:[%s5 + $0x170] sm:$0xff]
    %v1343 = vld [vmem:[%s5 + $0x178] sm:$0xff]
    %v1344 = vld [vmem:[%s5 + $0x180] sm:$0xff]
    %v1345 = vld [vmem:[%s5 + $0x188] sm:$0xff]
    %v1346 = vld [vmem:[%s5 + $0x190] sm:$0xff]
    %v1347 = vld [vmem:[%s5 + $0x198] sm:$0xff]
    %v1348 = vld [vmem:[%s5 + $0x1a0] sm:$0xff]
    %v1349 = vld [vmem:[%s5 + $0x1a8] sm:$0xff]
    %v1350 = vld [vmem:[%s5 + $0x1b0] sm:$0xff]
    %v1351 = vld [vmem:[%s5 + $0x1b8] sm:$0xff]
    %v1352 = vld [vmem:[%s5 + $0x1c0] sm:$0xff]
    %v1353 = vld [vmem:[%s5 + $0x1c8] sm:$0xff]
    %v1354 = vld [vmem:[%s5 + $0x1d0] sm:$0xff]
    %v1355 = vld [vmem:[%s5 + $0x1d8] sm:$0xff]
    %v1356 = vld [vmem:[%s5 + $0x1e0] sm:$0xff]
    %v1357 = vld [vmem:[%s5 + $0x1e8] sm:$0xff]
    %v1358 = vld [vmem:[%s5 + $0x1f0] sm:$0xff]
    %v1359 = vld [vmem:[%s5 + $0x1f8] sm:$0xff]
    %v1360 = vld [vmem:[%s5 + $0x200] sm:$0xff]
    %v1361 = vld [vmem:[%s5 + $0x208] sm:$0xff]
    %v1362 = vld [vmem:[%s5 + $0x210] sm:$0xff]
    %v1363 = vld [vmem:[%s5 + $0x218] sm:$0xff]
    %v1364 = vld [vmem:[%s5 + $0x220] sm:$0xff]
    %v1365 = vld [vmem:[%s5 + $0x228] sm:$0xff]
    %v1366 = vld [vmem:[%s5 + $0x230] sm:$0xff]
    %v1367 = vld [vmem:[%s5 + $0x238] sm:$0xff]
    %v1368 = vld [vmem:[%s5 + $0x240] sm:$0xff]
    %v1369 = vld [vmem:[%s5 + $0x248] sm:$0xff]
    %v1370 = vld [vmem:[%s5 + $0x250] sm:$0xff]
    %v1371 = vld [vmem:[%s5 + $0x258] sm:$0xff]
    %v1372 = vld [vmem:[%s5 + $0x260] sm:$0xff]
    %v1373 = vld [vmem:[%s5 + $0x268] sm:$0xff]
    %v1374 = vld [vmem:[%s5 + $0x270] sm:$0xff]
    %v1375 = vld [vmem:[%s5 + $0x278] sm:$0xff]
    %v1376 = vld [vmem:[%s5 + $0x280] sm:$0xff]
    %v1377 = vld [vmem:[%s5 + $0x288] sm:$0xff]
    %v1378 = vld [vmem:[%s5 + $0x290] sm:$0xff]
    %v1379 = vld [vmem:[%s5 + $0x298] sm:$0xff]
    %v1380 = vld [vmem:[%s5 + $0x2a0] sm:$0xff]
    %v1381 = vld [vmem:[%s5 + $0x2a8] sm:$0xff]
    %v1382 = vld [vmem:[%s5 + $0x2b0] sm:$0xff]
    %v1383 = vld [vmem:[%s5 + $0x2b8] sm:$0xff]
    %v1384 = vld [vmem:[%s5 + $0x2c0] sm:$0xff]
    %v1385 = vld [vmem:[%s5 + $0x2c8] sm:$0xff]
    %v1386 = vld [vmem:[%s5 + $0x2d0] sm:$0xff]
    %v1387 = vld [vmem:[%s5 + $0x2d8] sm:$0xff]
    %v1388 = vld [vmem:[%s5 + $0x2e0] sm:$0xff]
    %v1389 = vld [vmem:[%s5 + $0x2e8] sm:$0xff]
    %v1390 = vld [vmem:[%s5 + $0x2f0] sm:$0xff]
    %v1391 = vld [vmem:[%s5 + $0x2f8] sm:$0xff]
    %v1392 = vld [vmem:[%s5 + $0x300] sm:$0xff]
    %v1393 = vld [vmem:[%s5 + $0x308] sm:$0xff]
    %v1394 = vld [vmem:[%s5 + $0x310] sm:$0xff]
    %v1395 = vld [vmem:[%s5 + $0x318] sm:$0xff]
    %v1396 = vld [vmem:[%s5 + $0x320] sm:$0xff]
    %v1397 = vld [vmem:[%s5 + $0x328] sm:$0xff]
    %v1398 = vld [vmem:[%s5 + $0x330] sm:$0xff]
    %v1399 = vld [vmem:[%s5 + $0x338] sm:$0xff]
    %v1400 = vld [vmem:[%s5 + $0x340] sm:$0xff]
    %v1401 = vld [vmem:[%s5 + $0x348] sm:$0xff]
    %v1402 = vld [vmem:[%s5 + $0x350] sm:$0xff]
    %v1403 = vld [vmem:[%s5 + $0x358] sm:$0xff]
    %v1404 = vld [vmem:[%s5 + $0x360] sm:$0xff]
    %v1405 = vld [vmem:[%s5 + $0x368] sm:$0xff]
    %v1406 = vld [vmem:[%s5 + $0x370] sm:$0xff]
    %v1407 = vld [vmem:[%s5 + $0x378] sm:$0xff]
    %v1408 = vld [vmem:[%s5 + $0x380] sm:$0xff]
    %v1409 = vld [vmem:[%s5 + $0x388] sm:$0xff]
    %v1410 = vld [vmem:[%s5 + $0x390] sm:$0xff]
    %v1411 = vld [vmem:[%s5 + $0x398] sm:$0xff]
    %v1412 = vld [vmem:[%s5 + $0x3a0] sm:$0xff]
    %v1413 = vld [vmem:[%s5 + $0x3a8] sm:$0xff]
    %v1414 = vld [vmem:[%s5 + $0x3b0] sm:$0xff]
    %v1415 = vld [vmem:[%s5 + $0x3b8] sm:$0xff]
    %v1416 = vld [vmem:[%s5 + $0x3c0] sm:$0xff]
    %v1417 = vld [vmem:[%s5 + $0x3c8] sm:$0xff]
    %v1418 = vld [vmem:[%s5 + $0x3d0] sm:$0xff]
    %v1419 = vld [vmem:[%s5 + $0x3d8] sm:$0xff]
    %v1420 = vld [vmem:[%s5 + $0x3e0] sm:$0xff]
    %v1421 = vld [vmem:[%s5 + $0x3e8] sm:$0xff]
    %v1422 = vld [vmem:[%s5 + $0x3f0] sm:$0xff]
    %v1423 = vld [vmem:[%s5 + $0x3f8] sm:$0xff]
    %v1424 = vld [vmem:[%s5 + $0x400] sm:$0xff]
    %v1425 = vld [vmem:[%s5 + $0x408] sm:$0xff]
    %v1426 = vld [vmem:[%s5 + $0x410] sm:$0xff]
    %v1427 = vld [vmem:[%s5 + $0x418] sm:$0xff]
    %v1428 = vld [vmem:[%s5 + $0x420] sm:$0xff]
    %v1429 = vld [vmem:[%s5 + $0x428] sm:$0xff]
    %v1430 = vld [vmem:[%s5 + $0x430] sm:$0xff]
    %v1431 = vld [vmem:[%s5 + $0x438] sm:$0xff]
    %v1432 = vld [vmem:[%s5 + $0x440] sm:$0xff]
    %v1433 = vld [vmem:[%s5 + $0x448] sm:$0xff]
    %v1434 = vld [vmem:[%s5 + $0x450] sm:$0xff]
    %v1435 = vld [vmem:[%s5 + $0x458] sm:$0xff]
    %v1436 = vld [vmem:[%s5 + $0x460] sm:$0xff]
    %v1437 = vld [vmem:[%s5 + $0x468] sm:$0xff]
    %v1438 = vld [vmem:[%s5 + $0x470] sm:$0xff]
    %v1439 = vld [vmem:[%s5 + $0x478] sm:$0xff]
    %v1440 = vld [vmem:[%s5 + $0x480] sm:$0xff]
    %v1441 = vld [vmem:[%s5 + $0x488] sm:$0xff]
    %v1442 = vld [vmem:[%s5 + $0x490] sm:$0xff]
    %v1443 = vld [vmem:[%s5 + $0x498] sm:$0xff]
    %v1444 = vld [vmem:[%s5 + $0x4a0] sm:$0xff]
    %v1445 = vld [vmem:[%s5 + $0x4a8] sm:$0xff]
    %v1446 = vld [vmem:[%s5 + $0x4b0] sm:$0xff]
    %v1447 = vld [vmem:[%s5 + $0x4b8] sm:$0xff]
    %v1448 = vld [vmem:[%s5 + $0x4c0] sm:$0xff]
    %v1449 = vld [vmem:[%s5 + $0x4c8] sm:$0xff]
    %v1450 = vld [vmem:[%s5 + $0x4d0] sm:$0xff]
    %v1451 = vld [vmem:[%s5 + $0x4d8] sm:$0xff]
    %v1452 = vld [vmem:[%s5 + $0x4e0] sm:$0xff]
    %v1453 = vld [vmem:[%s5 + $0x4e8] sm:$0xff]
    %v1454 = vld [vmem:[%s5 + $0x4f0] sm:$0xff]
    %v1455 = vld [vmem:[%s5 + $0x4f8] sm:$0xff]
    %v1456 = vld [vmem:[%s5 + $0x500] sm:$0xff]
    %v1457 = vld [vmem:[%s5 + $0x508] sm:$0xff]
    %v1458 = vld [vmem:[%s5 + $0x510] sm:$0xff]
    %v1459 = vld [vmem:[%s5 + $0x518] sm:$0xff]
    %v1460 = vld [vmem:[%s5 + $0x520] sm:$0xff]
    %v1461 = vld [vmem:[%s5 + $0x528] sm:$0xff]
    %v1462 = vld [vmem:[%s5 + $0x530] sm:$0xff]
    %v1463 = vld [vmem:[%s5 + $0x538] sm:$0xff]
    %v1464 = vld [vmem:[%s5 + $0x540] sm:$0xff]
    %v1465 = vld [vmem:[%s5 + $0x548] sm:$0xff]
    %v1466 = vld [vmem:[%s5 + $0x550] sm:$0xff]
    %v1467 = vld [vmem:[%s5 + $0x558] sm:$0xff]
    %v1468 = vld [vmem:[%s5 + $0x560] sm:$0xff]
    %v1469 = vld [vmem:[%s5 + $0x568] sm:$0xff]
    %v1470 = vld [vmem:[%s5 + $0x570] sm:$0xff]
    %v1471 = vld [vmem:[%s5 + $0x578] sm:$0xff]
    %v1472 = vld [vmem:[%s5 + $0x580] sm:$0xff]
    %v1473 = vld [vmem:[%s5 + $0x588] sm:$0xff]
    %v1474 = vld [vmem:[%s5 + $0x590] sm:$0xff]
    %v1475 = vld [vmem:[%s5 + $0x598] sm:$0xff]
    %v1476 = vld [vmem:[%s5 + $0x5a0] sm:$0xff]
    %v1477 = vld [vmem:[%s5 + $0x5a8] sm:$0xff]
    %v1478 = vld [vmem:[%s5 + $0x5b0] sm:$0xff]
    %v1479 = vld [vmem:[%s5 + $0x5b8] sm:$0xff]
    %v1480 = vld [vmem:[%s5 + $0x5c0] sm:$0xff]
    %v1481 = vld [vmem:[%s5 + $0x5c8] sm:$0xff]
    %v1482 = vld [vmem:[%s5 + $0x5d0] sm:$0xff]
    %v1483 = vld [vmem:[%s5 + $0x5d8] sm:$0xff]
    %v1484 = vld [vmem:[%s5 + $0x5e0] sm:$0xff]
    %v1485 = vld [vmem:[%s5 + $0x5e8] sm:$0xff]
    %v1486 = vld [vmem:[%s5 + $0x5f0] sm:$0xff]
    %v1487 = vld [vmem:[%s5 + $0x5f8] sm:$0xff]
    %v1488 = vld [vmem:[%s5 + $0x600] sm:$0xff]
    %v1489 = vld [vmem:[%s5 + $0x608] sm:$0xff]
    %v1490 = vld [vmem:[%s5 + $0x610] sm:$0xff]
    %v1491 = vld [vmem:[%s5 + $0x618] sm:$0xff]
    %v1492 = vld [vmem:[%s5 + $0x620] sm:$0xff]
    %v1493 = vld [vmem:[%s5 + $0x628] sm:$0xff]
    %v1494 = vld [vmem:[%s5 + $0x630] sm:$0xff]
    %v1495 = vld [vmem:[%s5 + $0x638] sm:$0xff]
    %v1496 = vld [vmem:[%s5 + $0x640] sm:$0xff]
    %v1497 = vld [vmem:[%s5 + $0x648] sm:$0xff]
    %v1498 = vld [vmem:[%s5 + $0x650] sm:$0xff]
    %v1499 = vld [vmem:[%s5 + $0x658] sm:$0xff]
    %v1500 = vld [vmem:[%s5 + $0x660] sm:$0xff]
    %v1501 = vld [vmem:[%s5 + $0x668] sm:$0xff]
    %v1502 = vld [vmem:[%s5 + $0x670] sm:$0xff]
    %v1503 = vld [vmem:[%s5 + $0x678] sm:$0xff]
    %v1504 = vld [vmem:[%s5 + $0x680] sm:$0xff]
    %v1505 = vld [vmem:[%s5 + $0x688] sm:$0xff]
    %v1506 = vld [vmem:[%s5 + $0x690] sm:$0xff]
    %v1507 = vld [vmem:[%s5 + $0x698] sm:$0xff]
    %v1508 = vld [vmem:[%s5 + $0x6a0] sm:$0xff]
    %v1509 = vld [vmem:[%s5 + $0x6a8] sm:$0xff]
    %v1510 = vld [vmem:[%s5 + $0x6b0] sm:$0xff]
    %v1511 = vld [vmem:[%s5 + $0x6b8] sm:$0xff]
    %v1512 = vld [vmem:[%s5 + $0x6c0] sm:$0xff]
    %v1513 = vld [vmem:[%s5 + $0x6c8] sm:$0xff]
    %v1514 = vld [vmem:[%s5 + $0x6d0] sm:$0xff]
    %v1515 = vld [vmem:[%s5 + $0x6d8] sm:$0xff]
    %v1516 = vld [vmem:[%s5 + $0x6e0] sm:$0xff]
    %v1517 = vld [vmem:[%s5 + $0x6e8] sm:$0xff]
    %v1518 = vld [vmem:[%s5 + $0x6f0] sm:$0xff]
    %v1519 = vld [vmem:[%s5 + $0x6f8] sm:$0xff]
    %v1520 = vld [vmem:[%s5 + $0x700] sm:$0xff]
    %v1521 = vld [vmem:[%s5 + $0x708] sm:$0xff]
    %v1522 = vld [vmem:[%s5 + $0x710] sm:$0xff]
    %v1523 = vld [vmem:[%s5 + $0x718] sm:$0xff]
    %v1524 = vld [vmem:[%s5 + $0x720] sm:$0xff]
    %v1525 = vld [vmem:[%s5 + $0x728] sm:$0xff]
    %v1526 = vld [vmem:[%s5 + $0x730] sm:$0xff]
    %v1527 = vld [vmem:[%s5 + $0x738] sm:$0xff]
    %v1528 = vld [vmem:[%s5 + $0x740] sm:$0xff]
    %v1529 = vld [vmem:[%s5 + $0x748] sm:$0xff]
    %v1530 = vld [vmem:[%s5 + $0x750] sm:$0xff]
    %v1531 = vld [vmem:[%s5 + $0x758] sm:$0xff]
    %v1532 = vld [vmem:[%s5 + $0x760] sm:$0xff]
    %v1533 = vld [vmem:[%s5 + $0x768] sm:$0xff]
    %v1534 = vld [vmem:[%s5 + $0x770] sm:$0xff]
    %v1535 = vld [vmem:[%s5 + $0x778] sm:$0xff]
    %v1536 = vld [vmem:[%s5 + $0x780] sm:$0xff]
    %v1537 = vld [vmem:[%s5 + $0x788] sm:$0xff]
    %v1538 = vld [vmem:[%s5 + $0x790] sm:$0xff]
    %v1539 = vld [vmem:[%s5 + $0x798] sm:$0xff]
    %v1540 = vld [vmem:[%s5 + $0x7a0] sm:$0xff]
    %v1541 = vld [vmem:[%s5 + $0x7a8] sm:$0xff]
    %v1542 = vld [vmem:[%s5 + $0x7b0] sm:$0xff]
    %v1543 = vld [vmem:[%s5 + $0x7b8] sm:$0xff]
    %v1544 = vld [vmem:[%s5 + $0x7c0] sm:$0xff]
    %v1545 = vld [vmem:[%s5 + $0x7c8] sm:$0xff]
    %v1546 = vld [vmem:[%s5 + $0x7d0] sm:$0xff]
    %v1547 = vld [vmem:[%s5 + $0x7d8] sm:$0xff]
    %v1548 = vld [vmem:[%s5 + $0x7e0] sm:$0xff]
    %v1549 = vld [vmem:[%s5 + $0x7e8] sm:$0xff]
    %v1550 = vld [vmem:[%s5 + $0x7f0] sm:$0xff]
    %v1551 = vld [vmem:[%s5 + $0x7f8] sm:$0xff]
    %1552 = vmatprep.subr.mxu0 0.0
    %1553 = vmatpush1.msra.mxu0 %v1296
    %1554 = vmatprep.subr.mxu0 0.0
    %1555 = vmatpush1.msra.mxu0 %v1297
    %1556 = vmatprep.subr.mxu0 0.0
    %1557 = vmatpush1.msra.mxu0 %v1298
    %1558 = vmatprep.subr.mxu0 0.0
    %1559 = vmatpush1.msra.mxu0 %v1299
    %1560 = vmatprep.subr.mxu0 0.0
    %1561 = vmatpush1.msra.mxu0 %v1300
    %1562 = vmatprep.subr.mxu0 0.0
    %1563 = vmatpush1.msra.mxu0 %v1301
    %1564 = vmatprep.subr.mxu0 0.0
    %1565 = vmatpush1.msra.mxu0 %v1302
    %1566 = vmatprep.subr.mxu0 0.0
    %1567 = vmatpush1.msra.mxu0 %v1303
    %1568 = vmatprep.subr.mxu0 0.0
    %1569 = vmatpush1.msra.mxu0 %v1304
    %1570 = vmatprep.subr.mxu0 0.0
    %1571 = vmatpush1.msra.mxu0 %v1305
    %1572 = vmatprep.subr.mxu0 0.0
    %1573 = vmatpush1.msra.mxu0 %v1306
    %1574 = vmatprep.subr.mxu0 0.0
    %1575 = vmatpush1.msra.mxu0 %v1307
    %1576 = vmatprep.subr.mxu0 0.0
    %1577 = vmatpush1.msra.mxu0 %v1308
    %1578 = vmatprep.subr.mxu0 0.0
    %1579 = vmatpush1.msra.mxu0 %v1309
    %1580 = vmatprep.subr.mxu0 0.0
    %1581 = vmatpush1.msra.mxu0 %v1310
    %1582 = vmatprep.subr.mxu0 0.0
    %1583 = vmatpush1.msra.mxu0 %v1311
    %1584 = vmatprep.subr.mxu0 0.0
    %1585 = vmatpush1.msra.mxu0 %v1312
    %1586 = vmatprep.subr.mxu0 0.0
    %1587 = vmatpush1.msra.mxu0 %v1313
    %1588 = vmatprep.subr.mxu0 0.0
    %1589 = vmatpush1.msra.mxu0 %v1314
    %1590 = vmatprep.subr.mxu0 0.0
    %1591 = vmatpush1.msra.mxu0 %v1315
    %1592 = vmatprep.subr.mxu0 0.0
    %1593 = vmatpush1.msra.mxu0 %v1316
    %1594 = vmatprep.subr.mxu0 0.0
    %1595 = vmatpush1.msra.mxu0 %v1317
    %1596 = vmatprep.subr.mxu0 0.0
    %1597 = vmatpush1.msra.mxu0 %v1318
    %1598 = vmatprep.subr.mxu0 0.0
    %1599 = vmatpush1.msra.mxu0 %v1319
    %1600 = vmatprep.subr.mxu0 0.0
    %1601 = vmatpush1.msra.mxu0 %v1320
    %1602 = vmatprep.subr.mxu0 0.0
    %1603 = vmatpush1.msra.mxu0 %v1321
    %1604 = vmatprep.subr.mxu0 0.0
    %1605 = vmatpush1.msra.mxu0 %v1322
    %1606 = vmatprep.subr.mxu0 0.0
    %1607 = vmatpush1.msra.mxu0 %v1323
    %1608 = vmatprep.subr.mxu0 0.0
    %1609 = vmatpush1.msra.mxu0 %v1324
    %1610 = vmatprep.subr.mxu0 0.0
    %1611 = vmatpush1.msra.mxu0 %v1325
    %1612 = vmatprep.subr.mxu0 0.0
    %1613 = vmatpush1.msra.mxu0 %v1326
    %1614 = vmatprep.subr.mxu0 0.0
    %1615 = vmatpush1.msra.mxu0 %v1327
    %1616 = vmatprep.mubr.f32.mxu0 %v1281
    %1617 = vmatmul.mubr.f32.gmra.mrb[0].mxu0 %v1280
    %v1618 = vpop.f32.mrb[0].mxu0
    %v1619 = vadd.f32 0.0, %v1618
    %v1620 = vpop.f32.mrb[0].mxu0
    %1621 = vdwg.mxu0
    %1622 = vmatprep.subr.mxu0 0.0
    %1623 = vmatpush1.msra.mxu0 %v1328
    %1624 = vmatprep.subr.mxu0 0.0
    %1625 = vmatpush1.msra.mxu0 %v1329
    %1626 = vmatprep.subr.mxu0 0.0
    %1627 = vmatpush1.msra.mxu0 %v1330
    %1628 = vmatprep.subr.mxu0 0.0
    %1629 = vmatpush1.msra.mxu0 %v1331
    %1630 = vmatprep.subr.mxu0 0.0
    %1631 = vmatpush1.msra.mxu0 %v1332
    %1632 = vmatprep.subr.mxu0 0.0
    %1633 = vmatpush1.msra.mxu0 %v1333
    %1634 = vmatprep.subr.mxu0 0.0
    %1635 = vmatpush1.msra.mxu0 %v1334
    %1636 = vmatprep.subr.mxu0 0.0
    %1637 = vmatpush1.msra.mxu0 %v1335
    %1638 = vmatprep.subr.mxu0 0.0
    %1639 = vmatpush1.msra.mxu0 %v1336
    %1640 = vmatprep.subr.mxu0 0.0
    %1641 = vmatpush1.msra.mxu0 %v1337
    %1642 = vmatprep.subr.mxu0 0.0
    %1643 = vmatpush1.msra.mxu0 %v1338
    %1644 = vmatprep.subr.mxu0 0.0
    %1645 = vmatpush1.msra.mxu0 %v1339
    %1646 = vmatprep.subr.mxu0 0.0
    %1647 = vmatpush1.msra.mxu0 %v1340
    %1648 = vmatprep.subr.mxu0 0.0
    %1649 = vmatpush1.msra.mxu0 %v1341
    %1650 = vmatprep.subr.mxu0 0.0
    %1651 = vmatpush1.msra.mxu0 %v1342
    %1652 = vmatprep.subr.mxu0 0.0
    %1653 = vmatpush1.msra.mxu0 %v1343
    %1654 = vmatprep.subr.mxu0 0.0
    %1655 = vmatpush1.msra.mxu0 %v1344
    %1656 = vmatprep.subr.mxu0 0.0
    %1657 = vmatpush1.msra.mxu0 %v1345
    %1658 = vmatprep.subr.mxu0 0.0
    %1659 = vmatpush1.msra.mxu0 %v1346
    %1660 = vmatprep.subr.mxu0 0.0
    %1661 = vmatpush1.msra.mxu0 %v1347
    %1662 = vmatprep.subr.mxu0 0.0
    %1663 = vmatpush1.msra.mxu0 %v1348
    %1664 = vmatprep.subr.mxu0 0.0
    %1665 = vmatpush1.msra.mxu0 %v1349
    %1666 = vmatprep.subr.mxu0 0.0
    %1667 = vmatpush1.msra.mxu0 %v1350
    %1668 = vmatprep.subr.mxu0 0.0
    %1669 = vmatpush1.msra.mxu0 %v1351
    %1670 = vmatprep.subr.mxu0 0.0
    %1671 = vmatpush1.msra.mxu0 %v1352
    %1672 = vmatprep.subr.mxu0 0.0
    %1673 = vmatpush1.msra.mxu0 %v1353
    %1674 = vmatprep.subr.mxu0 0.0
    %1675 = vmatpush1.msra.mxu0 %v1354
    %1676 = vmatprep.subr.mxu0 0.0
    %1677 = vmatpush1.msra.mxu0 %v1355
    %1678 = vmatprep.subr.mxu0 0.0
    %1679 = vmatpush1.msra.mxu0 %v1356
    %1680 = vmatprep.subr.mxu0 0.0
    %1681 = vmatpush1.msra.mxu0 %v1357
    %1682 = vmatprep.subr.mxu0 0.0
    %1683 = vmatpush1.msra.mxu0 %v1358
    %1684 = vmatprep.subr.mxu0 0.0
    %1685 = vmatpush1.msra.mxu0 %v1359
    %1686 = vmatprep.mubr.f32.mxu0 %v1283
    %1687 = vmatmul.mubr.f32.gmra.mrb[0].mxu0 %v1282
    %v1688 = vpop.f32.mrb[0].mxu0
    %v1689 = vadd.f32 %v1619, %v1688
    %v1690 = vpop.f32.mrb[0].mxu0
    %1691 = vdwg.mxu0
    %1692 = vmatprep.subr.mxu0 0.0
    %1693 = vmatpush1.msra.mxu0 %v1360
    %1694 = vmatprep.subr.mxu0 0.0
    %1695 = vmatpush1.msra.mxu0 %v1361
    %1696 = vmatprep.subr.mxu0 0.0
    %1697 = vmatpush1.msra.mxu0 %v1362
    %1698 = vmatprep.subr.mxu0 0.0
    %1699 = vmatpush1.msra.mxu0 %v1363
    %1700 = vmatprep.subr.mxu0 0.0
    %1701 = vmatpush1.msra.mxu0 %v1364
    %1702 = vmatprep.subr.mxu0 0.0
    %1703 = vmatpush1.msra.mxu0 %v1365
    %1704 = vmatprep.subr.mxu0 0.0
    %1705 = vmatpush1.msra.mxu0 %v1366
    %1706 = vmatprep.subr.mxu0 0.0
    %1707 = vmatpush1.msra.mxu0 %v1367
    %1708 = vmatprep.subr.mxu0 0.0
    %1709 = vmatpush1.msra.mxu0 %v1368
    %1710 = vmatprep.subr.mxu0 0.0
    %1711 = vmatpush1.msra.mxu0 %v1369
    %1712 = vmatprep.subr.mxu0 0.0
    %1713 = vmatpush1.msra.mxu0 %v1370
    %1714 = vmatprep.subr.mxu0 0.0
    %1715 = vmatpush1.msra.mxu0 %v1371
    %1716 = vmatprep.subr.mxu0 0.0
    %1717 = vmatpush1.msra.mxu0 %v1372
    %1718 = vmatprep.subr.mxu0 0.0
    %1719 = vmatpush1.msra.mxu0 %v1373
    %1720 = vmatprep.subr.mxu0 0.0
    %1721 = vmatpush1.msra.mxu0 %v1374
    %1722 = vmatprep.subr.mxu0 0.0
    %1723 = vmatpush1.msra.mxu0 %v1375
    %1724 = vmatprep.subr.mxu0 0.0
    %1725 = vmatpush1.msra.mxu0 %v1376
    %1726 = vmatprep.subr.mxu0 0.0
    %1727 = vmatpush1.msra.mxu0 %v1377
    %1728 = vmatprep.subr.mxu0 0.0
    %1729 = vmatpush1.msra.mxu0 %v1378
    %1730 = vmatprep.subr.mxu0 0.0
    %1731 = vmatpush1.msra.mxu0 %v1379
    %1732 = vmatprep.subr.mxu0 0.0
    %1733 = vmatpush1.msra.mxu0 %v1380
    %1734 = vmatprep.subr.mxu0 0.0
    %1735 = vmatpush1.msra.mxu0 %v1381
    %1736 = vmatprep.subr.mxu0 0.0
    %1737 = vmatpush1.msra.mxu0 %v1382
    %1738 = vmatprep.subr.mxu0 0.0
    %1739 = vmatpush1.msra.mxu0 %v1383
    %1740 = vmatprep.subr.mxu0 0.0
    %1741 = vmatpush1.msra.mxu0 %v1384
    %1742 = vmatprep.subr.mxu0 0.0
    %1743 = vmatpush1.msra.mxu0 %v1385
    %1744 = vmatprep.subr.mxu0 0.0
    %1745 = vmatpush1.msra.mxu0 %v1386
    %1746 = vmatprep.subr.mxu0 0.0
    %1747 = vmatpush1.msra.mxu0 %v1387
    %1748 = vmatprep.subr.mxu0 0.0
    %1749 = vmatpush1.msra.mxu0 %v1388
    %1750 = vmatprep.subr.mxu0 0.0
    %1751 = vmatpush1.msra.mxu0 %v1389
    %1752 = vmatprep.subr.mxu0 0.0
    %1753 = vmatpush1.msra.mxu0 %v1390
    %1754 = vmatprep.subr.mxu0 0.0
    %1755 = vmatpush1.msra.mxu0 %v1391
    %1756 = vmatprep.mubr.f32.mxu0 %v1285
    %1757 = vmatmul.mubr.f32.gmra.mrb[0].mxu0 %v1284
    %v1758 = vpop.f32.mrb[0].mxu0
    %v1759 = vadd.f32 %v1689, %v1758
    %v1760 = vpop.f32.mrb[0].mxu0
    %1761 = vdwg.mxu0
    %1762 = vmatprep.subr.mxu0 0.0
    %1763 = vmatpush1.msra.mxu0 %v1392
    %1764 = vmatprep.subr.mxu0 0.0
    %1765 = vmatpush1.msra.mxu0 %v1393
    %1766 = vmatprep.subr.mxu0 0.0
    %1767 = vmatpush1.msra.mxu0 %v1394
    %1768 = vmatprep.subr.mxu0 0.0
    %1769 = vmatpush1.msra.mxu0 %v1395
    %1770 = vmatprep.subr.mxu0 0.0
    %1771 = vmatpush1.msra.mxu0 %v1396
    %1772 = vmatprep.subr.mxu0 0.0
    %1773 = vmatpush1.msra.mxu0 %v1397
    %1774 = vmatprep.subr.mxu0 0.0
    %1775 = vmatpush1.msra.mxu0 %v1398
    %1776 = vmatprep.subr.mxu0 0.0
    %1777 = vmatpush1.msra.mxu0 %v1399
    %1778 = vmatprep.subr.mxu0 0.0
    %1779 = vmatpush1.msra.mxu0 %v1400
    %1780 = vmatprep.subr.mxu0 0.0
    %1781 = vmatpush1.msra.mxu0 %v1401
    %1782 = vmatprep.subr.mxu0 0.0
    %1783 = vmatpush1.msra.mxu0 %v1402
    %1784 = vmatprep.subr.mxu0 0.0
    %1785 = vmatpush1.msra.mxu0 %v1403
    %1786 = vmatprep.subr.mxu0 0.0
    %1787 = vmatpush1.msra.mxu0 %v1404
    %1788 = vmatprep.subr.mxu0 0.0
    %1789 = vmatpush1.msra.mxu0 %v1405
    %1790 = vmatprep.subr.mxu0 0.0
    %1791 = vmatpush1.msra.mxu0 %v1406
    %1792 = vmatprep.subr.mxu0 0.0
    %1793 = vmatpush1.msra.mxu0 %v1407
    %1794 = vmatprep.subr.mxu0 0.0
    %1795 = vmatpush1.msra.mxu0 %v1408
    %1796 = vmatprep.subr.mxu0 0.0
    %1797 = vmatpush1.msra.mxu0 %v1409
    %1798 = vmatprep.subr.mxu0 0.0
    %1799 = vmatpush1.msra.mxu0 %v1410
    %1800 = vmatprep.subr.mxu0 0.0
    %1801 = vmatpush1.msra.mxu0 %v1411
    %1802 = vmatprep.subr.mxu0 0.0
    %1803 = vmatpush1.msra.mxu0 %v1412
    %1804 = vmatprep.subr.mxu0 0.0
    %1805 = vmatpush1.msra.mxu0 %v1413
    %1806 = vmatprep.subr.mxu0 0.0
    %1807 = vmatpush1.msra.mxu0 %v1414
    %1808 = vmatprep.subr.mxu0 0.0
    %1809 = vmatpush1.msra.mxu0 %v1415
    %1810 = vmatprep.subr.mxu0 0.0
    %1811 = vmatpush1.msra.mxu0 %v1416
    %1812 = vmatprep.subr.mxu0 0.0
    %1813 = vmatpush1.msra.mxu0 %v1417
    %1814 = vmatprep.subr.mxu0 0.0
    %1815 = vmatpush1.msra.mxu0 %v1418
    %1816 = vmatprep.subr.mxu0 0.0
    %1817 = vmatpush1.msra.mxu0 %v1419
    %1818 = vmatprep.subr.mxu0 0.0
    %1819 = vmatpush1.msra.mxu0 %v1420
    %1820 = vmatprep.subr.mxu0 0.0
    %1821 = vmatpush1.msra.mxu0 %v1421
    %1822 = vmatprep.subr.mxu0 0.0
    %1823 = vmatpush1.msra.mxu0 %v1422
    %1824 = vmatprep.subr.mxu0 0.0
    %1825 = vmatpush1.msra.mxu0 %v1423
    %1826 = vmatprep.mubr.f32.mxu0 %v1287
    %1827 = vmatmul.mubr.f32.gmra.mrb[0].mxu0 %v1286
    %v1828 = vpop.f32.mrb[0].mxu0
    %v1829 = vadd.f32 %v1759, %v1828
    %v1830 = vpop.f32.mrb[0].mxu0
    %1831 = vdwg.mxu0
    %1832 = vmatprep.subr.mxu0 0.0
    %1833 = vmatpush1.msra.mxu0 %v1424
    %1834 = vmatprep.subr.mxu0 0.0
    %1835 = vmatpush1.msra.mxu0 %v1425
    %1836 = vmatprep.subr.mxu0 0.0
    %1837 = vmatpush1.msra.mxu0 %v1426
    %1838 = vmatprep.subr.mxu0 0.0
    %1839 = vmatpush1.msra.mxu0 %v1427
    %1840 = vmatprep.subr.mxu0 0.0
    %1841 = vmatpush1.msra.mxu0 %v1428
    %1842 = vmatprep.subr.mxu0 0.0
    %1843 = vmatpush1.msra.mxu0 %v1429
    %1844 = vmatprep.subr.mxu0 0.0
    %1845 = vmatpush1.msra.mxu0 %v1430
    %1846 = vmatprep.subr.mxu0 0.0
    %1847 = vmatpush1.msra.mxu0 %v1431
    %1848 = vmatprep.subr.mxu0 0.0
    %1849 = vmatpush1.msra.mxu0 %v1432
    %1850 = vmatprep.subr.mxu0 0.0
    %1851 = vmatpush1.msra.mxu0 %v1433
    %1852 = vmatprep.subr.mxu0 0.0
    %1853 = vmatpush1.msra.mxu0 %v1434
    %1854 = vmatprep.subr.mxu0 0.0
    %1855 = vmatpush1.msra.mxu0 %v1435
    %1856 = vmatprep.subr.mxu0 0.0
    %1857 = vmatpush1.msra.mxu0 %v1436
    %1858 = vmatprep.subr.mxu0 0.0
    %1859 = vmatpush1.msra.mxu0 %v1437
    %1860 = vmatprep.subr.mxu0 0.0
    %1861 = vmatpush1.msra.mxu0 %v1438
    %1862 = vmatprep.subr.mxu0 0.0
    %1863 = vmatpush1.msra.mxu0 %v1439
    %1864 = vmatprep.subr.mxu0 0.0
    %1865 = vmatpush1.msra.mxu0 %v1440
    %1866 = vmatprep.subr.mxu0 0.0
    %1867 = vmatpush1.msra.mxu0 %v1441
    %1868 = vmatprep.subr.mxu0 0.0
    %1869 = vmatpush1.msra.mxu0 %v1442
    %1870 = vmatprep.subr.mxu0 0.0
    %1871 = vmatpush1.msra.mxu0 %v1443
    %1872 = vmatprep.subr.mxu0 0.0
    %1873 = vmatpush1.msra.mxu0 %v1444
    %1874 = vmatprep.subr.mxu0 0.0
    %1875 = vmatpush1.msra.mxu0 %v1445
    %1876 = vmatprep.subr.mxu0 0.0
    %1877 = vmatpush1.msra.mxu0 %v1446
    %1878 = vmatprep.subr.mxu0 0.0
    %1879 = vmatpush1.msra.mxu0 %v1447
    %1880 = vmatprep.subr.mxu0 0.0
    %1881 = vmatpush1.msra.mxu0 %v1448
    %1882 = vmatprep.subr.mxu0 0.0
    %1883 = vmatpush1.msra.mxu0 %v1449
    %1884 = vmatprep.subr.mxu0 0.0
    %1885 = vmatpush1.msra.mxu0 %v1450
    %1886 = vmatprep.subr.mxu0 0.0
    %1887 = vmatpush1.msra.mxu0 %v1451
    %1888 = vmatprep.subr.mxu0 0.0
    %1889 = vmatpush1.msra.mxu0 %v1452
    %1890 = vmatprep.subr.mxu0 0.0
    %1891 = vmatpush1.msra.mxu0 %v1453
    %1892 = vmatprep.subr.mxu0 0.0
    %1893 = vmatpush1.msra.mxu0 %v1454
    %1894 = vmatprep.subr.mxu0 0.0
    %1895 = vmatpush1.msra.mxu0 %v1455
    %1896 = vmatprep.mubr.f32.mxu0 %v1289
    %1897 = vmatmul.mubr.f32.gmra.mrb[0].mxu0 %v1288
    %v1898 = vpop.f32.mrb[0].mxu0
    %v1899 = vadd.f32 %v1829, %v1898
    %v1900 = vpop.f32.mrb[0].mxu0
    %1901 = vdwg.mxu0
    %1902 = vmatprep.subr.mxu0 0.0
    %1903 = vmatpush1.msra.mxu0 %v1456
    %1904 = vmatprep.subr.mxu0 0.0
    %1905 = vmatpush1.msra.mxu0 %v1457
    %1906 = vmatprep.subr.mxu0 0.0
    %1907 = vmatpush1.msra.mxu0 %v1458
    %1908 = vmatprep.subr.mxu0 0.0
    %1909 = vmatpush1.msra.mxu0 %v1459
    %1910 = vmatprep.subr.mxu0 0.0
    %1911 = vmatpush1.msra.mxu0 %v1460
    %1912 = vmatprep.subr.mxu0 0.0
    %1913 = vmatpush1.msra.mxu0 %v1461
    %1914 = vmatprep.subr.mxu0 0.0
    %1915 = vmatpush1.msra.mxu0 %v1462
    %1916 = vmatprep.subr.mxu0 0.0
    %1917 = vmatpush1.msra.mxu0 %v1463
    %1918 = vmatprep.subr.mxu0 0.0
    %1919 = vmatpush1.msra.mxu0 %v1464
    %1920 = vmatprep.subr.mxu0 0.0
    %1921 = vmatpush1.msra.mxu0 %v1465
    %1922 = vmatprep.subr.mxu0 0.0
    %1923 = vmatpush1.msra.mxu0 %v1466
    %1924 = vmatprep.subr.mxu0 0.0
    %1925 = vmatpush1.msra.mxu0 %v1467
    %1926 = vmatprep.subr.mxu0 0.0
    %1927 = vmatpush1.msra.mxu0 %v1468
    %1928 = vmatprep.subr.mxu0 0.0
    %1929 = vmatpush1.msra.mxu0 %v1469
    %1930 = vmatprep.subr.mxu0 0.0
    %1931 = vmatpush1.msra.mxu0 %v1470
    %1932 = vmatprep.subr.mxu0 0.0
    %1933 = vmatpush1.msra.mxu0 %v1471
    %1934 = vmatprep.subr.mxu0 0.0
    %1935 = vmatpush1.msra.mxu0 %v1472
    %1936 = vmatprep.subr.mxu0 0.0
    %1937 = vmatpush1.msra.mxu0 %v1473
    %1938 = vmatprep.subr.mxu0 0.0
    %1939 = vmatpush1.msra.mxu0 %v1474
    %1940 = vmatprep.subr.mxu0 0.0
    %1941 = vmatpush1.msra.mxu0 %v1475
    %1942 = vmatprep.subr.mxu0 0.0
    %1943 = vmatpush1.msra.mxu0 %v1476
    %1944 = vmatprep.subr.mxu0 0.0
    %1945 = vmatpush1.msra.mxu0 %v1477
    %1946 = vmatprep.subr.mxu0 0.0
    %1947 = vmatpush1.msra.mxu0 %v1478
    %1948 = vmatprep.subr.mxu0 0.0
    %1949 = vmatpush1.msra.mxu0 %v1479
    %1950 = vmatprep.subr.mxu0 0.0
    %1951 = vmatpush1.msra.mxu0 %v1480
    %1952 = vmatprep.subr.mxu0 0.0
    %1953 = vmatpush1.msra.mxu0 %v1481
    %1954 = vmatprep.subr.mxu0 0.0
    %1955 = vmatpush1.msra.mxu0 %v1482
    %1956 = vmatprep.subr.mxu0 0.0
    %1957 = vmatpush1.msra.mxu0 %v1483
    %1958 = vmatprep.subr.mxu0 0.0
    %1959 = vmatpush1.msra.mxu0 %v1484
    %1960 = vmatprep.subr.mxu0 0.0
    %1961 = vmatpush1.msra.mxu0 %v1485
    %1962 = vmatprep.subr.mxu0 0.0
    %1963 = vmatpush1.msra.mxu0 %v1486
    %1964 = vmatprep.subr.mxu0 0.0
    %1965 = vmatpush1.msra.mxu0 %v1487
    %1966 = vmatprep.mubr.f32.mxu0 %v1291
    %1967 = vmatmul.mubr.f32.gmra.mrb[0].mxu0 %v1290
    %v1968 = vpop.f32.mrb[0].mxu0
    %v1969 = vadd.f32 %v1899, %v1968
    %v1970 = vpop.f32.mrb[0].mxu0
    %1971 = vdwg.mxu0
    %1972 = vmatprep.subr.mxu0 0.0
    %1973 = vmatpush1.msra.mxu0 %v1488
    %1974 = vmatprep.subr.mxu0 0.0
    %1975 = vmatpush1.msra.mxu0 %v1489
    %1976 = vmatprep.subr.mxu0 0.0
    %1977 = vmatpush1.msra.mxu0 %v1490
    %1978 = vmatprep.subr.mxu0 0.0
    %1979 = vmatpush1.msra.mxu0 %v1491
    %1980 = vmatprep.subr.mxu0 0.0
    %1981 = vmatpush1.msra.mxu0 %v1492
    %1982 = vmatprep.subr.mxu0 0.0
    %1983 = vmatpush1.msra.mxu0 %v1493
    %1984 = vmatprep.subr.mxu0 0.0
    %1985 = vmatpush1.msra.mxu0 %v1494
    %1986 = vmatprep.subr.mxu0 0.0
    %1987 = vmatpush1.msra.mxu0 %v1495
    %1988 = vmatprep.subr.mxu0 0.0
    %1989 = vmatpush1.msra.mxu0 %v1496
    %1990 = vmatprep.subr.mxu0 0.0
    %1991 = vmatpush1.msra.mxu0 %v1497
    %1992 = vmatprep.subr.mxu0 0.0
    %1993 = vmatpush1.msra.mxu0 %v1498
    %1994 = vmatprep.subr.mxu0 0.0
    %1995 = vmatpush1.msra.mxu0 %v1499
    %1996 = vmatprep.subr.mxu0 0.0
    %1997 = vmatpush1.msra.mxu0 %v1500
    %1998 = vmatprep.subr.mxu0 0.0
    %1999 = vmatpush1.msra.mxu0 %v1501
    %2000 = vmatprep.subr.mxu0 0.0
    %2001 = vmatpush1.msra.mxu0 %v1502
    %2002 = vmatprep.subr.mxu0 0.0
    %2003 = vmatpush1.msra.mxu0 %v1503
    %2004 = vmatprep.subr.mxu0 0.0
    %2005 = vmatpush1.msra.mxu0 %v1504
    %2006 = vmatprep.subr.mxu0 0.0
    %2007 = vmatpush1.msra.mxu0 %v1505
    %2008 = vmatprep.subr.mxu0 0.0
    %2009 = vmatpush1.msra.mxu0 %v1506
    %2010 = vmatprep.subr.mxu0 0.0
    %2011 = vmatpush1.msra.mxu0 %v1507
    %2012 = vmatprep.subr.mxu0 0.0
    %2013 = vmatpush1.msra.mxu0 %v1508
    %2014 = vmatprep.subr.mxu0 0.0
    %2015 = vmatpush1.msra.mxu0 %v1509
    %2016 = vmatprep.subr.mxu0 0.0
    %2017 = vmatpush1.msra.mxu0 %v1510
    %2018 = vmatprep.subr.mxu0 0.0
    %2019 = vmatpush1.msra.mxu0 %v1511
    %2020 = vmatprep.subr.mxu0 0.0
    %2021 = vmatpush1.msra.mxu0 %v1512
    %2022 = vmatprep.subr.mxu0 0.0
    %2023 = vmatpush1.msra.mxu0 %v1513
    %2024 = vmatprep.subr.mxu0 0.0
    %2025 = vmatpush1.msra.mxu0 %v1514
    %2026 = vmatprep.subr.mxu0 0.0
    %2027 = vmatpush1.msra.mxu0 %v1515
    %2028 = vmatprep.subr.mxu0 0.0
    %2029 = vmatpush1.msra.mxu0 %v1516
    %2030 = vmatprep.subr.mxu0 0.0
    %2031 = vmatpush1.msra.mxu0 %v1517
    %2032 = vmatprep.subr.mxu0 0.0
    %2033 = vmatpush1.msra.mxu0 %v1518
    %2034 = vmatprep.subr.mxu0 0.0
    %2035 = vmatpush1.msra.mxu0 %v1519
    %2036 = vmatprep.mubr.f32.mxu0 %v1293
    %2037 = vmatmul.mubr.f32.gmra.mrb[0].mxu0 %v1292
    %v2038 = vpop.f32.mrb[0].mxu0
    %v2039 = vadd.f32 %v1969, %v2038
    %v2040 = vpop.f32.mrb[0].mxu0
    %2041 = vdwg.mxu0
    %2042 = vmatprep.subr.mxu0 0.0
    %2043 = vmatpush1.msra.mxu0 %v1520
    %2044 = vmatprep.subr.mxu0 0.0
    %2045 = vmatpush1.msra.mxu0 %v1521
    %2046 = vmatprep.subr.mxu0 0.0
    %2047 = vmatpush1.msra.mxu0 %v1522
    %2048 = vmatprep.subr.mxu0 0.0
    %2049 = vmatpush1.msra.mxu0 %v1523
    %2050 = vmatprep.subr.mxu0 0.0
    %2051 = vmatpush1.msra.mxu0 %v1524
    %2052 = vmatprep.subr.mxu0 0.0
    %2053 = vmatpush1.msra.mxu0 %v1525
    %2054 = vmatprep.subr.mxu0 0.0
    %2055 = vmatpush1.msra.mxu0 %v1526
    %2056 = vmatprep.subr.mxu0 0.0
    %2057 = vmatpush1.msra.mxu0 %v1527
    %2058 = vmatprep.subr.mxu0 0.0
    %2059 = vmatpush1.msra.mxu0 %v1528
    %2060 = vmatprep.subr.mxu0 0.0
    %2061 = vmatpush1.msra.mxu0 %v1529
    %2062 = vmatprep.subr.mxu0 0.0
    %2063 = vmatpush1.msra.mxu0 %v1530
    %2064 = vmatprep.subr.mxu0 0.0
    %2065 = vmatpush1.msra.mxu0 %v1531
    %2066 = vmatprep.subr.mxu0 0.0
    %2067 = vmatpush1.msra.mxu0 %v1532
    %2068 = vmatprep.subr.mxu0 0.0
    %2069 = vmatpush1.msra.mxu0 %v1533
    %2070 = vmatprep.subr.mxu0 0.0
    %2071 = vmatpush1.msra.mxu0 %v1534
    %2072 = vmatprep.subr.mxu0 0.0
    %2073 = vmatpush1.msra.mxu0 %v1535
    %2074 = vmatprep.subr.mxu0 0.0
    %2075 = vmatpush1.msra.mxu0 %v1536
    %2076 = vmatprep.subr.mxu0 0.0
    %2077 = vmatpush1.msra.mxu0 %v1537
    %2078 = vmatprep.subr.mxu0 0.0
    %2079 = vmatpush1.msra.mxu0 %v1538
    %2080 = vmatprep.subr.mxu0 0.0
    %2081 = vmatpush1.msra.mxu0 %v1539
    %2082 = vmatprep.subr.mxu0 0.0
    %2083 = vmatpush1.msra.mxu0 %v1540
    %2084 = vmatprep.subr.mxu0 0.0
    %2085 = vmatpush1.msra.mxu0 %v1541
    %2086 = vmatprep.subr.mxu0 0.0
    %2087 = vmatpush1.msra.mxu0 %v1542
    %2088 = vmatprep.subr.mxu0 0.0
    %2089 = vmatpush1.msra.mxu0 %v1543
    %2090 = vmatprep.subr.mxu0 0.0
    %2091 = vmatpush1.msra.mxu0 %v1544
    %2092 = vmatprep.subr.mxu0 0.0
    %2093 = vmatpush1.msra.mxu0 %v1545
    %2094 = vmatprep.subr.mxu0 0.0
    %2095 = vmatpush1.msra.mxu0 %v1546
    %2096 = vmatprep.subr.mxu0 0.0
    %2097 = vmatpush1.msra.mxu0 %v1547
    %2098 = vmatprep.subr.mxu0 0.0
    %2099 = vmatpush1.msra.mxu0 %v1548
    %2100 = vmatprep.subr.mxu0 0.0
    %2101 = vmatpush1.msra.mxu0 %v1549
    %2102 = vmatprep.subr.mxu0 0.0
    %2103 = vmatpush1.msra.mxu0 %v1550
    %2104 = vmatprep.subr.mxu0 0.0
    %2105 = vmatpush1.msra.mxu0 %v1551
    %2106 = vmatprep.mubr.f32.mxu0 %v1295
    %2107 = vmatmul.mubr.f32.gmra.mrb[0].mxu0 %v1294
    %v2108 = vpop.f32.mrb[0].mxu0
    %v2109 = vadd.f32 %v2039, %v2108
    %v2110 = vpop.f32.mrb[0].mxu0
    %2111 = vdwg.mxu0
    %vm2112 = vcmask 58368
    %v2113 = vsel %vm2112, %v2109, -inf
    %2114 = vmax.xlane.f32.xlu0 %v2113
    %v2115 = vpop.xlane.xlu0 %2114
    %v2116 = vsub.f32 %v2109, %v2115
    %v2117 = vmul.f32 %v2116, 1.442695
    %v2118 = vpow.pop %v2117
    %v2119 = vsel %vm2112, %v2118, 0.0
    %2120 = vadd.xlane.f32.xlu0 %v2119
    %v2121 = vpop.xlane.xlu0 %2120
    %v2122 = vrcp.pop %v2121
    %v2123 = vmul.f32 %v2118, %v2122
    %v2124 = vld [vmem:[#allocation7] sm:$0x3]
    %v2125 = vmul.f32 %v2123, %v2124
    %v2126 = vld [vmem:[#allocation11] sm:$0xff]
    %v2127 = vld [vmem:[#allocation11 + $0x8] sm:$0xff]
    %vm2128 = vcmask 64512
    %v2130 = vsel %vm2128, %v2125, 0
    %2132 = vmatprep.subr.mxu0 %v2127
    %2133 = vmatpush1.msra.mxu0 %v2126
    %2134 = vmatprep.subr.mxu0 0.0
    %2135 = vmatpush1.msra.mxu0 0.0
    %2136 = vmatprep.subr.mxu0 0.0
    %2137 = vmatpush1.msra.mxu0 0.0
    %2138 = vmatprep.subr.mxu0 0.0
    %2139 = vmatpush1.msra.mxu0 0.0
    %2140 = vmatprep.subr.mxu0 0.0
    %2141 = vmatpush1.msra.mxu0 0.0
    %2142 = vmatprep.subr.mxu0 0.0
    %2143 = vmatpush1.msra.mxu0 0.0
    %2144 = vmatprep.subr.mxu0 0.0
    %2145 = vmatpush1.msra.mxu0 0.0
    %2146 = vmatprep.subr.mxu0 0.0
    %2147 = vmatpush1.msra.mxu0 0.0
    %2148 = vmatprep.subr.mxu0 0.0
    %2149 = vmatpush1.msra.mxu0 0.0
    %2150 = vmatprep.subr.mxu0 0.0
    %2151 = vmatpush1.msra.mxu0 0.0
    %2152 = vmatprep.subr.mxu0 0.0
    %2153 = vmatpush1.msra.mxu0 0.0
    %2154 = vmatprep.subr.mxu0 0.0
    %2155 = vmatpush1.msra.mxu0 0.0
    %2156 = vmatprep.subr.mxu0 0.0
    %2157 = vmatpush1.msra.mxu0 0.0
    %2158 = vmatprep.subr.mxu0 0.0
    %2159 = vmatpush1.msra.mxu0 0.0
    %2160 = vmatprep.subr.mxu0 0.0
    %2161 = vmatpush1.msra.mxu0 0.0
    %2162 = vmatprep.subr.mxu0 0.0
    %2163 = vmatpush1.msra.mxu0 0.0
    %2164 = vmatprep.subr.mxu0 0.0
    %2165 = vmatpush1.msra.mxu0 0.0
    %2166 = vmatprep.subr.mxu0 0.0
    %2167 = vmatpush1.msra.mxu0 0.0
    %2168 = vmatprep.subr.mxu0 0.0
    %2169 = vmatpush1.msra.mxu0 0.0
    %2170 = vmatprep.subr.mxu0 0.0
    %2171 = vmatpush1.msra.mxu0 0.0
    %2172 = vmatprep.subr.mxu0 0.0
    %2173 = vmatpush1.msra.mxu0 0.0
    %2174 = vmatprep.subr.mxu0 0.0
    %2175 = vmatpush1.msra.mxu0 0.0
    %2176 = vmatprep.subr.mxu0 0.0
    %2177 = vmatpush1.msra.mxu0 0.0
    %2178 = vmatprep.subr.mxu0 0.0
    %2179 = vmatpush1.msra.mxu0 0.0
    %2180 = vmatprep.subr.mxu0 0.0
    %2181 = vmatpush1.msra.mxu0 0.0
    %2182 = vmatprep.subr.mxu0 0.0
    %2183 = vmatpush1.msra.mxu0 0.0
    %2184 = vmatprep.subr.mxu0 0.0
    %2185 = vmatpush1.msra.mxu0 0.0
    %2186 = vmatprep.subr.mxu0 0.0
    %2187 = vmatpush1.msra.mxu0 0.0
    %2188 = vmatprep.subr.mxu0 0.0
    %2189 = vmatpush1.msra.mxu0 0.0
    %2190 = vmatprep.subr.mxu0 0.0
    %2191 = vmatpush1.msra.mxu0 0.0
    %2192 = vmatprep.subr.mxu0 0.0
    %2193 = vmatpush1.msra.mxu0 0.0
    %2194 = vmatprep.subr.mxu0 0.0
    %2195 = vmatpush1.msra.mxu0 0.0
    %2196 = vmatprep.mubr.f32.mxu0 0.0
    %2197 = vmatmul.mubr.f32.gmra.mrb[0].mxu0 %v2130
    %v2198 = vpop.f32.mrb[0].mxu0
    %v2199 = vadd.f32 0.0, %v2198
    %v2200 = vpop.f32.mrb[0].mxu0
    %v2201 = vadd.f32 0.0, %v2200
    %2202 = vdwg.mxu0
    %v2205 = vcombine.low %v2199, %v2201
    %v2207 = vunpack.c.l.s4 1983009808
    %v2208 = vunpack.c.0.s8 %v2207
    %v2209 = vlaneseq
    %v2210 = vshrl.u32 %v2209, 7
    %v2211 = vsub.s32 %v2208, %v2210
    %v2212 = vrot.slane %v2205, %v2211
    %v2214 = vmul.f32 %v104, %v2212
    %v2215 = vld [vmem:[%s7] sm:$0xff]
    %v2216 = vld [vmem:[%s7 + $0x8] sm:$0xff]
    %v2217 = vld [vmem:[%s7 + $0x10] sm:$0xff]
    %v2218 = vld [vmem:[%s7 + $0x18] sm:$0xff]
    %v2219 = vld [vmem:[%s7 + $0x20] sm:$0xff]
    %v2220 = vld [vmem:[%s7 + $0x28] sm:$0xff]
    %v2221 = vld [vmem:[%s7 + $0x30] sm:$0xff]
    %v2222 = vld [vmem:[%s7 + $0x38] sm:$0xff]
    %v2223 = vld [vmem:[%s7 + $0x40] sm:$0xff]
    %v2224 = vld [vmem:[%s7 + $0x48] sm:$0xff]
    %v2225 = vld [vmem:[%s7 + $0x50] sm:$0xff]
    %v2226 = vld [vmem:[%s7 + $0x58] sm:$0xff]
    %v2227 = vld [vmem:[%s7 + $0x60] sm:$0xff]
    %v2228 = vld [vmem:[%s7 + $0x68] sm:$0xff]
    %v2229 = vld [vmem:[%s7 + $0x70] sm:$0xff]
    %v2230 = vld [vmem:[%s7 + $0x78] sm:$0xff]
    %v2231 = vld [vmem:[%s7 + $0x80] sm:$0xff]
    %v2232 = vld [vmem:[%s7 + $0x88] sm:$0xff]
    %v2233 = vld [vmem:[%s7 + $0x90] sm:$0xff]
    %v2234 = vld [vmem:[%s7 + $0x98] sm:$0xff]
    %v2235 = vld [vmem:[%s7 + $0xa0] sm:$0xff]
    %v2236 = vld [vmem:[%s7 + $0xa8] sm:$0xff]
    %v2237 = vld [vmem:[%s7 + $0xb0] sm:$0xff]
    %v2238 = vld [vmem:[%s7 + $0xb8] sm:$0xff]
    %v2239 = vld [vmem:[%s7 + $0xc0] sm:$0xff]
    %v2240 = vld [vmem:[%s7 + $0xc8] sm:$0xff]
    %v2241 = vld [vmem:[%s7 + $0xd0] sm:$0xff]
    %v2242 = vld [vmem:[%s7 + $0xd8] sm:$0xff]
    %v2243 = vld [vmem:[%s7 + $0xe0] sm:$0xff]
    %v2244 = vld [vmem:[%s7 + $0xe8] sm:$0xff]
    %v2245 = vld [vmem:[%s7 + $0xf0] sm:$0xff]
    %v2246 = vld [vmem:[%s7 + $0xf8] sm:$0xff]
    %v2249 = vunpack.c.l.s4 1983009808
    %v2250 = vunpack.c.0.s8 %v2249
    %v2251 = vlaneseq
    %v2252 = vshrl.u32 %v2251, 7
    %v2253 = vsub.s32 %v2250, %v2252
    %v2254 = vrot.slane %v2214, %v2253
    %v2255 = vcombine.high %v2254, %v2254
    %2258 = vmatprep.subr.mxu0 0.0
    %2259 = vmatpush1.msra.mxu0 %v2215
    %2260 = vmatprep.subr.mxu0 0.0
    %2261 = vmatpush1.msra.mxu0 %v2216
    %2262 = vmatprep.subr.mxu0 0.0
    %2263 = vmatpush1.msra.mxu0 %v2217
    %2264 = vmatprep.subr.mxu0 0.0
    %2265 = vmatpush1.msra.mxu0 %v2218
    %2266 = vmatprep.subr.mxu0 0.0
    %2267 = vmatpush1.msra.mxu0 %v2219
    %2268 = vmatprep.subr.mxu0 0.0
    %2269 = vmatpush1.msra.mxu0 %v2220
    %2270 = vmatprep.subr.mxu0 0.0
    %2271 = vmatpush1.msra.mxu0 %v2221
    %2272 = vmatprep.subr.mxu0 0.0
    %2273 = vmatpush1.msra.mxu0 %v2222
    %2274 = vmatprep.subr.mxu0 0.0
    %2275 = vmatpush1.msra.mxu0 %v2223
    %2276 = vmatprep.subr.mxu0 0.0
    %2277 = vmatpush1.msra.mxu0 %v2224
    %2278 = vmatprep.subr.mxu0 0.0
    %2279 = vmatpush1.msra.mxu0 %v2225
    %2280 = vmatprep.subr.mxu0 0.0
    %2281 = vmatpush1.msra.mxu0 %v2226
    %2282 = vmatprep.subr.mxu0 0.0
    %2283 = vmatpush1.msra.mxu0 %v2227
    %2284 = vmatprep.subr.mxu0 0.0
    %2285 = vmatpush1.msra.mxu0 %v2228
    %2286 = vmatprep.subr.mxu0 0.0
    %2287 = vmatpush1.msra.mxu0 %v2229
    %2288 = vmatprep.subr.mxu0 0.0
    %2289 = vmatpush1.msra.mxu0 %v2230
    %2290 = vmatprep.subr.mxu0 0.0
    %2291 = vmatpush1.msra.mxu0 %v2231
    %2292 = vmatprep.subr.mxu0 0.0
    %2293 = vmatpush1.msra.mxu0 %v2232
    %2294 = vmatprep.subr.mxu0 0.0
    %2295 = vmatpush1.msra.mxu0 %v2233
    %2296 = vmatprep.subr.mxu0 0.0
    %2297 = vmatpush1.msra.mxu0 %v2234
    %2298 = vmatprep.subr.mxu0 0.0
    %2299 = vmatpush1.msra.mxu0 %v2235
    %2300 = vmatprep.subr.mxu0 0.0
    %2301 = vmatpush1.msra.mxu0 %v2236
    %2302 = vmatprep.subr.mxu0 0.0
    %2303 = vmatpush1.msra.mxu0 %v2237
    %2304 = vmatprep.subr.mxu0 0.0
    %2305 = vmatpush1.msra.mxu0 %v2238
    %2306 = vmatprep.subr.mxu0 0.0
    %2307 = vmatpush1.msra.mxu0 %v2239
    %2308 = vmatprep.subr.mxu0 0.0
    %2309 = vmatpush1.msra.mxu0 %v2240
    %2310 = vmatprep.subr.mxu0 0.0
    %2311 = vmatpush1.msra.mxu0 %v2241
    %2312 = vmatprep.subr.mxu0 0.0
    %2313 = vmatpush1.msra.mxu0 %v2242
    %2314 = vmatprep.subr.mxu0 0.0
    %2315 = vmatpush1.msra.mxu0 %v2243
    %2316 = vmatprep.subr.mxu0 0.0
    %2317 = vmatpush1.msra.mxu0 %v2244
    %2318 = vmatprep.subr.mxu0 0.0
    %2319 = vmatpush1.msra.mxu0 %v2245
    %2320 = vmatprep.subr.mxu0 0.0
    %2321 = vmatpush1.msra.mxu0 %v2246
    %2322 = vmatprep.mubr.f32.mxu0 %v2255
    %2323 = vmatmul.mubr.f32.gmra.mrb[0].mxu0 %v2254
    %v2324 = vpop.f32.mrb[0].mxu0
    %v2325 = vadd.f32 0.0, %v2324
    %v2326 = vpop.f32.mrb[0].mxu0
    %2327 = vdwg.mxu0
    %vm2328 = vcmask 254976
    %2329 = vst.msk [vmem:[#allocation13] sm:$0x3] %vm2328, %v2325
    // Predicated region
    $region58: #{tpu_custom_call.1} parent=1 // pred_check
      _
    $region59: #{tpu_custom_call.1} parent=1 // pred_check_branch
      %2331 = sbr.rel (0) target = $region61
    $region60: #{tpu_custom_call.1} parent=1 // pred_region
      %s2333 = ssub.s32 32, 32
      %2334 = vsyncadd [#allocation4], %s2333
      %s2336 = sshll.u32 [#allocation13], 4
      %s2337 = int_to_ptr.vmem [resolvable:$true] %s2336
      %2339 = dma.vmem_to_hbm [thread:$0]  %s2337, 32, %s8, [#allocation4]
    $region61: #{tpu_custom_call.1} parent=1 // pred_fallthru
      _
    // Predicated region
    $region62: #{tpu_custom_call.1} parent=1 // pred_check
      _
    $region63: #{tpu_custom_call.1} parent=1 // pred_check_branch
      %2341 = sbr.rel (0) target = $region65
    $region64: #{tpu_custom_call.1} parent=1 // pred_region
      %2342 = dma.done [#allocation4], 32
    $region65: #{tpu_custom_call.1} parent=1 // pred_fallthru
      _
    %2343 = vsyncpa [#allocation3], 1
    %2344 = vsyncpa [#allocation6], 1
    %2345 = vsyncpa [#allocation9], 1
    %2346 = vsyncpa [#allocation12], 1
    %2347 = vsyncpa [#allocation4], 1

</llo_original>
